<compile_context>
chip_gen: v6e
topology: v6e:2x2x1
jax: 0.10.0
libtpu: 0.0.40
codegen_flags: <defaults>
</compile_context>

<pallas_src>
import jax
import jax.numpy as jnp
from jax.experimental import pallas as pl
from jax.experimental.pallas import tpu as pltpu

B_PAD = 8          # batch rows padded to one sublane group
LANES = 128        # every activation / weight padded to 128 lanes


def _round_up(n, m):
    return (n + m - 1) // m * m


# ---------------------------------------------------------------------------
# Host-side parameter packing: one (R, 128) f32 buffer, 8-row-aligned chunks.
# ---------------------------------------------------------------------------
class _ParamPacker:
    def __init__(self):
        self._chunks = []
        self._off = {}
        self._rows = 0

    def add_matrix(self, name, mat, rows_pad):
        r, c = mat.shape
        assert rows_pad % 8 == 0 and rows_pad >= r and c <= LANES
        buf = jnp.zeros((rows_pad, LANES), jnp.float32).at[:r, :c].set(mat)
        self._off[name] = (self._rows, rows_pad)
        self._chunks.append(buf)
        self._rows += rows_pad

    def add_bias(self, name, vec):
        # Replicated across the 8 sublanes so the kernel adds it to an (8,128)
        # activation tile with no in-kernel broadcast.
        n = vec.shape[0]
        buf = jnp.zeros((B_PAD, LANES), jnp.float32).at[:, :n].set(
            jnp.broadcast_to(vec[None, :], (B_PAD, n)))
        self._off[name] = (self._rows, B_PAD)
        self._chunks.append(buf)
        self._rows += B_PAD

    def finish(self):
        return jnp.concatenate(self._chunks, axis=0), dict(self._off)


def init_params(key, input_size):
    """Deterministic parameters (shapes mirror Rnn.__init__), packed for the kernel."""
    pk = _ParamPacker()

    def unif(k, shape, bound):
        return jax.random.uniform(k, shape, minval=-bound, maxval=bound,
                                  dtype=jnp.float32)

    def add_recurrent(name, key, in_size, hidden, bidirectional, with_whh):
        bound = 1.0 / float(hidden) ** 0.5
        ndir = 2 if bidirectional else 1
        wihs, whhs, bs = [], [], []
        for _ in range(ndir):
            key, k1, k2, k3, k4 = jax.random.split(key, 5)
            wihs.append(unif(k1, (in_size, hidden), bound))       # W_ih^T
            whhs.append(unif(k2, (hidden, hidden), bound))        # W_hh^T
            bs.append(unif(k3, (hidden,), bound) + unif(k4, (hidden,), bound))
        wih = jnp.concatenate(wihs, axis=1)                        # (in, ndir*H)
        pk.add_matrix(name + "_wih", wih, max(LANES, _round_up(in_size, LANES)))
        if with_whh:
            hd = ndir * hidden
            whh = jnp.zeros((hd, hd), jnp.float32)
            for d in range(ndir):                                  # block-diagonal
                whh = whh.at[d * hidden:(d + 1) * hidden,
                             d * hidden:(d + 1) * hidden].set(whhs[d])
            pk.add_matrix(name + "_whh", whh, LANES)
        pk.add_bias(name + "_b", jnp.concatenate(bs))
        return key

    def add_head(name, key, in_features):
        key, k1, k2, k3, k4 = jax.random.split(key, 5)
        bnd1 = 1.0 / float(in_features) ** 0.5
        w1 = unif(k1, (in_features, 16), bnd1)
        b1 = unif(k2, (16,), bnd1)
        bnd2 = 1.0 / 16.0 ** 0.5
        w2 = unif(k3, (16, 1), bnd2)
        b2 = unif(k4, (1,), bnd2)
        # eval-mode BatchNorm1d(1) between Linear-1 and Sigmoid -> 1/sqrt(1+eps) fold.
        scale = 1.0 / (1.0 + 1e-5) ** 0.5
        pk.add_matrix(name + "_w1", w1 * scale, LANES)
        pk.add_bias(name + "_b1", b1 * scale)
        pk.add_matrix(name + "_w2", w2, LANES)
        pk.add_bias(name + "_b2", b2)
        return key

    # stage 1 (full recurrence over T steps)
    key = add_recurrent("rnn_l0", key, input_size, 64, True, True)
    key = add_recurrent("rnn_l1", key, 128, 64, True, True)
    key = add_recurrent("rnn1_l0", key, 128, 32, False, True)
    key = add_recurrent("rnn1_l1", key, 32, 32, False, True)
    # stages 2/3 (sequence length 1, h0=0 -> W_hh never used; not packed)
    key = add_recurrent("rnn2_l0", key, 64, 32, True, False)
    key = add_recurrent("rnn2_l1", key, 64, 32, True, False)
    key = add_recurrent("rnn3_l0", key, 64, 16, True, False)
    key = add_recurrent("rnn3_l1", key, 32, 16, True, False)
    key = add_recurrent("rnn4_l0", key, 256, 64, True, False)
    key = add_recurrent("rnn4_l1", key, 128, 64, True, False)
    key = add_recurrent("rnn5_l0", key, 128, 32, True, False)
    key = add_recurrent("rnn5_l1", key, 64, 32, True, False)
    key = add_head("out", key, 32)
    key = add_head("out1", key, 32)
    key = add_head("out2", key, 64)
    return pk.finish()


# ---------------------------------------------------------------------------
# Fused forward-pass kernel
# ---------------------------------------------------------------------------
def _make_kernel(off, T):
    def kernel(x_ref, p_ref, o_ref):
        def W(name):                                   # static, 8-aligned ref slice
            o, r = off[name]
            return p_ref[o:o + r, :]

        def recurrent_seq(x, name, half=None, last_only=False):
            """Elman RNN layer with ReLU over T steps, time-major (T*8, 128) input.

            half=None  -> unidirectional.
            half=H     -> fused bidirectional: lanes [0,H) forward, [H,128) backward.
            """
            assert not (last_only and half is not None)   # avoid h_n/bwd trap
            wih, whh, b = W(name + "_wih"), W(name + "_whh"), W(name + "_b")
            # Hoisted input projection: one MXU matmul for all steps & both dirs.
            xp = jnp.dot(x, wih, preferred_element_type=jnp.float32)
            mask = None
            if half is not None:
                mask = jax.lax.broadcasted_iota(jnp.int32, (B_PAD, LANES), 1) < half
            h = jnp.zeros((B_PAD, LANES), jnp.float32)
            steps = []
            for s in range(T):                            # T static & small
                if half is None:
                    pre = xp[s * B_PAD:(s + 1) * B_PAD, :]
                else:
                    tb = T - 1 - s
                    pre = jnp.where(mask,
                                    xp[s * B_PAD:(s + 1) * B_PAD, :],
                                    xp[tb * B_PAD:(tb + 1) * B_PAD, :])
                h = jnp.maximum(
                    pre + b + jnp.dot(h, whh, preferred_element_type=jnp.float32),
                    0.0)
                steps.append(h)
            if last_only:
                return h
            if half is None:
                return jnp.concatenate(steps, axis=0)
            # steps[s] = [fwd(t=s) | bwd(t=T-1-s)]; output row t = [fwd(t) | bwd(t)]
            rows = [jnp.where(mask, steps[t], steps[T - 1 - t]) for t in range(T)]
            return jnp.concatenate(rows, axis=0)

        def single_step(x, name):
            # seq-len-1 layer with h0 = 0: the W_hh term is exactly zero.
            return jnp.maximum(
                jnp.dot(x, W(name + "_wih"), preferred_element_type=jnp.float32)
                + W(name + "_b"), 0.0)

        def head(x, name):
            # Linear -> (eval BatchNorm1d(1) folded into w1/b1) -> Sigmoid -> Linear
            hh = (jnp.dot(x, W(name + "_w1"), preferred_element_type=jnp.float32)
                  + W(name + "_b1"))
            s = jax.nn.sigmoid(hh)                        # EUP slot
            return (jnp.dot(s, W(name + "_w2"), preferred_element_type=jnp.float32)
                    + W(name + "_b2"))

        # ---- stage 1: rnn (bidir, H=64, 2 layers) + rnn1 (uni, H=32, 2 layers) ----
        x = x_ref[...]                                    # (T*8, 128), time-major
        y = recurrent_seq(x, "rnn_l0", half=64)
        y = recurrent_seq(y, "rnn_l1", half=64)
        y = recurrent_seq(y, "rnn1_l0")
        a = recurrent_seq(y, "rnn1_l1", last_only=True)   # (8, 128), lanes 0:32 real
        x2 = head(a, "out")                               # scalar in lane 0

        # ---- stage 2: scalar -> width-64 length-1 sequence; rnn2 + rnn3 ----
        a = jnp.broadcast_to(x2[:, :1], (B_PAD, LANES))   # extra lanes killed by 0-pad rows
        a = single_step(a, "rnn2_l0")
        a = single_step(a, "rnn2_l1")
        a = single_step(a, "rnn3_l0")
        a = single_step(a, "rnn3_l1")
        x2 = head(a, "out1")

        # ---- stage 3: scalar -> width-256 length-1 sequence; rnn4 + rnn5 ----
        a = jnp.broadcast_to(x2[:, :1], (B_PAD, 256))
        a = single_step(a, "rnn4_l0")
        a = single_step(a, "rnn4_l1")
        a = single_step(a, "rnn5_l0")
        a = single_step(a, "rnn5_l1")
        o_ref[...] = head(a, "out2")                      # full lane-dense store

    return kernel


def make_forward(off):
    @jax.jit
    def forward(pbuf, x):
        """x: (B, T, INPUT_SIZE) batch-first, like the PyTorch module. Returns (B, 1)."""
        B, T, I = x.shape
        assert B <= B_PAD and I <= LANES
        xt = jnp.transpose(x, (1, 0, 2)).astype(jnp.float32)          # (T, B, I)
        xpad = jnp.zeros((T, B_PAD, LANES), jnp.float32).at[:, :B, :I].set(xt)
        x2d = xpad.reshape(T * B_PAD, LANES)                          # row = t*8 + b
        out = pl.pallas_call(
            _make_kernel(off, T),
            out_shape=jax.ShapeDtypeStruct((B_PAD, LANES), jnp.float32),
            in_specs=[pl.BlockSpec(memory_space=pltpu.MemorySpace.VMEM),
                      pl.BlockSpec(memory_space=pltpu.MemorySpace.VMEM)],
            out_specs=pl.BlockSpec(memory_space=pltpu.MemorySpace.VMEM),
        )(x2d, pbuf)
        return out[:B, :1]
    return forward


if __name__ == "__main__":
    B, T, INPUT_SIZE = 2, 8, 16
    key = jax.random.PRNGKey(0)
    pkey, xkey = jax.random.split(key)
    pbuf, off = init_params(pkey, INPUT_SIZE)
    fwd = make_forward(off)

    x = jax.random.normal(xkey, (B, T, INPUT_SIZE), dtype=jnp.float32)
    out = fwd(pbuf, x)
    out = jax.block_until_ready(out)
    assert out.shape == (B, 1), out.shape
    assert bool(jnp.all(jnp.isfinite(out)))
    print("KERNEL_OK")
</pallas_src>

<mosaic_0001>
module attributes {stable_mosaic.version = 11 : i64} {
  func.func @kernel(%arg0: memref<64x128xf32, #tpu.memory_space<vmem>>, %arg1: memref<3088x128xf32, #tpu.memory_space<vmem>>, %arg2: memref<8x128xf32, #tpu.memory_space<vmem>>) attributes {dimension_semantics = [], scalar_prefetch = 0 : i64, scratch_operands = 0 : i64, tpu.core_type = #tpu.core_type<tc>} {
    %c0 = arith.constant 0 : index
    %c0_0 = arith.constant 0 : index
    %0 = vector.load %arg0[%c0, %c0_0] : memref<64x128xf32, #tpu.memory_space<vmem>>, vector<64x128xf32>
    %c0_1 = arith.constant 0 : index
    %c0_2 = arith.constant 0 : index
    %1 = vector.load %arg1[%c0_1, %c0_2] : memref<3088x128xf32, #tpu.memory_space<vmem>>, vector<128x128xf32>
    %c128 = arith.constant 128 : index
    %c0_3 = arith.constant 0 : index
    %2 = vector.load %arg1[%c128, %c0_3] : memref<3088x128xf32, #tpu.memory_space<vmem>>, vector<128x128xf32>
    %c256 = arith.constant 256 : index
    %c0_4 = arith.constant 0 : index
    %3 = vector.load %arg1[%c256, %c0_4] : memref<3088x128xf32, #tpu.memory_space<vmem>>, vector<8x128xf32>
    %cst = arith.constant dense<0.000000e+00> : vector<64x128xf32>
    %4 = tpu.matmul %0, %1, %cst {dimension_numbers = #tpu.dot_dimension_numbers<[1], [0], [0], [1], [0, 0, 1, 1], [], []>} : vector<64x128xf32>, vector<128x128xf32>, vector<64x128xf32> -> vector<64x128xf32>
    %5 = tpu.iota {dimensions = array<i32: 1>} : vector<8x128xi32>
    %c64_i32 = arith.constant 64 : i32
    %6 = vector.broadcast %c64_i32 : i32 to vector<8x128xi32>
    %7 = arith.cmpi slt, %5, %6 : vector<8x128xi32>
    %cst_5 = arith.constant 0.000000e+00 : f32
    %8 = vector.broadcast %cst_5 : f32 to vector<8x128xf32>
    %9 = vector.extract_strided_slice %4 {offsets = [0, 0], sizes = [8, 128], strides = [1, 1]} : vector<64x128xf32> to vector<8x128xf32>
    %10 = vector.extract_strided_slice %4 {offsets = [56, 0], sizes = [8, 128], strides = [1, 1]} : vector<64x128xf32> to vector<8x128xf32>
    %11 = arith.select %7, %9, %10 : vector<8x128xi1>, vector<8x128xf32>
    %12 = arith.addf %11, %3 : vector<8x128xf32>
    %cst_6 = arith.constant dense<0.000000e+00> : vector<8x128xf32>
    %13 = tpu.matmul %8, %2, %cst_6 {dimension_numbers = #tpu.dot_dimension_numbers<[1], [0], [0], [1], [0, 0, 1, 1], [], []>} : vector<8x128xf32>, vector<128x128xf32>, vector<8x128xf32> -> vector<8x128xf32>
    %14 = arith.addf %12, %13 : vector<8x128xf32>
    %cst_7 = arith.constant 0.000000e+00 : f32
    %15 = vector.broadcast %cst_7 : f32 to vector<8x128xf32>
    %16 = arith.maximumf %14, %15 : vector<8x128xf32>
    %17 = vector.extract_strided_slice %4 {offsets = [8, 0], sizes = [8, 128], strides = [1, 1]} : vector<64x128xf32> to vector<8x128xf32>
    %18 = vector.extract_strided_slice %4 {offsets = [48, 0], sizes = [8, 128], strides = [1, 1]} : vector<64x128xf32> to vector<8x128xf32>
    %19 = arith.select %7, %17, %18 : vector<8x128xi1>, vector<8x128xf32>
    %20 = arith.addf %19, %3 : vector<8x128xf32>
    %cst_8 = arith.constant dense<0.000000e+00> : vector<8x128xf32>
    %21 = tpu.matmul %16, %2, %cst_8 {dimension_numbers = #tpu.dot_dimension_numbers<[1], [0], [0], [1], [0, 0, 1, 1], [], []>} : vector<8x128xf32>, vector<128x128xf32>, vector<8x128xf32> -> vector<8x128xf32>
    %22 = arith.addf %20, %21 : vector<8x128xf32>
    %cst_9 = arith.constant 0.000000e+00 : f32
    %23 = vector.broadcast %cst_9 : f32 to vector<8x128xf32>
    %24 = arith.maximumf %22, %23 : vector<8x128xf32>
    %25 = vector.extract_strided_slice %4 {offsets = [16, 0], sizes = [8, 128], strides = [1, 1]} : vector<64x128xf32> to vector<8x128xf32>
    %26 = vector.extract_strided_slice %4 {offsets = [40, 0], sizes = [8, 128], strides = [1, 1]} : vector<64x128xf32> to vector<8x128xf32>
    %27 = arith.select %7, %25, %26 : vector<8x128xi1>, vector<8x128xf32>
    %28 = arith.addf %27, %3 : vector<8x128xf32>
    %cst_10 = arith.constant dense<0.000000e+00> : vector<8x128xf32>
    %29 = tpu.matmul %24, %2, %cst_10 {dimension_numbers = #tpu.dot_dimension_numbers<[1], [0], [0], [1], [0, 0, 1, 1], [], []>} : vector<8x128xf32>, vector<128x128xf32>, vector<8x128xf32> -> vector<8x128xf32>
    %30 = arith.addf %28, %29 : vector<8x128xf32>
    %cst_11 = arith.constant 0.000000e+00 : f32
    %31 = vector.broadcast %cst_11 : f32 to vector<8x128xf32>
    %32 = arith.maximumf %30, %31 : vector<8x128xf32>
    %33 = vector.extract_strided_slice %4 {offsets = [24, 0], sizes = [8, 128], strides = [1, 1]} : vector<64x128xf32> to vector<8x128xf32>
    %34 = vector.extract_strided_slice %4 {offsets = [32, 0], sizes = [8, 128], strides = [1, 1]} : vector<64x128xf32> to vector<8x128xf32>
    %35 = arith.select %7, %33, %34 : vector<8x128xi1>, vector<8x128xf32>
    %36 = arith.addf %35, %3 : vector<8x128xf32>
    %cst_12 = arith.constant dense<0.000000e+00> : vector<8x128xf32>
    %37 = tpu.matmul %32, %2, %cst_12 {dimension_numbers = #tpu.dot_dimension_numbers<[1], [0], [0], [1], [0, 0, 1, 1], [], []>} : vector<8x128xf32>, vector<128x128xf32>, vector<8x128xf32> -> vector<8x128xf32>
    %38 = arith.addf %36, %37 : vector<8x128xf32>
    %cst_13 = arith.constant 0.000000e+00 : f32
    %39 = vector.broadcast %cst_13 : f32 to vector<8x128xf32>
    %40 = arith.maximumf %38, %39 : vector<8x128xf32>
    %41 = vector.extract_strided_slice %4 {offsets = [32, 0], sizes = [8, 128], strides = [1, 1]} : vector<64x128xf32> to vector<8x128xf32>
    %42 = vector.extract_strided_slice %4 {offsets = [24, 0], sizes = [8, 128], strides = [1, 1]} : vector<64x128xf32> to vector<8x128xf32>
    %43 = arith.select %7, %41, %42 : vector<8x128xi1>, vector<8x128xf32>
    %44 = arith.addf %43, %3 : vector<8x128xf32>
    %cst_14 = arith.constant dense<0.000000e+00> : vector<8x128xf32>
    %45 = tpu.matmul %40, %2, %cst_14 {dimension_numbers = #tpu.dot_dimension_numbers<[1], [0], [0], [1], [0, 0, 1, 1], [], []>} : vector<8x128xf32>, vector<128x128xf32>, vector<8x128xf32> -> vector<8x128xf32>
    %46 = arith.addf %44, %45 : vector<8x128xf32>
    %cst_15 = arith.constant 0.000000e+00 : f32
    %47 = vector.broadcast %cst_15 : f32 to vector<8x128xf32>
    %48 = arith.maximumf %46, %47 : vector<8x128xf32>
    %49 = vector.extract_strided_slice %4 {offsets = [40, 0], sizes = [8, 128], strides = [1, 1]} : vector<64x128xf32> to vector<8x128xf32>
    %50 = vector.extract_strided_slice %4 {offsets = [16, 0], sizes = [8, 128], strides = [1, 1]} : vector<64x128xf32> to vector<8x128xf32>
    %51 = arith.select %7, %49, %50 : vector<8x128xi1>, vector<8x128xf32>
    %52 = arith.addf %51, %3 : vector<8x128xf32>
    %cst_16 = arith.constant dense<0.000000e+00> : vector<8x128xf32>
    %53 = tpu.matmul %48, %2, %cst_16 {dimension_numbers = #tpu.dot_dimension_numbers<[1], [0], [0], [1], [0, 0, 1, 1], [], []>} : vector<8x128xf32>, vector<128x128xf32>, vector<8x128xf32> -> vector<8x128xf32>
    %54 = arith.addf %52, %53 : vector<8x128xf32>
    %cst_17 = arith.constant 0.000000e+00 : f32
    %55 = vector.broadcast %cst_17 : f32 to vector<8x128xf32>
    %56 = arith.maximumf %54, %55 : vector<8x128xf32>
    %57 = vector.extract_strided_slice %4 {offsets = [48, 0], sizes = [8, 128], strides = [1, 1]} : vector<64x128xf32> to vector<8x128xf32>
    %58 = vector.extract_strided_slice %4 {offsets = [8, 0], sizes = [8, 128], strides = [1, 1]} : vector<64x128xf32> to vector<8x128xf32>
    %59 = arith.select %7, %57, %58 : vector<8x128xi1>, vector<8x128xf32>
    %60 = arith.addf %59, %3 : vector<8x128xf32>
    %cst_18 = arith.constant dense<0.000000e+00> : vector<8x128xf32>
    %61 = tpu.matmul %56, %2, %cst_18 {dimension_numbers = #tpu.dot_dimension_numbers<[1], [0], [0], [1], [0, 0, 1, 1], [], []>} : vector<8x128xf32>, vector<128x128xf32>, vector<8x128xf32> -> vector<8x128xf32>
    %62 = arith.addf %60, %61 : vector<8x128xf32>
    %cst_19 = arith.constant 0.000000e+00 : f32
    %63 = vector.broadcast %cst_19 : f32 to vector<8x128xf32>
    %64 = arith.maximumf %62, %63 : vector<8x128xf32>
    %65 = vector.extract_strided_slice %4 {offsets = [56, 0], sizes = [8, 128], strides = [1, 1]} : vector<64x128xf32> to vector<8x128xf32>
    %66 = vector.extract_strided_slice %4 {offsets = [0, 0], sizes = [8, 128], strides = [1, 1]} : vector<64x128xf32> to vector<8x128xf32>
    %67 = arith.select %7, %65, %66 : vector<8x128xi1>, vector<8x128xf32>
    %68 = arith.addf %67, %3 : vector<8x128xf32>
    %cst_20 = arith.constant dense<0.000000e+00> : vector<8x128xf32>
    %69 = tpu.matmul %64, %2, %cst_20 {dimension_numbers = #tpu.dot_dimension_numbers<[1], [0], [0], [1], [0, 0, 1, 1], [], []>} : vector<8x128xf32>, vector<128x128xf32>, vector<8x128xf32> -> vector<8x128xf32>
    %70 = arith.addf %68, %69 : vector<8x128xf32>
    %cst_21 = arith.constant 0.000000e+00 : f32
    %71 = vector.broadcast %cst_21 : f32 to vector<8x128xf32>
    %72 = arith.maximumf %70, %71 : vector<8x128xf32>
    %73 = arith.select %7, %16, %72 : vector<8x128xi1>, vector<8x128xf32>
    %74 = arith.select %7, %24, %64 : vector<8x128xi1>, vector<8x128xf32>
    %75 = arith.select %7, %32, %56 : vector<8x128xi1>, vector<8x128xf32>
    %76 = arith.select %7, %40, %48 : vector<8x128xi1>, vector<8x128xf32>
    %77 = arith.select %7, %48, %40 : vector<8x128xi1>, vector<8x128xf32>
    %78 = arith.select %7, %56, %32 : vector<8x128xi1>, vector<8x128xf32>
    %79 = arith.select %7, %64, %24 : vector<8x128xi1>, vector<8x128xf32>
    %80 = arith.select %7, %72, %16 : vector<8x128xi1>, vector<8x128xf32>
    %81 = tpu.concatenate %73, %74, %75, %76, %77, %78, %79, %80 in 0 : vector<8x128xf32>, vector<8x128xf32>, vector<8x128xf32>, vector<8x128xf32>, vector<8x128xf32>, vector<8x128xf32>, vector<8x128xf32>, vector<8x128xf32> -> vector<64x128xf32>
    %c264 = arith.constant 264 : index
    %c0_22 = arith.constant 0 : index
    %82 = vector.load %arg1[%c264, %c0_22] : memref<3088x128xf32, #tpu.memory_space<vmem>>, vector<128x128xf32>
    %c392 = arith.constant 392 : index
    %c0_23 = arith.constant 0 : index
    %83 = vector.load %arg1[%c392, %c0_23] : memref<3088x128xf32, #tpu.memory_space<vmem>>, vector<128x128xf32>
    %c520 = arith.constant 520 : index
    %c0_24 = arith.constant 0 : index
    %84 = vector.load %arg1[%c520, %c0_24] : memref<3088x128xf32, #tpu.memory_space<vmem>>, vector<8x128xf32>
    %cst_25 = arith.constant dense<0.000000e+00> : vector<64x128xf32>
    %85 = tpu.matmul %81, %82, %cst_25 {dimension_numbers = #tpu.dot_dimension_numbers<[1], [0], [0], [1], [0, 0, 1, 1], [], []>} : vector<64x128xf32>, vector<128x128xf32>, vector<64x128xf32> -> vector<64x128xf32>
    %86 = tpu.iota {dimensions = array<i32: 1>} : vector<8x128xi32>
    %c64_i32_26 = arith.constant 64 : i32
    %87 = vector.broadcast %c64_i32_26 : i32 to vector<8x128xi32>
    %88 = arith.cmpi slt, %86, %87 : vector<8x128xi32>
    %cst_27 = arith.constant 0.000000e+00 : f32
    %89 = vector.broadcast %cst_27 : f32 to vector<8x128xf32>
    %90 = vector.extract_strided_slice %85 {offsets = [0, 0], sizes = [8, 128], strides = [1, 1]} : vector<64x128xf32> to vector<8x128xf32>
    %91 = vector.extract_strided_slice %85 {offsets = [56, 0], sizes = [8, 128], strides = [1, 1]} : vector<64x128xf32> to vector<8x128xf32>
    %92 = arith.select %88, %90, %91 : vector<8x128xi1>, vector<8x128xf32>
    %93 = arith.addf %92, %84 : vector<8x128xf32>
    %cst_28 = arith.constant dense<0.000000e+00> : vector<8x128xf32>
    %94 = tpu.matmul %89, %83, %cst_28 {dimension_numbers = #tpu.dot_dimension_numbers<[1], [0], [0], [1], [0, 0, 1, 1], [], []>} : vector<8x128xf32>, vector<128x128xf32>, vector<8x128xf32> -> vector<8x128xf32>
    %95 = arith.addf %93, %94 : vector<8x128xf32>
    %cst_29 = arith.constant 0.000000e+00 : f32
    %96 = vector.broadcast %cst_29 : f32 to vector<8x128xf32>
    %97 = arith.maximumf %95, %96 : vector<8x128xf32>
    %98 = vector.extract_strided_slice %85 {offsets = [8, 0], sizes = [8, 128], strides = [1, 1]} : vector<64x128xf32> to vector<8x128xf32>
    %99 = vector.extract_strided_slice %85 {offsets = [48, 0], sizes = [8, 128], strides = [1, 1]} : vector<64x128xf32> to vector<8x128xf32>
    %100 = arith.select %88, %98, %99 : vector<8x128xi1>, vector<8x128xf32>
    %101 = arith.addf %100, %84 : vector<8x128xf32>
    %cst_30 = arith.constant dense<0.000000e+00> : vector<8x128xf32>
    %102 = tpu.matmul %97, %83, %cst_30 {dimension_numbers = #tpu.dot_dimension_numbers<[1], [0], [0], [1], [0, 0, 1, 1], [], []>} : vector<8x128xf32>, vector<128x128xf32>, vector<8x128xf32> -> vector<8x128xf32>
    %103 = arith.addf %101, %102 : vector<8x128xf32>
    %cst_31 = arith.constant 0.000000e+00 : f32
    %104 = vector.broadcast %cst_31 : f32 to vector<8x128xf32>
    %105 = arith.maximumf %103, %104 : vector<8x128xf32>
    %106 = vector.extract_strided_slice %85 {offsets = [16, 0], sizes = [8, 128], strides = [1, 1]} : vector<64x128xf32> to vector<8x128xf32>
    %107 = vector.extract_strided_slice %85 {offsets = [40, 0], sizes = [8, 128], strides = [1, 1]} : vector<64x128xf32> to vector<8x128xf32>
    %108 = arith.select %88, %106, %107 : vector<8x128xi1>, vector<8x128xf32>
    %109 = arith.addf %108, %84 : vector<8x128xf32>
    %cst_32 = arith.constant dense<0.000000e+00> : vector<8x128xf32>
    %110 = tpu.matmul %105, %83, %cst_32 {dimension_numbers = #tpu.dot_dimension_numbers<[1], [0], [0], [1], [0, 0, 1, 1], [], []>} : vector<8x128xf32>, vector<128x128xf32>, vector<8x128xf32> -> vector<8x128xf32>
    %111 = arith.addf %109, %110 : vector<8x128xf32>
    %cst_33 = arith.constant 0.000000e+00 : f32
    %112 = vector.broadcast %cst_33 : f32 to vector<8x128xf32>
    %113 = arith.maximumf %111, %112 : vector<8x128xf32>
    %114 = vector.extract_strided_slice %85 {offsets = [24, 0], sizes = [8, 128], strides = [1, 1]} : vector<64x128xf32> to vector<8x128xf32>
    %115 = vector.extract_strided_slice %85 {offsets = [32, 0], sizes = [8, 128], strides = [1, 1]} : vector<64x128xf32> to vector<8x128xf32>
    %116 = arith.select %88, %114, %115 : vector<8x128xi1>, vector<8x128xf32>
    %117 = arith.addf %116, %84 : vector<8x128xf32>
    %cst_34 = arith.constant dense<0.000000e+00> : vector<8x128xf32>
    %118 = tpu.matmul %113, %83, %cst_34 {dimension_numbers = #tpu.dot_dimension_numbers<[1], [0], [0], [1], [0, 0, 1, 1], [], []>} : vector<8x128xf32>, vector<128x128xf32>, vector<8x128xf32> -> vector<8x128xf32>
    %119 = arith.addf %117, %118 : vector<8x128xf32>
    %cst_35 = arith.constant 0.000000e+00 : f32
    %120 = vector.broadcast %cst_35 : f32 to vector<8x128xf32>
    %121 = arith.maximumf %119, %120 : vector<8x128xf32>
    %122 = vector.extract_strided_slice %85 {offsets = [32, 0], sizes = [8, 128], strides = [1, 1]} : vector<64x128xf32> to vector<8x128xf32>
    %123 = vector.extract_strided_slice %85 {offsets = [24, 0], sizes = [8, 128], strides = [1, 1]} : vector<64x128xf32> to vector<8x128xf32>
    %124 = arith.select %88, %122, %123 : vector<8x128xi1>, vector<8x128xf32>
    %125 = arith.addf %124, %84 : vector<8x128xf32>
    %cst_36 = arith.constant dense<0.000000e+00> : vector<8x128xf32>
    %126 = tpu.matmul %121, %83, %cst_36 {dimension_numbers = #tpu.dot_dimension_numbers<[1], [0], [0], [1], [0, 0, 1, 1], [], []>} : vector<8x128xf32>, vector<128x128xf32>, vector<8x128xf32> -> vector<8x128xf32>
    %127 = arith.addf %125, %126 : vector<8x128xf32>
    %cst_37 = arith.constant 0.000000e+00 : f32
    %128 = vector.broadcast %cst_37 : f32 to vector<8x128xf32>
    %129 = arith.maximumf %127, %128 : vector<8x128xf32>
    %130 = vector.extract_strided_slice %85 {offsets = [40, 0], sizes = [8, 128], strides = [1, 1]} : vector<64x128xf32> to vector<8x128xf32>
    %131 = vector.extract_strided_slice %85 {offsets = [16, 0], sizes = [8, 128], strides = [1, 1]} : vector<64x128xf32> to vector<8x128xf32>
    %132 = arith.select %88, %130, %131 : vector<8x128xi1>, vector<8x128xf32>
    %133 = arith.addf %132, %84 : vector<8x128xf32>
    %cst_38 = arith.constant dense<0.000000e+00> : vector<8x128xf32>
    %134 = tpu.matmul %129, %83, %cst_38 {dimension_numbers = #tpu.dot_dimension_numbers<[1], [0], [0], [1], [0, 0, 1, 1], [], []>} : vector<8x128xf32>, vector<128x128xf32>, vector<8x128xf32> -> vector<8x128xf32>
    %135 = arith.addf %133, %134 : vector<8x128xf32>
    %cst_39 = arith.constant 0.000000e+00 : f32
    %136 = vector.broadcast %cst_39 : f32 to vector<8x128xf32>
    %137 = arith.maximumf %135, %136 : vector<8x128xf32>
    %138 = vector.extract_strided_slice %85 {offsets = [48, 0], sizes = [8, 128], strides = [1, 1]} : vector<64x128xf32> to vector<8x128xf32>
    %139 = vector.extract_strided_slice %85 {offsets = [8, 0], sizes = [8, 128], strides = [1, 1]} : vector<64x128xf32> to vector<8x128xf32>
    %140 = arith.select %88, %138, %139 : vector<8x128xi1>, vector<8x128xf32>
    %141 = arith.addf %140, %84 : vector<8x128xf32>
    %cst_40 = arith.constant dense<0.000000e+00> : vector<8x128xf32>
    %142 = tpu.matmul %137, %83, %cst_40 {dimension_numbers = #tpu.dot_dimension_numbers<[1], [0], [0], [1], [0, 0, 1, 1], [], []>} : vector<8x128xf32>, vector<128x128xf32>, vector<8x128xf32> -> vector<8x128xf32>
    %143 = arith.addf %141, %142 : vector<8x128xf32>
    %cst_41 = arith.constant 0.000000e+00 : f32
    %144 = vector.broadcast %cst_41 : f32 to vector<8x128xf32>
    %145 = arith.maximumf %143, %144 : vector<8x128xf32>
    %146 = vector.extract_strided_slice %85 {offsets = [56, 0], sizes = [8, 128], strides = [1, 1]} : vector<64x128xf32> to vector<8x128xf32>
    %147 = vector.extract_strided_slice %85 {offsets = [0, 0], sizes = [8, 128], strides = [1, 1]} : vector<64x128xf32> to vector<8x128xf32>
    %148 = arith.select %88, %146, %147 : vector<8x128xi1>, vector<8x128xf32>
    %149 = arith.addf %148, %84 : vector<8x128xf32>
    %cst_42 = arith.constant dense<0.000000e+00> : vector<8x128xf32>
    %150 = tpu.matmul %145, %83, %cst_42 {dimension_numbers = #tpu.dot_dimension_numbers<[1], [0], [0], [1], [0, 0, 1, 1], [], []>} : vector<8x128xf32>, vector<128x128xf32>, vector<8x128xf32> -> vector<8x128xf32>
    %151 = arith.addf %149, %150 : vector<8x128xf32>
    %cst_43 = arith.constant 0.000000e+00 : f32
    %152 = vector.broadcast %cst_43 : f32 to vector<8x128xf32>
    %153 = arith.maximumf %151, %152 : vector<8x128xf32>
    %154 = arith.select %88, %97, %153 : vector<8x128xi1>, vector<8x128xf32>
    %155 = arith.select %88, %105, %145 : vector<8x128xi1>, vector<8x128xf32>
    %156 = arith.select %88, %113, %137 : vector<8x128xi1>, vector<8x128xf32>
    %157 = arith.select %88, %121, %129 : vector<8x128xi1>, vector<8x128xf32>
    %158 = arith.select %88, %129, %121 : vector<8x128xi1>, vector<8x128xf32>
    %159 = arith.select %88, %137, %113 : vector<8x128xi1>, vector<8x128xf32>
    %160 = arith.select %88, %145, %105 : vector<8x128xi1>, vector<8x128xf32>
    %161 = arith.select %88, %153, %97 : vector<8x128xi1>, vector<8x128xf32>
    %162 = tpu.concatenate %154, %155, %156, %157, %158, %159, %160, %161 in 0 : vector<8x128xf32>, vector<8x128xf32>, vector<8x128xf32>, vector<8x128xf32>, vector<8x128xf32>, vector<8x128xf32>, vector<8x128xf32>, vector<8x128xf32> -> vector<64x128xf32>
    %c528 = arith.constant 528 : index
    %c0_44 = arith.constant 0 : index
    %163 = vector.load %arg1[%c528, %c0_44] : memref<3088x128xf32, #tpu.memory_space<vmem>>, vector<128x128xf32>
    %c656 = arith.constant 656 : index
    %c0_45 = arith.constant 0 : index
    %164 = vector.load %arg1[%c656, %c0_45] : memref<3088x128xf32, #tpu.memory_space<vmem>>, vector<128x128xf32>
    %c784 = arith.constant 784 : index
    %c0_46 = arith.constant 0 : index
    %165 = vector.load %arg1[%c784, %c0_46] : memref<3088x128xf32, #tpu.memory_space<vmem>>, vector<8x128xf32>
    %cst_47 = arith.constant dense<0.000000e+00> : vector<64x128xf32>
    %166 = tpu.matmul %162, %163, %cst_47 {dimension_numbers = #tpu.dot_dimension_numbers<[1], [0], [0], [1], [0, 0, 1, 1], [], []>} : vector<64x128xf32>, vector<128x128xf32>, vector<64x128xf32> -> vector<64x128xf32>
    %cst_48 = arith.constant 0.000000e+00 : f32
    %167 = vector.broadcast %cst_48 : f32 to vector<8x128xf32>
    %168 = vector.extract_strided_slice %166 {offsets = [0, 0], sizes = [8, 128], strides = [1, 1]} : vector<64x128xf32> to vector<8x128xf32>
    %169 = arith.addf %168, %165 : vector<8x128xf32>
    %cst_49 = arith.constant dense<0.000000e+00> : vector<8x128xf32>
    %170 = tpu.matmul %167, %164, %cst_49 {dimension_numbers = #tpu.dot_dimension_numbers<[1], [0], [0], [1], [0, 0, 1, 1], [], []>} : vector<8x128xf32>, vector<128x128xf32>, vector<8x128xf32> -> vector<8x128xf32>
    %171 = arith.addf %169, %170 : vector<8x128xf32>
    %cst_50 = arith.constant 0.000000e+00 : f32
    %172 = vector.broadcast %cst_50 : f32 to vector<8x128xf32>
    %173 = arith.maximumf %171, %172 : vector<8x128xf32>
    %174 = vector.extract_strided_slice %166 {offsets = [8, 0], sizes = [8, 128], strides = [1, 1]} : vector<64x128xf32> to vector<8x128xf32>
    %175 = arith.addf %174, %165 : vector<8x128xf32>
    %cst_51 = arith.constant dense<0.000000e+00> : vector<8x128xf32>
    %176 = tpu.matmul %173, %164, %cst_51 {dimension_numbers = #tpu.dot_dimension_numbers<[1], [0], [0], [1], [0, 0, 1, 1], [], []>} : vector<8x128xf32>, vector<128x128xf32>, vector<8x128xf32> -> vector<8x128xf32>
    %177 = arith.addf %175, %176 : vector<8x128xf32>
    %cst_52 = arith.constant 0.000000e+00 : f32
    %178 = vector.broadcast %cst_52 : f32 to vector<8x128xf32>
    %179 = arith.maximumf %177, %178 : vector<8x128xf32>
    %180 = vector.extract_strided_slice %166 {offsets = [16, 0], sizes = [8, 128], strides = [1, 1]} : vector<64x128xf32> to vector<8x128xf32>
    %181 = arith.addf %180, %165 : vector<8x128xf32>
    %cst_53 = arith.constant dense<0.000000e+00> : vector<8x128xf32>
    %182 = tpu.matmul %179, %164, %cst_53 {dimension_numbers = #tpu.dot_dimension_numbers<[1], [0], [0], [1], [0, 0, 1, 1], [], []>} : vector<8x128xf32>, vector<128x128xf32>, vector<8x128xf32> -> vector<8x128xf32>
    %183 = arith.addf %181, %182 : vector<8x128xf32>
    %cst_54 = arith.constant 0.000000e+00 : f32
    %184 = vector.broadcast %cst_54 : f32 to vector<8x128xf32>
    %185 = arith.maximumf %183, %184 : vector<8x128xf32>
    %186 = vector.extract_strided_slice %166 {offsets = [24, 0], sizes = [8, 128], strides = [1, 1]} : vector<64x128xf32> to vector<8x128xf32>
    %187 = arith.addf %186, %165 : vector<8x128xf32>
    %cst_55 = arith.constant dense<0.000000e+00> : vector<8x128xf32>
    %188 = tpu.matmul %185, %164, %cst_55 {dimension_numbers = #tpu.dot_dimension_numbers<[1], [0], [0], [1], [0, 0, 1, 1], [], []>} : vector<8x128xf32>, vector<128x128xf32>, vector<8x128xf32> -> vector<8x128xf32>
    %189 = arith.addf %187, %188 : vector<8x128xf32>
    %cst_56 = arith.constant 0.000000e+00 : f32
    %190 = vector.broadcast %cst_56 : f32 to vector<8x128xf32>
    %191 = arith.maximumf %189, %190 : vector<8x128xf32>
    %192 = vector.extract_strided_slice %166 {offsets = [32, 0], sizes = [8, 128], strides = [1, 1]} : vector<64x128xf32> to vector<8x128xf32>
    %193 = arith.addf %192, %165 : vector<8x128xf32>
    %cst_57 = arith.constant dense<0.000000e+00> : vector<8x128xf32>
    %194 = tpu.matmul %191, %164, %cst_57 {dimension_numbers = #tpu.dot_dimension_numbers<[1], [0], [0], [1], [0, 0, 1, 1], [], []>} : vector<8x128xf32>, vector<128x128xf32>, vector<8x128xf32> -> vector<8x128xf32>
    %195 = arith.addf %193, %194 : vector<8x128xf32>
    %cst_58 = arith.constant 0.000000e+00 : f32
    %196 = vector.broadcast %cst_58 : f32 to vector<8x128xf32>
    %197 = arith.maximumf %195, %196 : vector<8x128xf32>
    %198 = vector.extract_strided_slice %166 {offsets = [40, 0], sizes = [8, 128], strides = [1, 1]} : vector<64x128xf32> to vector<8x128xf32>
    %199 = arith.addf %198, %165 : vector<8x128xf32>
    %cst_59 = arith.constant dense<0.000000e+00> : vector<8x128xf32>
    %200 = tpu.matmul %197, %164, %cst_59 {dimension_numbers = #tpu.dot_dimension_numbers<[1], [0], [0], [1], [0, 0, 1, 1], [], []>} : vector<8x128xf32>, vector<128x128xf32>, vector<8x128xf32> -> vector<8x128xf32>
    %201 = arith.addf %199, %200 : vector<8x128xf32>
    %cst_60 = arith.constant 0.000000e+00 : f32
    %202 = vector.broadcast %cst_60 : f32 to vector<8x128xf32>
    %203 = arith.maximumf %201, %202 : vector<8x128xf32>
    %204 = vector.extract_strided_slice %166 {offsets = [48, 0], sizes = [8, 128], strides = [1, 1]} : vector<64x128xf32> to vector<8x128xf32>
    %205 = arith.addf %204, %165 : vector<8x128xf32>
    %cst_61 = arith.constant dense<0.000000e+00> : vector<8x128xf32>
    %206 = tpu.matmul %203, %164, %cst_61 {dimension_numbers = #tpu.dot_dimension_numbers<[1], [0], [0], [1], [0, 0, 1, 1], [], []>} : vector<8x128xf32>, vector<128x128xf32>, vector<8x128xf32> -> vector<8x128xf32>
    %207 = arith.addf %205, %206 : vector<8x128xf32>
    %cst_62 = arith.constant 0.000000e+00 : f32
    %208 = vector.broadcast %cst_62 : f32 to vector<8x128xf32>
    %209 = arith.maximumf %207, %208 : vector<8x128xf32>
    %210 = vector.extract_strided_slice %166 {offsets = [56, 0], sizes = [8, 128], strides = [1, 1]} : vector<64x128xf32> to vector<8x128xf32>
    %211 = arith.addf %210, %165 : vector<8x128xf32>
    %cst_63 = arith.constant dense<0.000000e+00> : vector<8x128xf32>
    %212 = tpu.matmul %209, %164, %cst_63 {dimension_numbers = #tpu.dot_dimension_numbers<[1], [0], [0], [1], [0, 0, 1, 1], [], []>} : vector<8x128xf32>, vector<128x128xf32>, vector<8x128xf32> -> vector<8x128xf32>
    %213 = arith.addf %211, %212 : vector<8x128xf32>
    %cst_64 = arith.constant 0.000000e+00 : f32
    %214 = vector.broadcast %cst_64 : f32 to vector<8x128xf32>
    %215 = arith.maximumf %213, %214 : vector<8x128xf32>
    %216 = tpu.concatenate %173, %179, %185, %191, %197, %203, %209, %215 in 0 : vector<8x128xf32>, vector<8x128xf32>, vector<8x128xf32>, vector<8x128xf32>, vector<8x128xf32>, vector<8x128xf32>, vector<8x128xf32>, vector<8x128xf32> -> vector<64x128xf32>
    %c792 = arith.constant 792 : index
    %c0_65 = arith.constant 0 : index
    %217 = vector.load %arg1[%c792, %c0_65] : memref<3088x128xf32, #tpu.memory_space<vmem>>, vector<128x128xf32>
    %c920 = arith.constant 920 : index
    %c0_66 = arith.constant 0 : index
    %218 = vector.load %arg1[%c920, %c0_66] : memref<3088x128xf32, #tpu.memory_space<vmem>>, vector<128x128xf32>
    %c1048 = arith.constant 1048 : index
    %c0_67 = arith.constant 0 : index
    %219 = vector.load %arg1[%c1048, %c0_67] : memref<3088x128xf32, #tpu.memory_space<vmem>>, vector<8x128xf32>
    %cst_68 = arith.constant dense<0.000000e+00> : vector<64x128xf32>
    %220 = tpu.matmul %216, %217, %cst_68 {dimension_numbers = #tpu.dot_dimension_numbers<[1], [0], [0], [1], [0, 0, 1, 1], [], []>} : vector<64x128xf32>, vector<128x128xf32>, vector<64x128xf32> -> vector<64x128xf32>
    %cst_69 = arith.constant 0.000000e+00 : f32
    %221 = vector.broadcast %cst_69 : f32 to vector<8x128xf32>
    %222 = vector.extract_strided_slice %220 {offsets = [0, 0], sizes = [8, 128], strides = [1, 1]} : vector<64x128xf32> to vector<8x128xf32>
    %223 = arith.addf %222, %219 : vector<8x128xf32>
    %cst_70 = arith.constant dense<0.000000e+00> : vector<8x128xf32>
    %224 = tpu.matmul %221, %218, %cst_70 {dimension_numbers = #tpu.dot_dimension_numbers<[1], [0], [0], [1], [0, 0, 1, 1], [], []>} : vector<8x128xf32>, vector<128x128xf32>, vector<8x128xf32> -> vector<8x128xf32>
    %225 = arith.addf %223, %224 : vector<8x128xf32>
    %cst_71 = arith.constant 0.000000e+00 : f32
    %226 = vector.broadcast %cst_71 : f32 to vector<8x128xf32>
    %227 = arith.maximumf %225, %226 : vector<8x128xf32>
    %228 = vector.extract_strided_slice %220 {offsets = [8, 0], sizes = [8, 128], strides = [1, 1]} : vector<64x128xf32> to vector<8x128xf32>
    %229 = arith.addf %228, %219 : vector<8x128xf32>
    %cst_72 = arith.constant dense<0.000000e+00> : vector<8x128xf32>
    %230 = tpu.matmul %227, %218, %cst_72 {dimension_numbers = #tpu.dot_dimension_numbers<[1], [0], [0], [1], [0, 0, 1, 1], [], []>} : vector<8x128xf32>, vector<128x128xf32>, vector<8x128xf32> -> vector<8x128xf32>
    %231 = arith.addf %229, %230 : vector<8x128xf32>
    %cst_73 = arith.constant 0.000000e+00 : f32
    %232 = vector.broadcast %cst_73 : f32 to vector<8x128xf32>
    %233 = arith.maximumf %231, %232 : vector<8x128xf32>
    %234 = vector.extract_strided_slice %220 {offsets = [16, 0], sizes = [8, 128], strides = [1, 1]} : vector<64x128xf32> to vector<8x128xf32>
    %235 = arith.addf %234, %219 : vector<8x128xf32>
    %cst_74 = arith.constant dense<0.000000e+00> : vector<8x128xf32>
    %236 = tpu.matmul %233, %218, %cst_74 {dimension_numbers = #tpu.dot_dimension_numbers<[1], [0], [0], [1], [0, 0, 1, 1], [], []>} : vector<8x128xf32>, vector<128x128xf32>, vector<8x128xf32> -> vector<8x128xf32>
    %237 = arith.addf %235, %236 : vector<8x128xf32>
    %cst_75 = arith.constant 0.000000e+00 : f32
    %238 = vector.broadcast %cst_75 : f32 to vector<8x128xf32>
    %239 = arith.maximumf %237, %238 : vector<8x128xf32>
    %240 = vector.extract_strided_slice %220 {offsets = [24, 0], sizes = [8, 128], strides = [1, 1]} : vector<64x128xf32> to vector<8x128xf32>
    %241 = arith.addf %240, %219 : vector<8x128xf32>
    %cst_76 = arith.constant dense<0.000000e+00> : vector<8x128xf32>
    %242 = tpu.matmul %239, %218, %cst_76 {dimension_numbers = #tpu.dot_dimension_numbers<[1], [0], [0], [1], [0, 0, 1, 1], [], []>} : vector<8x128xf32>, vector<128x128xf32>, vector<8x128xf32> -> vector<8x128xf32>
    %243 = arith.addf %241, %242 : vector<8x128xf32>
    %cst_77 = arith.constant 0.000000e+00 : f32
    %244 = vector.broadcast %cst_77 : f32 to vector<8x128xf32>
    %245 = arith.maximumf %243, %244 : vector<8x128xf32>
    %246 = vector.extract_strided_slice %220 {offsets = [32, 0], sizes = [8, 128], strides = [1, 1]} : vector<64x128xf32> to vector<8x128xf32>
    %247 = arith.addf %246, %219 : vector<8x128xf32>
    %cst_78 = arith.constant dense<0.000000e+00> : vector<8x128xf32>
    %248 = tpu.matmul %245, %218, %cst_78 {dimension_numbers = #tpu.dot_dimension_numbers<[1], [0], [0], [1], [0, 0, 1, 1], [], []>} : vector<8x128xf32>, vector<128x128xf32>, vector<8x128xf32> -> vector<8x128xf32>
    %249 = arith.addf %247, %248 : vector<8x128xf32>
    %cst_79 = arith.constant 0.000000e+00 : f32
    %250 = vector.broadcast %cst_79 : f32 to vector<8x128xf32>
    %251 = arith.maximumf %249, %250 : vector<8x128xf32>
    %252 = vector.extract_strided_slice %220 {offsets = [40, 0], sizes = [8, 128], strides = [1, 1]} : vector<64x128xf32> to vector<8x128xf32>
    %253 = arith.addf %252, %219 : vector<8x128xf32>
    %cst_80 = arith.constant dense<0.000000e+00> : vector<8x128xf32>
    %254 = tpu.matmul %251, %218, %cst_80 {dimension_numbers = #tpu.dot_dimension_numbers<[1], [0], [0], [1], [0, 0, 1, 1], [], []>} : vector<8x128xf32>, vector<128x128xf32>, vector<8x128xf32> -> vector<8x128xf32>
    %255 = arith.addf %253, %254 : vector<8x128xf32>
    %cst_81 = arith.constant 0.000000e+00 : f32
    %256 = vector.broadcast %cst_81 : f32 to vector<8x128xf32>
    %257 = arith.maximumf %255, %256 : vector<8x128xf32>
    %258 = vector.extract_strided_slice %220 {offsets = [48, 0], sizes = [8, 128], strides = [1, 1]} : vector<64x128xf32> to vector<8x128xf32>
    %259 = arith.addf %258, %219 : vector<8x128xf32>
    %cst_82 = arith.constant dense<0.000000e+00> : vector<8x128xf32>
    %260 = tpu.matmul %257, %218, %cst_82 {dimension_numbers = #tpu.dot_dimension_numbers<[1], [0], [0], [1], [0, 0, 1, 1], [], []>} : vector<8x128xf32>, vector<128x128xf32>, vector<8x128xf32> -> vector<8x128xf32>
    %261 = arith.addf %259, %260 : vector<8x128xf32>
    %cst_83 = arith.constant 0.000000e+00 : f32
    %262 = vector.broadcast %cst_83 : f32 to vector<8x128xf32>
    %263 = arith.maximumf %261, %262 : vector<8x128xf32>
    %264 = vector.extract_strided_slice %220 {offsets = [56, 0], sizes = [8, 128], strides = [1, 1]} : vector<64x128xf32> to vector<8x128xf32>
    %265 = arith.addf %264, %219 : vector<8x128xf32>
    %cst_84 = arith.constant dense<0.000000e+00> : vector<8x128xf32>
    %266 = tpu.matmul %263, %218, %cst_84 {dimension_numbers = #tpu.dot_dimension_numbers<[1], [0], [0], [1], [0, 0, 1, 1], [], []>} : vector<8x128xf32>, vector<128x128xf32>, vector<8x128xf32> -> vector<8x128xf32>
    %267 = arith.addf %265, %266 : vector<8x128xf32>
    %cst_85 = arith.constant 0.000000e+00 : f32
    %268 = vector.broadcast %cst_85 : f32 to vector<8x128xf32>
    %269 = arith.maximumf %267, %268 : vector<8x128xf32>
    %c2272 = arith.constant 2272 : index
    %c0_86 = arith.constant 0 : index
    %270 = vector.load %arg1[%c2272, %c0_86] : memref<3088x128xf32, #tpu.memory_space<vmem>>, vector<128x128xf32>
    %cst_87 = arith.constant dense<0.000000e+00> : vector<8x128xf32>
    %271 = tpu.matmul %269, %270, %cst_87 {dimension_numbers = #tpu.dot_dimension_numbers<[1], [0], [0], [1], [0, 0, 1, 1], [], []>} : vector<8x128xf32>, vector<128x128xf32>, vector<8x128xf32> -> vector<8x128xf32>
    %c2400 = arith.constant 2400 : index
    %c0_88 = arith.constant 0 : index
    %272 = vector.load %arg1[%c2400, %c0_88] : memref<3088x128xf32, #tpu.memory_space<vmem>>, vector<8x128xf32>
    %273 = arith.addf %271, %272 : vector<8x128xf32>
    %274 = arith.negf %273 : vector<8x128xf32>
    %275 = math.exp %274 : vector<8x128xf32>
    %cst_89 = arith.constant 1.000000e+00 : f32
    %276 = vector.broadcast %cst_89 : f32 to vector<8x128xf32>
    %277 = arith.addf %276, %275 : vector<8x128xf32>
    %278 = arith.divf %276, %277 : vector<8x128xf32>
    %c2408 = arith.constant 2408 : index
    %c0_90 = arith.constant 0 : index
    %279 = vector.load %arg1[%c2408, %c0_90] : memref<3088x128xf32, #tpu.memory_space<vmem>>, vector<128x128xf32>
    %cst_91 = arith.constant dense<0.000000e+00> : vector<8x128xf32>
    %280 = tpu.matmul %278, %279, %cst_91 {dimension_numbers = #tpu.dot_dimension_numbers<[1], [0], [0], [1], [0, 0, 1, 1], [], []>} : vector<8x128xf32>, vector<128x128xf32>, vector<8x128xf32> -> vector<8x128xf32>
    %c2536 = arith.constant 2536 : index
    %c0_92 = arith.constant 0 : index
    %281 = vector.load %arg1[%c2536, %c0_92] : memref<3088x128xf32, #tpu.memory_space<vmem>>, vector<8x128xf32>
    %282 = arith.addf %280, %281 : vector<8x128xf32>
    %283 = vector.extract_strided_slice %282 {offsets = [0, 0], sizes = [8, 1], strides = [1, 1]} : vector<8x128xf32> to vector<8x1xf32>
    %284 = vector.shape_cast %283 : vector<8x1xf32> to vector<8x1xf32>
    %285 = vector.broadcast %284 : vector<8x1xf32> to vector<8x128xf32>
    %c1056 = arith.constant 1056 : index
    %c0_93 = arith.constant 0 : index
    %286 = vector.load %arg1[%c1056, %c0_93] : memref<3088x128xf32, #tpu.memory_space<vmem>>, vector<128x128xf32>
    %cst_94 = arith.constant dense<0.000000e+00> : vector<8x128xf32>
    %287 = tpu.matmul %285, %286, %cst_94 {dimension_numbers = #tpu.dot_dimension_numbers<[1], [0], [0], [1], [0, 0, 1, 1], [], []>} : vector<8x128xf32>, vector<128x128xf32>, vector<8x128xf32> -> vector<8x128xf32>
    %c1184 = arith.constant 1184 : index
    %c0_95 = arith.constant 0 : index
    %288 = vector.load %arg1[%c1184, %c0_95] : memref<3088x128xf32, #tpu.memory_space<vmem>>, vector<8x128xf32>
    %289 = arith.addf %287, %288 : vector<8x128xf32>
    %cst_96 = arith.constant 0.000000e+00 : f32
    %290 = vector.broadcast %cst_96 : f32 to vector<8x128xf32>
    %291 = arith.maximumf %289, %290 : vector<8x128xf32>
    %c1192 = arith.constant 1192 : index
    %c0_97 = arith.constant 0 : index
    %292 = vector.load %arg1[%c1192, %c0_97] : memref<3088x128xf32, #tpu.memory_space<vmem>>, vector<128x128xf32>
    %cst_98 = arith.constant dense<0.000000e+00> : vector<8x128xf32>
    %293 = tpu.matmul %291, %292, %cst_98 {dimension_numbers = #tpu.dot_dimension_numbers<[1], [0], [0], [1], [0, 0, 1, 1], [], []>} : vector<8x128xf32>, vector<128x128xf32>, vector<8x128xf32> -> vector<8x128xf32>
    %c1320 = arith.constant 1320 : index
    %c0_99 = arith.constant 0 : index
    %294 = vector.load %arg1[%c1320, %c0_99] : memref<3088x128xf32, #tpu.memory_space<vmem>>, vector<8x128xf32>
    %295 = arith.addf %293, %294 : vector<8x128xf32>
    %cst_100 = arith.constant 0.000000e+00 : f32
    %296 = vector.broadcast %cst_100 : f32 to vector<8x128xf32>
    %297 = arith.maximumf %295, %296 : vector<8x128xf32>
    %c1328 = arith.constant 1328 : index
    %c0_101 = arith.constant 0 : index
    %298 = vector.load %arg1[%c1328, %c0_101] : memref<3088x128xf32, #tpu.memory_space<vmem>>, vector<128x128xf32>
    %cst_102 = arith.constant dense<0.000000e+00> : vector<8x128xf32>
    %299 = tpu.matmul %297, %298, %cst_102 {dimension_numbers = #tpu.dot_dimension_numbers<[1], [0], [0], [1], [0, 0, 1, 1], [], []>} : vector<8x128xf32>, vector<128x128xf32>, vector<8x128xf32> -> vector<8x128xf32>
    %c1456 = arith.constant 1456 : index
    %c0_103 = arith.constant 0 : index
    %300 = vector.load %arg1[%c1456, %c0_103] : memref<3088x128xf32, #tpu.memory_space<vmem>>, vector<8x128xf32>
    %301 = arith.addf %299, %300 : vector<8x128xf32>
    %cst_104 = arith.constant 0.000000e+00 : f32
    %302 = vector.broadcast %cst_104 : f32 to vector<8x128xf32>
    %303 = arith.maximumf %301, %302 : vector<8x128xf32>
    %c1464 = arith.constant 1464 : index
    %c0_105 = arith.constant 0 : index
    %304 = vector.load %arg1[%c1464, %c0_105] : memref<3088x128xf32, #tpu.memory_space<vmem>>, vector<128x128xf32>
    %cst_106 = arith.constant dense<0.000000e+00> : vector<8x128xf32>
    %305 = tpu.matmul %303, %304, %cst_106 {dimension_numbers = #tpu.dot_dimension_numbers<[1], [0], [0], [1], [0, 0, 1, 1], [], []>} : vector<8x128xf32>, vector<128x128xf32>, vector<8x128xf32> -> vector<8x128xf32>
    %c1592 = arith.constant 1592 : index
    %c0_107 = arith.constant 0 : index
    %306 = vector.load %arg1[%c1592, %c0_107] : memref<3088x128xf32, #tpu.memory_space<vmem>>, vector<8x128xf32>
    %307 = arith.addf %305, %306 : vector<8x128xf32>
    %cst_108 = arith.constant 0.000000e+00 : f32
    %308 = vector.broadcast %cst_108 : f32 to vector<8x128xf32>
    %309 = arith.maximumf %307, %308 : vector<8x128xf32>
    %c2544 = arith.constant 2544 : index
    %c0_109 = arith.constant 0 : index
    %310 = vector.load %arg1[%c2544, %c0_109] : memref<3088x128xf32, #tpu.memory_space<vmem>>, vector<128x128xf32>
    %cst_110 = arith.constant dense<0.000000e+00> : vector<8x128xf32>
    %311 = tpu.matmul %309, %310, %cst_110 {dimension_numbers = #tpu.dot_dimension_numbers<[1], [0], [0], [1], [0, 0, 1, 1], [], []>} : vector<8x128xf32>, vector<128x128xf32>, vector<8x128xf32> -> vector<8x128xf32>
    %c2672 = arith.constant 2672 : index
    %c0_111 = arith.constant 0 : index
    %312 = vector.load %arg1[%c2672, %c0_111] : memref<3088x128xf32, #tpu.memory_space<vmem>>, vector<8x128xf32>
    %313 = arith.addf %311, %312 : vector<8x128xf32>
    %314 = arith.negf %313 : vector<8x128xf32>
    %315 = math.exp %314 : vector<8x128xf32>
    %cst_112 = arith.constant 1.000000e+00 : f32
    %316 = vector.broadcast %cst_112 : f32 to vector<8x128xf32>
    %317 = arith.addf %316, %315 : vector<8x128xf32>
    %318 = arith.divf %316, %317 : vector<8x128xf32>
    %c2680 = arith.constant 2680 : index
    %c0_113 = arith.constant 0 : index
    %319 = vector.load %arg1[%c2680, %c0_113] : memref<3088x128xf32, #tpu.memory_space<vmem>>, vector<128x128xf32>
    %cst_114 = arith.constant dense<0.000000e+00> : vector<8x128xf32>
    %320 = tpu.matmul %318, %319, %cst_114 {dimension_numbers = #tpu.dot_dimension_numbers<[1], [0], [0], [1], [0, 0, 1, 1], [], []>} : vector<8x128xf32>, vector<128x128xf32>, vector<8x128xf32> -> vector<8x128xf32>
    %c2808 = arith.constant 2808 : index
    %c0_115 = arith.constant 0 : index
    %321 = vector.load %arg1[%c2808, %c0_115] : memref<3088x128xf32, #tpu.memory_space<vmem>>, vector<8x128xf32>
    %322 = arith.addf %320, %321 : vector<8x128xf32>
    %323 = vector.extract_strided_slice %322 {offsets = [0, 0], sizes = [8, 1], strides = [1, 1]} : vector<8x128xf32> to vector<8x1xf32>
    %324 = vector.shape_cast %323 : vector<8x1xf32> to vector<8x1xf32>
    %325 = vector.broadcast %324 : vector<8x1xf32> to vector<8x256xf32>
    %c1600 = arith.constant 1600 : index
    %c0_116 = arith.constant 0 : index
    %326 = vector.load %arg1[%c1600, %c0_116] : memref<3088x128xf32, #tpu.memory_space<vmem>>, vector<256x128xf32>
    %cst_117 = arith.constant dense<0.000000e+00> : vector<8x128xf32>
    %327 = tpu.matmul %325, %326, %cst_117 {dimension_numbers = #tpu.dot_dimension_numbers<[1], [0], [0], [1], [0, 0, 1, 1], [], []>} : vector<8x256xf32>, vector<256x128xf32>, vector<8x128xf32> -> vector<8x128xf32>
    %c1856 = arith.constant 1856 : index
    %c0_118 = arith.constant 0 : index
    %328 = vector.load %arg1[%c1856, %c0_118] : memref<3088x128xf32, #tpu.memory_space<vmem>>, vector<8x128xf32>
    %329 = arith.addf %327, %328 : vector<8x128xf32>
    %cst_119 = arith.constant 0.000000e+00 : f32
    %330 = vector.broadcast %cst_119 : f32 to vector<8x128xf32>
    %331 = arith.maximumf %329, %330 : vector<8x128xf32>
    %c1864 = arith.constant 1864 : index
    %c0_120 = arith.constant 0 : index
    %332 = vector.load %arg1[%c1864, %c0_120] : memref<3088x128xf32, #tpu.memory_space<vmem>>, vector<128x128xf32>
    %cst_121 = arith.constant dense<0.000000e+00> : vector<8x128xf32>
    %333 = tpu.matmul %331, %332, %cst_121 {dimension_numbers = #tpu.dot_dimension_numbers<[1], [0], [0], [1], [0, 0, 1, 1], [], []>} : vector<8x128xf32>, vector<128x128xf32>, vector<8x128xf32> -> vector<8x128xf32>
    %c1992 = arith.constant 1992 : index
    %c0_122 = arith.constant 0 : index
    %334 = vector.load %arg1[%c1992, %c0_122] : memref<3088x128xf32, #tpu.memory_space<vmem>>, vector<8x128xf32>
    %335 = arith.addf %333, %334 : vector<8x128xf32>
    %cst_123 = arith.constant 0.000000e+00 : f32
    %336 = vector.broadcast %cst_123 : f32 to vector<8x128xf32>
    %337 = arith.maximumf %335, %336 : vector<8x128xf32>
    %c2000 = arith.constant 2000 : index
    %c0_124 = arith.constant 0 : index
    %338 = vector.load %arg1[%c2000, %c0_124] : memref<3088x128xf32, #tpu.memory_space<vmem>>, vector<128x128xf32>
    %cst_125 = arith.constant dense<0.000000e+00> : vector<8x128xf32>
    %339 = tpu.matmul %337, %338, %cst_125 {dimension_numbers = #tpu.dot_dimension_numbers<[1], [0], [0], [1], [0, 0, 1, 1], [], []>} : vector<8x128xf32>, vector<128x128xf32>, vector<8x128xf32> -> vector<8x128xf32>
    %c2128 = arith.constant 2128 : index
    %c0_126 = arith.constant 0 : index
    %340 = vector.load %arg1[%c2128, %c0_126] : memref<3088x128xf32, #tpu.memory_space<vmem>>, vector<8x128xf32>
    %341 = arith.addf %339, %340 : vector<8x128xf32>
    %cst_127 = arith.constant 0.000000e+00 : f32
    %342 = vector.broadcast %cst_127 : f32 to vector<8x128xf32>
    %343 = arith.maximumf %341, %342 : vector<8x128xf32>
    %c2136 = arith.constant 2136 : index
    %c0_128 = arith.constant 0 : index
    %344 = vector.load %arg1[%c2136, %c0_128] : memref<3088x128xf32, #tpu.memory_space<vmem>>, vector<128x128xf32>
    %cst_129 = arith.constant dense<0.000000e+00> : vector<8x128xf32>
    %345 = tpu.matmul %343, %344, %cst_129 {dimension_numbers = #tpu.dot_dimension_numbers<[1], [0], [0], [1], [0, 0, 1, 1], [], []>} : vector<8x128xf32>, vector<128x128xf32>, vector<8x128xf32> -> vector<8x128xf32>
    %c2264 = arith.constant 2264 : index
    %c0_130 = arith.constant 0 : index
    %346 = vector.load %arg1[%c2264, %c0_130] : memref<3088x128xf32, #tpu.memory_space<vmem>>, vector<8x128xf32>
    %347 = arith.addf %345, %346 : vector<8x128xf32>
    %cst_131 = arith.constant 0.000000e+00 : f32
    %348 = vector.broadcast %cst_131 : f32 to vector<8x128xf32>
    %349 = arith.maximumf %347, %348 : vector<8x128xf32>
    %c2816 = arith.constant 2816 : index
    %c0_132 = arith.constant 0 : index
    %350 = vector.load %arg1[%c2816, %c0_132] : memref<3088x128xf32, #tpu.memory_space<vmem>>, vector<128x128xf32>
    %cst_133 = arith.constant dense<0.000000e+00> : vector<8x128xf32>
    %351 = tpu.matmul %349, %350, %cst_133 {dimension_numbers = #tpu.dot_dimension_numbers<[1], [0], [0], [1], [0, 0, 1, 1], [], []>} : vector<8x128xf32>, vector<128x128xf32>, vector<8x128xf32> -> vector<8x128xf32>
    %c2944 = arith.constant 2944 : index
    %c0_134 = arith.constant 0 : index
    %352 = vector.load %arg1[%c2944, %c0_134] : memref<3088x128xf32, #tpu.memory_space<vmem>>, vector<8x128xf32>
    %353 = arith.addf %351, %352 : vector<8x128xf32>
    %354 = arith.negf %353 : vector<8x128xf32>
    %355 = math.exp %354 : vector<8x128xf32>
    %cst_135 = arith.constant 1.000000e+00 : f32
    %356 = vector.broadcast %cst_135 : f32 to vector<8x128xf32>
    %357 = arith.addf %356, %355 : vector<8x128xf32>
    %358 = arith.divf %356, %357 : vector<8x128xf32>
    %c2952 = arith.constant 2952 : index
    %c0_136 = arith.constant 0 : index
    %359 = vector.load %arg1[%c2952, %c0_136] : memref<3088x128xf32, #tpu.memory_space<vmem>>, vector<128x128xf32>
    %cst_137 = arith.constant dense<0.000000e+00> : vector<8x128xf32>
    %360 = tpu.matmul %358, %359, %cst_137 {dimension_numbers = #tpu.dot_dimension_numbers<[1], [0], [0], [1], [0, 0, 1, 1], [], []>} : vector<8x128xf32>, vector<128x128xf32>, vector<8x128xf32> -> vector<8x128xf32>
    %c3080 = arith.constant 3080 : index
    %c0_138 = arith.constant 0 : index
    %361 = vector.load %arg1[%c3080, %c0_138] : memref<3088x128xf32, #tpu.memory_space<vmem>>, vector<8x128xf32>
    %362 = arith.addf %360, %361 : vector<8x128xf32>
    %c0_139 = arith.constant 0 : index
    %c0_140 = arith.constant 0 : index
    %363 = vector.load %arg2[%c0_139, %c0_140] : memref<8x128xf32, #tpu.memory_space<vmem>>, vector<8x128xf32>
    tpu.vector_store %arg2[%c0_139, %c0_140], %362 {strides = array<i32>} : memref<8x128xf32, #tpu.memory_space<vmem>>, vector<8x128xf32>,
    return
  }
}

</mosaic_0001>

<llo_original>
// kernel: forward.1
$region0: #{forward.1}
  #allocation0 [shape = 'u32[]', space=smem, size = 0x4, offset = 0x4, fixed_abs, tag = 'smem constant byte address 0x4 - core index']
  #allocation1 [shape = 'u32[144,128]{1,0:T(1,128)}', space=vmem, size = 0x12000, scoped, tag = 'internal scratch']
  %s0 = inlined_call_operand.vmem [shape: f32[64,128], index: 0, kind: input, shape index: {}]
  %s1 = inlined_call_operand.hbm [shape: f32[3088,128], index: 1, kind: input, shape index: {}]
  %s2 = inlined_call_operand.vmem [shape: f32[8,128], index: 2, kind: output, shape index: {}]
  %s3 = sld [smem:[#allocation0]]
  $region22: #{forward.1} parent=0
    _
  %s5 = ssub.s32 1, %s3
  %s6 = scalar_select 0, %s5, %s3
  $region1: #{forward.1} parent=0
    #allocation2 [shape = 'u8[1581056]{0}', space=vmem, size = 0x182000, scoped, tag = 'input window, operand 1, single buffered']
    #allocation3 [shape = 's32[1]{0}', space=sflag, size = 0x4, scoped, tag = 'scoped memory for forward.1']
    %7 = vsyncpa [#allocation3], 0
    // Predicated region
    $region2: #{forward.1} parent=1 // pred_check
      _
    $region3: #{forward.1} parent=1 // pred_check_branch
      %9 = sbr.rel (0) target = $region5
    $region4: #{forward.1} parent=1 // pred_region
      _
    $region5: #{forward.1} parent=1 // pred_fallthru
      _
    // Predicated region
    $region6: #{forward.1} parent=1 // pred_check
      _
    $region7: #{forward.1} parent=1 // pred_check_branch
      %11 = sbr.rel (0) target = $region9
    $region8: #{forward.1} parent=1 // pred_region
      %s13 = ssub.s32 49408, 49408
      %14 = vsyncadd [#allocation3], %s13
      %s15 = sshll.u32 [#allocation2], 4
      %s16 = int_to_ptr.vmem [resolvable:$true] %s15
      %21 = dma.hbm_to_vmem [thread:$0]  %s1, 49408, %s16, [#allocation3], 128, 128, 8
    $region9: #{forward.1} parent=1 // pred_fallthru
      _
    // Predicated region
    $region10: #{forward.1} parent=1 // pred_check
      _
    $region11: #{forward.1} parent=1 // pred_check_branch
      %23 = sbr.rel (0) target = $region13
    $region12: #{forward.1} parent=1 // pred_region
      %24 = dma.done [#allocation3], 49408
    $region13: #{forward.1} parent=1 // pred_fallthru
      _
    %v25 = vld [vmem:[%s0] sm:$0xff]
    %v26 = vld [vmem:[%s0 + $0x8] sm:$0xff]
    %v27 = vld [vmem:[%s0 + $0x10] sm:$0xff]
    %v28 = vld [vmem:[%s0 + $0x18] sm:$0xff]
    %v29 = vld [vmem:[%s0 + $0x20] sm:$0xff]
    %v30 = vld [vmem:[%s0 + $0x28] sm:$0xff]
    %v31 = vld [vmem:[%s0 + $0x30] sm:$0xff]
    %v32 = vld [vmem:[%s0 + $0x38] sm:$0xff]
    %v33 = vld [vmem:[#allocation2] sm:$0xff]
    %v34 = vld [vmem:[#allocation2 + $0x8] sm:$0xff]
    %v35 = vld [vmem:[#allocation2 + $0x10] sm:$0xff]
    %v36 = vld [vmem:[#allocation2 + $0x18] sm:$0xff]
    %v37 = vld [vmem:[#allocation2 + $0x20] sm:$0xff]
    %v38 = vld [vmem:[#allocation2 + $0x28] sm:$0xff]
    %v39 = vld [vmem:[#allocation2 + $0x30] sm:$0xff]
    %v40 = vld [vmem:[#allocation2 + $0x38] sm:$0xff]
    %v41 = vld [vmem:[#allocation2 + $0x40] sm:$0xff]
    %v42 = vld [vmem:[#allocation2 + $0x48] sm:$0xff]
    %v43 = vld [vmem:[#allocation2 + $0x50] sm:$0xff]
    %v44 = vld [vmem:[#allocation2 + $0x58] sm:$0xff]
    %v45 = vld [vmem:[#allocation2 + $0x60] sm:$0xff]
    %v46 = vld [vmem:[#allocation2 + $0x68] sm:$0xff]
    %v47 = vld [vmem:[#allocation2 + $0x70] sm:$0xff]
    %v48 = vld [vmem:[#allocation2 + $0x78] sm:$0xff]
    %v49 = vld [vmem:[#allocation2 + $0x80] sm:$0xff]
    %v50 = vld [vmem:[#allocation2 + $0x88] sm:$0xff]
    %v51 = vld [vmem:[#allocation2 + $0x90] sm:$0xff]
    %v52 = vld [vmem:[#allocation2 + $0x98] sm:$0xff]
    %v53 = vld [vmem:[#allocation2 + $0xa0] sm:$0xff]
    %v54 = vld [vmem:[#allocation2 + $0xa8] sm:$0xff]
    %v55 = vld [vmem:[#allocation2 + $0xb0] sm:$0xff]
    %v56 = vld [vmem:[#allocation2 + $0xb8] sm:$0xff]
    %v57 = vld [vmem:[#allocation2 + $0xc0] sm:$0xff]
    %v58 = vld [vmem:[#allocation2 + $0xc8] sm:$0xff]
    %v59 = vld [vmem:[#allocation2 + $0xd0] sm:$0xff]
    %v60 = vld [vmem:[#allocation2 + $0xd8] sm:$0xff]
    %v61 = vld [vmem:[#allocation2 + $0xe0] sm:$0xff]
    %v62 = vld [vmem:[#allocation2 + $0xe8] sm:$0xff]
    %v63 = vld [vmem:[#allocation2 + $0xf0] sm:$0xff]
    %v64 = vld [vmem:[#allocation2 + $0xf8] sm:$0xff]
    %v65 = vld [vmem:[#allocation2 + $0x100] sm:$0xff]
    %66 = vmatprep.subr.mxu0 0.0
    %67 = vmatpush1.msra.mxu0 %v48
    %68 = vmatprep.subr.mxu0 0.0
    %69 = vmatpush1.msra.mxu0 %v47
    %70 = vmatprep.subr.mxu0 0.0
    %71 = vmatpush1.msra.mxu0 %v46
    %72 = vmatprep.subr.mxu0 0.0
    %73 = vmatpush1.msra.mxu0 %v45
    %74 = vmatprep.subr.mxu0 0.0
    %75 = vmatpush1.msra.mxu0 %v44
    %76 = vmatprep.subr.mxu0 0.0
    %77 = vmatpush1.msra.mxu0 %v43
    %78 = vmatprep.subr.mxu0 0.0
    %79 = vmatpush1.msra.mxu0 %v42
    %80 = vmatprep.subr.mxu0 0.0
    %81 = vmatpush1.msra.mxu0 %v41
    %82 = vmatprep.subr.mxu0 0.0
    %83 = vmatpush1.msra.mxu0 %v40
    %84 = vmatprep.subr.mxu0 0.0
    %85 = vmatpush1.msra.mxu0 %v39
    %86 = vmatprep.subr.mxu0 0.0
    %87 = vmatpush1.msra.mxu0 %v38
    %88 = vmatprep.subr.mxu0 0.0
    %89 = vmatpush1.msra.mxu0 %v37
    %90 = vmatprep.subr.mxu0 0.0
    %91 = vmatpush1.msra.mxu0 %v36
    %92 = vmatprep.subr.mxu0 0.0
    %93 = vmatpush1.msra.mxu0 %v35
    %94 = vmatprep.subr.mxu0 0.0
    %95 = vmatpush1.msra.mxu0 %v34
    %96 = vmatprep.subr.mxu0 0.0
    %97 = vmatpush1.msra.mxu0 %v33
    %98 = vmatprep.subr.mxu0 0.0
    %99 = vmatpush2.msra.mxu0 0.0
    %100 = vmatprep.subr.mxu0 0.0
    %101 = vmatpush2.msra.mxu0 0.0
    %102 = vmatprep.subr.mxu0 0.0
    %103 = vmatpush2.msra.mxu0 0.0
    %104 = vmatprep.subr.mxu0 0.0
    %105 = vmatpush2.msra.mxu0 0.0
    %106 = vmatprep.subr.mxu0 0.0
    %107 = vmatpush2.msra.mxu0 0.0
    %108 = vmatprep.subr.mxu0 0.0
    %109 = vmatpush2.msra.mxu0 0.0
    %110 = vmatprep.subr.mxu0 0.0
    %111 = vmatpush2.msra.mxu0 0.0
    %112 = vmatprep.subr.mxu0 0.0
    %113 = vmatpush2.msra.mxu0 0.0
    %114 = vmatprep.subr.mxu0 0.0
    %115 = vmatpush2.msra.mxu0 0.0
    %116 = vmatprep.subr.mxu0 0.0
    %117 = vmatpush2.msra.mxu0 0.0
    %118 = vmatprep.subr.mxu0 0.0
    %119 = vmatpush2.msra.mxu0 0.0
    %120 = vmatprep.subr.mxu0 0.0
    %121 = vmatpush2.msra.mxu0 0.0
    %122 = vmatprep.subr.mxu0 0.0
    %123 = vmatpush2.msra.mxu0 0.0
    %124 = vmatprep.subr.mxu0 0.0
    %125 = vmatpush2.msra.mxu0 0.0
    %126 = vmatprep.subr.mxu0 0.0
    %127 = vmatpush2.msra.mxu0 0.0
    %128 = vmatprep.subr.mxu0 0.0
    %129 = vmatpush2.msra.mxu0 0.0
    %130 = vmatprep.mubr.f32.mxu0 0.0
    %131 = vmatmul.mubr.f32.gmra.mxu0 %v25
    %v132 = vpop.f32.mrf.mxu0
    %v133 = vadd.f32 0.0, %v132
    %v134 = vpop.f32.mrf.mxu0
    %135 = vmatprep.mubr.f32.mxu0 0.0
    %136 = vmatmul.mubr.f32.gmra.mxu0 %v26
    %v137 = vpop.f32.mrf.mxu0
    %v138 = vadd.f32 0.0, %v137
    %v139 = vpop.f32.mrf.mxu0
    %140 = vmatprep.mubr.f32.mxu0 0.0
    %141 = vmatmul.mubr.f32.gmra.mxu0 %v27
    %v142 = vpop.f32.mrf.mxu0
    %v143 = vadd.f32 0.0, %v142
    %v144 = vpop.f32.mrf.mxu0
    %145 = vmatprep.mubr.f32.mxu0 0.0
    %146 = vmatmul.mubr.f32.gmra.mxu0 %v28
    %v147 = vpop.f32.mrf.mxu0
    %v148 = vadd.f32 0.0, %v147
    %v149 = vpop.f32.mrf.mxu0
    %150 = vmatprep.mubr.f32.mxu0 0.0
    %151 = vmatmul.mubr.f32.gmra.mxu0 %v29
    %v152 = vpop.f32.mrf.mxu0
    %v153 = vadd.f32 0.0, %v152
    %v154 = vpop.f32.mrf.mxu0
    %155 = vmatprep.mubr.f32.mxu0 0.0
    %156 = vmatmul.mubr.f32.gmra.mxu0 %v30
    %v157 = vpop.f32.mrf.mxu0
    %v158 = vadd.f32 0.0, %v157
    %v159 = vpop.f32.mrf.mxu0
    %160 = vmatprep.mubr.f32.mxu0 0.0
    %161 = vmatmul.mubr.f32.gmra.mxu0 %v31
    %v162 = vpop.f32.mrf.mxu0
    %v163 = vadd.f32 0.0, %v162
    %v164 = vpop.f32.mrf.mxu0
    %165 = vmatprep.mubr.f32.mxu0 0.0
    %166 = vmatmul.mubr.f32.gmra.mxu0 %v32
    %v167 = vpop.f32.mrf.mxu0
    %v168 = vadd.f32 0.0, %v167
    %v169 = vpop.f32.mrf.mxu0
    %170 = vdwg.mxu0
    %v171 = vlaneseq
    %v172 = vand.u32 %v171, 127
    %vm173 = vcmp.lt.s32.totalorder %v172, 64
    %v174 = vsel %vm173, %v133, %v168
    %v175 = vadd.f32 %v174, %v65
    %176 = vmatprep.subr.mxu0 0.0
    %177 = vmatpush1.msra.mxu0 %v64
    %178 = vmatprep.subr.mxu0 0.0
    %179 = vmatpush1.msra.mxu0 %v63
    %180 = vmatprep.subr.mxu0 0.0
    %181 = vmatpush1.msra.mxu0 %v62
    %182 = vmatprep.subr.mxu0 0.0
    %183 = vmatpush1.msra.mxu0 %v61
    %184 = vmatprep.subr.mxu0 0.0
    %185 = vmatpush1.msra.mxu0 %v60
    %186 = vmatprep.subr.mxu0 0.0
    %187 = vmatpush1.msra.mxu0 %v59
    %188 = vmatprep.subr.mxu0 0.0
    %189 = vmatpush1.msra.mxu0 %v58
    %190 = vmatprep.subr.mxu0 0.0
    %191 = vmatpush1.msra.mxu0 %v57
    %192 = vmatprep.subr.mxu0 0.0
    %193 = vmatpush1.msra.mxu0 %v56
    %194 = vmatprep.subr.mxu0 0.0
    %195 = vmatpush1.msra.mxu0 %v55
    %196 = vmatprep.subr.mxu0 0.0
    %197 = vmatpush1.msra.mxu0 %v54
    %198 = vmatprep.subr.mxu0 0.0
    %199 = vmatpush1.msra.mxu0 %v53
    %200 = vmatprep.subr.mxu0 0.0
    %201 = vmatpush1.msra.mxu0 %v52
    %202 = vmatprep.subr.mxu0 0.0
    %203 = vmatpush1.msra.mxu0 %v51
    %204 = vmatprep.subr.mxu0 0.0
    %205 = vmatpush1.msra.mxu0 %v50
    %206 = vmatprep.subr.mxu0 0.0
    %207 = vmatpush1.msra.mxu0 %v49
    %208 = vmatprep.subr.mxu0 0.0
    %209 = vmatpush2.msra.mxu0 0.0
    %210 = vmatprep.subr.mxu0 0.0
    %211 = vmatpush2.msra.mxu0 0.0
    %212 = vmatprep.subr.mxu0 0.0
    %213 = vmatpush2.msra.mxu0 0.0
    %214 = vmatprep.subr.mxu0 0.0
    %215 = vmatpush2.msra.mxu0 0.0
    %216 = vmatprep.subr.mxu0 0.0
    %217 = vmatpush2.msra.mxu0 0.0
    %218 = vmatprep.subr.mxu0 0.0
    %219 = vmatpush2.msra.mxu0 0.0
    %220 = vmatprep.subr.mxu0 0.0
    %221 = vmatpush2.msra.mxu0 0.0
    %222 = vmatprep.subr.mxu0 0.0
    %223 = vmatpush2.msra.mxu0 0.0
    %224 = vmatprep.subr.mxu0 0.0
    %225 = vmatpush2.msra.mxu0 0.0
    %226 = vmatprep.subr.mxu0 0.0
    %227 = vmatpush2.msra.mxu0 0.0
    %228 = vmatprep.subr.mxu0 0.0
    %229 = vmatpush2.msra.mxu0 0.0
    %230 = vmatprep.subr.mxu0 0.0
    %231 = vmatpush2.msra.mxu0 0.0
    %232 = vmatprep.subr.mxu0 0.0
    %233 = vmatpush2.msra.mxu0 0.0
    %234 = vmatprep.subr.mxu0 0.0
    %235 = vmatpush2.msra.mxu0 0.0
    %236 = vmatprep.subr.mxu0 0.0
    %237 = vmatpush2.msra.mxu0 0.0
    %238 = vmatprep.subr.mxu0 0.0
    %239 = vmatpush2.msra.mxu0 0.0
    %240 = vmatprep.mubr.f32.mxu0 0.0
    %241 = vmatmul.mubr.f32.gmra.mxu0 0.0
    %v242 = vpop.f32.mrf.mxu0
    %v243 = vadd.f32 0.0, %v242
    %v244 = vpop.f32.mrf.mxu0
    %245 = vdwg.mxu0
    %v246 = vadd.f32 %v175, %v243
    %v247 = vmax.f32 %v246, 0.0
    %v248 = vsel %vm173, %v138, %v163
    %v249 = vadd.f32 %v248, %v65
    %250 = vmatprep.subr.mxu0 0.0
    %251 = vmatpush1.msra.mxu0 %v64
    %252 = vmatprep.subr.mxu0 0.0
    %253 = vmatpush1.msra.mxu0 %v63
    %254 = vmatprep.subr.mxu0 0.0
    %255 = vmatpush1.msra.mxu0 %v62
    %256 = vmatprep.subr.mxu0 0.0
    %257 = vmatpush1.msra.mxu0 %v61
    %258 = vmatprep.subr.mxu0 0.0
    %259 = vmatpush1.msra.mxu0 %v60
    %260 = vmatprep.subr.mxu0 0.0
    %261 = vmatpush1.msra.mxu0 %v59
    %262 = vmatprep.subr.mxu0 0.0
    %263 = vmatpush1.msra.mxu0 %v58
    %264 = vmatprep.subr.mxu0 0.0
    %265 = vmatpush1.msra.mxu0 %v57
    %266 = vmatprep.subr.mxu0 0.0
    %267 = vmatpush1.msra.mxu0 %v56
    %268 = vmatprep.subr.mxu0 0.0
    %269 = vmatpush1.msra.mxu0 %v55
    %270 = vmatprep.subr.mxu0 0.0
    %271 = vmatpush1.msra.mxu0 %v54
    %272 = vmatprep.subr.mxu0 0.0
    %273 = vmatpush1.msra.mxu0 %v53
    %274 = vmatprep.subr.mxu0 0.0
    %275 = vmatpush1.msra.mxu0 %v52
    %276 = vmatprep.subr.mxu0 0.0
    %277 = vmatpush1.msra.mxu0 %v51
    %278 = vmatprep.subr.mxu0 0.0
    %279 = vmatpush1.msra.mxu0 %v50
    %280 = vmatprep.subr.mxu0 0.0
    %281 = vmatpush1.msra.mxu0 %v49
    %282 = vmatprep.subr.mxu0 0.0
    %283 = vmatpush2.msra.mxu0 0.0
    %284 = vmatprep.subr.mxu0 0.0
    %285 = vmatpush2.msra.mxu0 0.0
    %286 = vmatprep.subr.mxu0 0.0
    %287 = vmatpush2.msra.mxu0 0.0
    %288 = vmatprep.subr.mxu0 0.0
    %289 = vmatpush2.msra.mxu0 0.0
    %290 = vmatprep.subr.mxu0 0.0
    %291 = vmatpush2.msra.mxu0 0.0
    %292 = vmatprep.subr.mxu0 0.0
    %293 = vmatpush2.msra.mxu0 0.0
    %294 = vmatprep.subr.mxu0 0.0
    %295 = vmatpush2.msra.mxu0 0.0
    %296 = vmatprep.subr.mxu0 0.0
    %297 = vmatpush2.msra.mxu0 0.0
    %298 = vmatprep.subr.mxu0 0.0
    %299 = vmatpush2.msra.mxu0 0.0
    %300 = vmatprep.subr.mxu0 0.0
    %301 = vmatpush2.msra.mxu0 0.0
    %302 = vmatprep.subr.mxu0 0.0
    %303 = vmatpush2.msra.mxu0 0.0
    %304 = vmatprep.subr.mxu0 0.0
    %305 = vmatpush2.msra.mxu0 0.0
    %306 = vmatprep.subr.mxu0 0.0
    %307 = vmatpush2.msra.mxu0 0.0
    %308 = vmatprep.subr.mxu0 0.0
    %309 = vmatpush2.msra.mxu0 0.0
    %310 = vmatprep.subr.mxu0 0.0
    %311 = vmatpush2.msra.mxu0 0.0
    %312 = vmatprep.subr.mxu0 0.0
    %313 = vmatpush2.msra.mxu0 0.0
    %314 = vmatprep.mubr.f32.mxu0 0.0
    %315 = vmatmul.mubr.f32.gmra.mxu0 %v247
    %v316 = vpop.f32.mrf.mxu0
    %v317 = vadd.f32 0.0, %v316
    %v318 = vpop.f32.mrf.mxu0
    %319 = vdwg.mxu0
    %v320 = vadd.f32 %v249, %v317
    %v321 = vmax.f32 %v320, 0.0
    %v322 = vsel %vm173, %v143, %v158
    %v323 = vadd.f32 %v322, %v65
    %324 = vmatprep.subr.mxu0 0.0
    %325 = vmatpush1.msra.mxu0 %v64
    %326 = vmatprep.subr.mxu0 0.0
    %327 = vmatpush1.msra.mxu0 %v63
    %328 = vmatprep.subr.mxu0 0.0
    %329 = vmatpush1.msra.mxu0 %v62
    %330 = vmatprep.subr.mxu0 0.0
    %331 = vmatpush1.msra.mxu0 %v61
    %332 = vmatprep.subr.mxu0 0.0
    %333 = vmatpush1.msra.mxu0 %v60
    %334 = vmatprep.subr.mxu0 0.0
    %335 = vmatpush1.msra.mxu0 %v59
    %336 = vmatprep.subr.mxu0 0.0
    %337 = vmatpush1.msra.mxu0 %v58
    %338 = vmatprep.subr.mxu0 0.0
    %339 = vmatpush1.msra.mxu0 %v57
    %340 = vmatprep.subr.mxu0 0.0
    %341 = vmatpush1.msra.mxu0 %v56
    %342 = vmatprep.subr.mxu0 0.0
    %343 = vmatpush1.msra.mxu0 %v55
    %344 = vmatprep.subr.mxu0 0.0
    %345 = vmatpush1.msra.mxu0 %v54
    %346 = vmatprep.subr.mxu0 0.0
    %347 = vmatpush1.msra.mxu0 %v53
    %348 = vmatprep.subr.mxu0 0.0
    %349 = vmatpush1.msra.mxu0 %v52
    %350 = vmatprep.subr.mxu0 0.0
    %351 = vmatpush1.msra.mxu0 %v51
    %352 = vmatprep.subr.mxu0 0.0
    %353 = vmatpush1.msra.mxu0 %v50
    %354 = vmatprep.subr.mxu0 0.0
    %355 = vmatpush1.msra.mxu0 %v49
    %356 = vmatprep.subr.mxu0 0.0
    %357 = vmatpush2.msra.mxu0 0.0
    %358 = vmatprep.subr.mxu0 0.0
    %359 = vmatpush2.msra.mxu0 0.0
    %360 = vmatprep.subr.mxu0 0.0
    %361 = vmatpush2.msra.mxu0 0.0
    %362 = vmatprep.subr.mxu0 0.0
    %363 = vmatpush2.msra.mxu0 0.0
    %364 = vmatprep.subr.mxu0 0.0
    %365 = vmatpush2.msra.mxu0 0.0
    %366 = vmatprep.subr.mxu0 0.0
    %367 = vmatpush2.msra.mxu0 0.0
    %368 = vmatprep.subr.mxu0 0.0
    %369 = vmatpush2.msra.mxu0 0.0
    %370 = vmatprep.subr.mxu0 0.0
    %371 = vmatpush2.msra.mxu0 0.0
    %372 = vmatprep.subr.mxu0 0.0
    %373 = vmatpush2.msra.mxu0 0.0
    %374 = vmatprep.subr.mxu0 0.0
    %375 = vmatpush2.msra.mxu0 0.0
    %376 = vmatprep.subr.mxu0 0.0
    %377 = vmatpush2.msra.mxu0 0.0
    %378 = vmatprep.subr.mxu0 0.0
    %379 = vmatpush2.msra.mxu0 0.0
    %380 = vmatprep.subr.mxu0 0.0
    %381 = vmatpush2.msra.mxu0 0.0
    %382 = vmatprep.subr.mxu0 0.0
    %383 = vmatpush2.msra.mxu0 0.0
    %384 = vmatprep.subr.mxu0 0.0
    %385 = vmatpush2.msra.mxu0 0.0
    %386 = vmatprep.subr.mxu0 0.0
    %387 = vmatpush2.msra.mxu0 0.0
    %388 = vmatprep.mubr.f32.mxu0 0.0
    %389 = vmatmul.mubr.f32.gmra.mxu0 %v321
    %v390 = vpop.f32.mrf.mxu0
    %v391 = vadd.f32 0.0, %v390
    %v392 = vpop.f32.mrf.mxu0
    %393 = vdwg.mxu0
    %v394 = vadd.f32 %v323, %v391
    %v395 = vmax.f32 %v394, 0.0
    %v396 = vsel %vm173, %v148, %v153
    %v397 = vadd.f32 %v396, %v65
    %398 = vmatprep.subr.mxu0 0.0
    %399 = vmatpush1.msra.mxu0 %v64
    %400 = vmatprep.subr.mxu0 0.0
    %401 = vmatpush1.msra.mxu0 %v63
    %402 = vmatprep.subr.mxu0 0.0
    %403 = vmatpush1.msra.mxu0 %v62
    %404 = vmatprep.subr.mxu0 0.0
    %405 = vmatpush1.msra.mxu0 %v61
    %406 = vmatprep.subr.mxu0 0.0
    %407 = vmatpush1.msra.mxu0 %v60
    %408 = vmatprep.subr.mxu0 0.0
    %409 = vmatpush1.msra.mxu0 %v59
    %410 = vmatprep.subr.mxu0 0.0
    %411 = vmatpush1.msra.mxu0 %v58
    %412 = vmatprep.subr.mxu0 0.0
    %413 = vmatpush1.msra.mxu0 %v57
    %414 = vmatprep.subr.mxu0 0.0
    %415 = vmatpush1.msra.mxu0 %v56
    %416 = vmatprep.subr.mxu0 0.0
    %417 = vmatpush1.msra.mxu0 %v55
    %418 = vmatprep.subr.mxu0 0.0
    %419 = vmatpush1.msra.mxu0 %v54
    %420 = vmatprep.subr.mxu0 0.0
    %421 = vmatpush1.msra.mxu0 %v53
    %422 = vmatprep.subr.mxu0 0.0
    %423 = vmatpush1.msra.mxu0 %v52
    %424 = vmatprep.subr.mxu0 0.0
    %425 = vmatpush1.msra.mxu0 %v51
    %426 = vmatprep.subr.mxu0 0.0
    %427 = vmatpush1.msra.mxu0 %v50
    %428 = vmatprep.subr.mxu0 0.0
    %429 = vmatpush1.msra.mxu0 %v49
    %430 = vmatprep.subr.mxu0 0.0
    %431 = vmatpush2.msra.mxu0 0.0
    %432 = vmatprep.subr.mxu0 0.0
    %433 = vmatpush2.msra.mxu0 0.0
    %434 = vmatprep.subr.mxu0 0.0
    %435 = vmatpush2.msra.mxu0 0.0
    %436 = vmatprep.subr.mxu0 0.0
    %437 = vmatpush2.msra.mxu0 0.0
    %438 = vmatprep.subr.mxu0 0.0
    %439 = vmatpush2.msra.mxu0 0.0
    %440 = vmatprep.subr.mxu0 0.0
    %441 = vmatpush2.msra.mxu0 0.0
    %442 = vmatprep.subr.mxu0 0.0
    %443 = vmatpush2.msra.mxu0 0.0
    %444 = vmatprep.subr.mxu0 0.0
    %445 = vmatpush2.msra.mxu0 0.0
    %446 = vmatprep.subr.mxu0 0.0
    %447 = vmatpush2.msra.mxu0 0.0
    %448 = vmatprep.subr.mxu0 0.0
    %449 = vmatpush2.msra.mxu0 0.0
    %450 = vmatprep.subr.mxu0 0.0
    %451 = vmatpush2.msra.mxu0 0.0
    %452 = vmatprep.subr.mxu0 0.0
    %453 = vmatpush2.msra.mxu0 0.0
    %454 = vmatprep.subr.mxu0 0.0
    %455 = vmatpush2.msra.mxu0 0.0
    %456 = vmatprep.subr.mxu0 0.0
    %457 = vmatpush2.msra.mxu0 0.0
    %458 = vmatprep.subr.mxu0 0.0
    %459 = vmatpush2.msra.mxu0 0.0
    %460 = vmatprep.subr.mxu0 0.0
    %461 = vmatpush2.msra.mxu0 0.0
    %462 = vmatprep.mubr.f32.mxu0 0.0
    %463 = vmatmul.mubr.f32.gmra.mxu0 %v395
    %v464 = vpop.f32.mrf.mxu0
    %v465 = vadd.f32 0.0, %v464
    %v466 = vpop.f32.mrf.mxu0
    %467 = vdwg.mxu0
    %v468 = vadd.f32 %v397, %v465
    %v469 = vmax.f32 %v468, 0.0
    %v470 = vsel %vm173, %v153, %v148
    %v471 = vadd.f32 %v470, %v65
    %472 = vmatprep.subr.mxu0 0.0
    %473 = vmatpush1.msra.mxu0 %v64
    %474 = vmatprep.subr.mxu0 0.0
    %475 = vmatpush1.msra.mxu0 %v63
    %476 = vmatprep.subr.mxu0 0.0
    %477 = vmatpush1.msra.mxu0 %v62
    %478 = vmatprep.subr.mxu0 0.0
    %479 = vmatpush1.msra.mxu0 %v61
    %480 = vmatprep.subr.mxu0 0.0
    %481 = vmatpush1.msra.mxu0 %v60
    %482 = vmatprep.subr.mxu0 0.0
    %483 = vmatpush1.msra.mxu0 %v59
    %484 = vmatprep.subr.mxu0 0.0
    %485 = vmatpush1.msra.mxu0 %v58
    %486 = vmatprep.subr.mxu0 0.0
    %487 = vmatpush1.msra.mxu0 %v57
    %488 = vmatprep.subr.mxu0 0.0
    %489 = vmatpush1.msra.mxu0 %v56
    %490 = vmatprep.subr.mxu0 0.0
    %491 = vmatpush1.msra.mxu0 %v55
    %492 = vmatprep.subr.mxu0 0.0
    %493 = vmatpush1.msra.mxu0 %v54
    %494 = vmatprep.subr.mxu0 0.0
    %495 = vmatpush1.msra.mxu0 %v53
    %496 = vmatprep.subr.mxu0 0.0
    %497 = vmatpush1.msra.mxu0 %v52
    %498 = vmatprep.subr.mxu0 0.0
    %499 = vmatpush1.msra.mxu0 %v51
    %500 = vmatprep.subr.mxu0 0.0
    %501 = vmatpush1.msra.mxu0 %v50
    %502 = vmatprep.subr.mxu0 0.0
    %503 = vmatpush1.msra.mxu0 %v49
    %504 = vmatprep.subr.mxu0 0.0
    %505 = vmatpush2.msra.mxu0 0.0
    %506 = vmatprep.subr.mxu0 0.0
    %507 = vmatpush2.msra.mxu0 0.0
    %508 = vmatprep.subr.mxu0 0.0
    %509 = vmatpush2.msra.mxu0 0.0
    %510 = vmatprep.subr.mxu0 0.0
    %511 = vmatpush2.msra.mxu0 0.0
    %512 = vmatprep.subr.mxu0 0.0
    %513 = vmatpush2.msra.mxu0 0.0
    %514 = vmatprep.subr.mxu0 0.0
    %515 = vmatpush2.msra.mxu0 0.0
    %516 = vmatprep.subr.mxu0 0.0
    %517 = vmatpush2.msra.mxu0 0.0
    %518 = vmatprep.subr.mxu0 0.0
    %519 = vmatpush2.msra.mxu0 0.0
    %520 = vmatprep.subr.mxu0 0.0
    %521 = vmatpush2.msra.mxu0 0.0
    %522 = vmatprep.subr.mxu0 0.0
    %523 = vmatpush2.msra.mxu0 0.0
    %524 = vmatprep.subr.mxu0 0.0
    %525 = vmatpush2.msra.mxu0 0.0
    %526 = vmatprep.subr.mxu0 0.0
    %527 = vmatpush2.msra.mxu0 0.0
    %528 = vmatprep.subr.mxu0 0.0
    %529 = vmatpush2.msra.mxu0 0.0
    %530 = vmatprep.subr.mxu0 0.0
    %531 = vmatpush2.msra.mxu0 0.0
    %532 = vmatprep.subr.mxu0 0.0
    %533 = vmatpush2.msra.mxu0 0.0
    %534 = vmatprep.subr.mxu0 0.0
    %535 = vmatpush2.msra.mxu0 0.0
    %536 = vmatprep.mubr.f32.mxu0 0.0
    %537 = vmatmul.mubr.f32.gmra.mxu0 %v469
    %v538 = vpop.f32.mrf.mxu0
    %v539 = vadd.f32 0.0, %v538
    %v540 = vpop.f32.mrf.mxu0
    %541 = vdwg.mxu0
    %v542 = vadd.f32 %v471, %v539
    %v543 = vmax.f32 %v542, 0.0
    %v544 = vsel %vm173, %v158, %v143
    %v545 = vadd.f32 %v544, %v65
    %546 = vmatprep.subr.mxu0 0.0
    %547 = vmatpush1.msra.mxu0 %v64
    %548 = vmatprep.subr.mxu0 0.0
    %549 = vmatpush1.msra.mxu0 %v63
    %550 = vmatprep.subr.mxu0 0.0
    %551 = vmatpush1.msra.mxu0 %v62
    %552 = vmatprep.subr.mxu0 0.0
    %553 = vmatpush1.msra.mxu0 %v61
    %554 = vmatprep.subr.mxu0 0.0
    %555 = vmatpush1.msra.mxu0 %v60
    %556 = vmatprep.subr.mxu0 0.0
    %557 = vmatpush1.msra.mxu0 %v59
    %558 = vmatprep.subr.mxu0 0.0
    %559 = vmatpush1.msra.mxu0 %v58
    %560 = vmatprep.subr.mxu0 0.0
    %561 = vmatpush1.msra.mxu0 %v57
    %562 = vmatprep.subr.mxu0 0.0
    %563 = vmatpush1.msra.mxu0 %v56
    %564 = vmatprep.subr.mxu0 0.0
    %565 = vmatpush1.msra.mxu0 %v55
    %566 = vmatprep.subr.mxu0 0.0
    %567 = vmatpush1.msra.mxu0 %v54
    %568 = vmatprep.subr.mxu0 0.0
    %569 = vmatpush1.msra.mxu0 %v53
    %570 = vmatprep.subr.mxu0 0.0
    %571 = vmatpush1.msra.mxu0 %v52
    %572 = vmatprep.subr.mxu0 0.0
    %573 = vmatpush1.msra.mxu0 %v51
    %574 = vmatprep.subr.mxu0 0.0
    %575 = vmatpush1.msra.mxu0 %v50
    %576 = vmatprep.subr.mxu0 0.0
    %577 = vmatpush1.msra.mxu0 %v49
    %578 = vmatprep.subr.mxu0 0.0
    %579 = vmatpush2.msra.mxu0 0.0
    %580 = vmatprep.subr.mxu0 0.0
    %581 = vmatpush2.msra.mxu0 0.0
    %582 = vmatprep.subr.mxu0 0.0
    %583 = vmatpush2.msra.mxu0 0.0
    %584 = vmatprep.subr.mxu0 0.0
    %585 = vmatpush2.msra.mxu0 0.0
    %586 = vmatprep.subr.mxu0 0.0
    %587 = vmatpush2.msra.mxu0 0.0
    %588 = vmatprep.subr.mxu0 0.0
    %589 = vmatpush2.msra.mxu0 0.0
    %590 = vmatprep.subr.mxu0 0.0
    %591 = vmatpush2.msra.mxu0 0.0
    %592 = vmatprep.subr.mxu0 0.0
    %593 = vmatpush2.msra.mxu0 0.0
    %594 = vmatprep.subr.mxu0 0.0
    %595 = vmatpush2.msra.mxu0 0.0
    %596 = vmatprep.subr.mxu0 0.0
    %597 = vmatpush2.msra.mxu0 0.0
    %598 = vmatprep.subr.mxu0 0.0
    %599 = vmatpush2.msra.mxu0 0.0
    %600 = vmatprep.subr.mxu0 0.0
    %601 = vmatpush2.msra.mxu0 0.0
    %602 = vmatprep.subr.mxu0 0.0
    %603 = vmatpush2.msra.mxu0 0.0
    %604 = vmatprep.subr.mxu0 0.0
    %605 = vmatpush2.msra.mxu0 0.0
    %606 = vmatprep.subr.mxu0 0.0
    %607 = vmatpush2.msra.mxu0 0.0
    %608 = vmatprep.subr.mxu0 0.0
    %609 = vmatpush2.msra.mxu0 0.0
    %610 = vmatprep.mubr.f32.mxu0 0.0
    %611 = vmatmul.mubr.f32.gmra.mxu0 %v543
    %v612 = vpop.f32.mrf.mxu0
    %v613 = vadd.f32 0.0, %v612
    %v614 = vpop.f32.mrf.mxu0
    %615 = vdwg.mxu0
    %v616 = vadd.f32 %v545, %v613
    %v617 = vmax.f32 %v616, 0.0
    %v618 = vsel %vm173, %v163, %v138
    %v619 = vadd.f32 %v618, %v65
    %620 = vmatprep.subr.mxu0 0.0
    %621 = vmatpush1.msra.mxu0 %v64
    %622 = vmatprep.subr.mxu0 0.0
    %623 = vmatpush1.msra.mxu0 %v63
    %624 = vmatprep.subr.mxu0 0.0
    %625 = vmatpush1.msra.mxu0 %v62
    %626 = vmatprep.subr.mxu0 0.0
    %627 = vmatpush1.msra.mxu0 %v61
    %628 = vmatprep.subr.mxu0 0.0
    %629 = vmatpush1.msra.mxu0 %v60
    %630 = vmatprep.subr.mxu0 0.0
    %631 = vmatpush1.msra.mxu0 %v59
    %632 = vmatprep.subr.mxu0 0.0
    %633 = vmatpush1.msra.mxu0 %v58
    %634 = vmatprep.subr.mxu0 0.0
    %635 = vmatpush1.msra.mxu0 %v57
    %636 = vmatprep.subr.mxu0 0.0
    %637 = vmatpush1.msra.mxu0 %v56
    %638 = vmatprep.subr.mxu0 0.0
    %639 = vmatpush1.msra.mxu0 %v55
    %640 = vmatprep.subr.mxu0 0.0
    %641 = vmatpush1.msra.mxu0 %v54
    %642 = vmatprep.subr.mxu0 0.0
    %643 = vmatpush1.msra.mxu0 %v53
    %644 = vmatprep.subr.mxu0 0.0
    %645 = vmatpush1.msra.mxu0 %v52
    %646 = vmatprep.subr.mxu0 0.0
    %647 = vmatpush1.msra.mxu0 %v51
    %648 = vmatprep.subr.mxu0 0.0
    %649 = vmatpush1.msra.mxu0 %v50
    %650 = vmatprep.subr.mxu0 0.0
    %651 = vmatpush1.msra.mxu0 %v49
    %652 = vmatprep.subr.mxu0 0.0
    %653 = vmatpush2.msra.mxu0 0.0
    %654 = vmatprep.subr.mxu0 0.0
    %655 = vmatpush2.msra.mxu0 0.0
    %656 = vmatprep.subr.mxu0 0.0
    %657 = vmatpush2.msra.mxu0 0.0
    %658 = vmatprep.subr.mxu0 0.0
    %659 = vmatpush2.msra.mxu0 0.0
    %660 = vmatprep.subr.mxu0 0.0
    %661 = vmatpush2.msra.mxu0 0.0
    %662 = vmatprep.subr.mxu0 0.0
    %663 = vmatpush2.msra.mxu0 0.0
    %664 = vmatprep.subr.mxu0 0.0
    %665 = vmatpush2.msra.mxu0 0.0
    %666 = vmatprep.subr.mxu0 0.0
    %667 = vmatpush2.msra.mxu0 0.0
    %668 = vmatprep.subr.mxu0 0.0
    %669 = vmatpush2.msra.mxu0 0.0
    %670 = vmatprep.subr.mxu0 0.0
    %671 = vmatpush2.msra.mxu0 0.0
    %672 = vmatprep.subr.mxu0 0.0
    %673 = vmatpush2.msra.mxu0 0.0
    %674 = vmatprep.subr.mxu0 0.0
    %675 = vmatpush2.msra.mxu0 0.0
    %676 = vmatprep.subr.mxu0 0.0
    %677 = vmatpush2.msra.mxu0 0.0
    %678 = vmatprep.subr.mxu0 0.0
    %679 = vmatpush2.msra.mxu0 0.0
    %680 = vmatprep.subr.mxu0 0.0
    %681 = vmatpush2.msra.mxu0 0.0
    %682 = vmatprep.subr.mxu0 0.0
    %683 = vmatpush2.msra.mxu0 0.0
    %684 = vmatprep.mubr.f32.mxu0 0.0
    %685 = vmatmul.mubr.f32.gmra.mxu0 %v617
    %v686 = vpop.f32.mrf.mxu0
    %v687 = vadd.f32 0.0, %v686
    %v688 = vpop.f32.mrf.mxu0
    %689 = vdwg.mxu0
    %v690 = vadd.f32 %v619, %v687
    %v691 = vmax.f32 %v690, 0.0
    %v692 = vsel %vm173, %v168, %v133
    %v693 = vadd.f32 %v692, %v65
    %694 = vmatprep.subr.mxu0 0.0
    %695 = vmatpush1.msra.mxu0 %v64
    %696 = vmatprep.subr.mxu0 0.0
    %697 = vmatpush1.msra.mxu0 %v63
    %698 = vmatprep.subr.mxu0 0.0
    %699 = vmatpush1.msra.mxu0 %v62
    %700 = vmatprep.subr.mxu0 0.0
    %701 = vmatpush1.msra.mxu0 %v61
    %702 = vmatprep.subr.mxu0 0.0
    %703 = vmatpush1.msra.mxu0 %v60
    %704 = vmatprep.subr.mxu0 0.0
    %705 = vmatpush1.msra.mxu0 %v59
    %706 = vmatprep.subr.mxu0 0.0
    %707 = vmatpush1.msra.mxu0 %v58
    %708 = vmatprep.subr.mxu0 0.0
    %709 = vmatpush1.msra.mxu0 %v57
    %710 = vmatprep.subr.mxu0 0.0
    %711 = vmatpush1.msra.mxu0 %v56
    %712 = vmatprep.subr.mxu0 0.0
    %713 = vmatpush1.msra.mxu0 %v55
    %714 = vmatprep.subr.mxu0 0.0
    %715 = vmatpush1.msra.mxu0 %v54
    %716 = vmatprep.subr.mxu0 0.0
    %717 = vmatpush1.msra.mxu0 %v53
    %718 = vmatprep.subr.mxu0 0.0
    %719 = vmatpush1.msra.mxu0 %v52
    %720 = vmatprep.subr.mxu0 0.0
    %721 = vmatpush1.msra.mxu0 %v51
    %722 = vmatprep.subr.mxu0 0.0
    %723 = vmatpush1.msra.mxu0 %v50
    %724 = vmatprep.subr.mxu0 0.0
    %725 = vmatpush1.msra.mxu0 %v49
    %726 = vmatprep.subr.mxu0 0.0
    %727 = vmatpush2.msra.mxu0 0.0
    %728 = vmatprep.subr.mxu0 0.0
    %729 = vmatpush2.msra.mxu0 0.0
    %730 = vmatprep.subr.mxu0 0.0
    %731 = vmatpush2.msra.mxu0 0.0
    %732 = vmatprep.subr.mxu0 0.0
    %733 = vmatpush2.msra.mxu0 0.0
    %734 = vmatprep.subr.mxu0 0.0
    %735 = vmatpush2.msra.mxu0 0.0
    %736 = vmatprep.subr.mxu0 0.0
    %737 = vmatpush2.msra.mxu0 0.0
    %738 = vmatprep.subr.mxu0 0.0
    %739 = vmatpush2.msra.mxu0 0.0
    %740 = vmatprep.subr.mxu0 0.0
    %741 = vmatpush2.msra.mxu0 0.0
    %742 = vmatprep.subr.mxu0 0.0
    %743 = vmatpush2.msra.mxu0 0.0
    %744 = vmatprep.subr.mxu0 0.0
    %745 = vmatpush2.msra.mxu0 0.0
    %746 = vmatprep.subr.mxu0 0.0
    %747 = vmatpush2.msra.mxu0 0.0
    %748 = vmatprep.subr.mxu0 0.0
    %749 = vmatpush2.msra.mxu0 0.0
    %750 = vmatprep.subr.mxu0 0.0
    %751 = vmatpush2.msra.mxu0 0.0
    %752 = vmatprep.subr.mxu0 0.0
    %753 = vmatpush2.msra.mxu0 0.0
    %754 = vmatprep.subr.mxu0 0.0
    %755 = vmatpush2.msra.mxu0 0.0
    %756 = vmatprep.subr.mxu0 0.0
    %757 = vmatpush2.msra.mxu0 0.0
    %758 = vmatprep.mubr.f32.mxu0 0.0
    %759 = vmatmul.mubr.f32.gmra.mxu0 %v691
    %v760 = vpop.f32.mrf.mxu0
    %v761 = vadd.f32 0.0, %v760
    %v762 = vpop.f32.mrf.mxu0
    %763 = vdwg.mxu0
    %v764 = vadd.f32 %v693, %v761
    %v765 = vmax.f32 %v764, 0.0
    %v766 = vsel %vm173, %v247, %v765
    %v767 = vsel %vm173, %v321, %v691
    %v768 = vsel %vm173, %v395, %v617
    %v769 = vsel %vm173, %v469, %v543
    %v770 = vsel %vm173, %v543, %v469
    %v771 = vsel %vm173, %v617, %v395
    %v772 = vsel %vm173, %v691, %v321
    %v773 = vsel %vm173, %v765, %v247
    %v774 = vld [vmem:[#allocation2 + $0x108] sm:$0xff]
    %v775 = vld [vmem:[#allocation2 + $0x110] sm:$0xff]
    %v776 = vld [vmem:[#allocation2 + $0x118] sm:$0xff]
    %v777 = vld [vmem:[#allocation2 + $0x120] sm:$0xff]
    %v778 = vld [vmem:[#allocation2 + $0x128] sm:$0xff]
    %v779 = vld [vmem:[#allocation2 + $0x130] sm:$0xff]
    %v780 = vld [vmem:[#allocation2 + $0x138] sm:$0xff]
    %v781 = vld [vmem:[#allocation2 + $0x140] sm:$0xff]
    %v782 = vld [vmem:[#allocation2 + $0x148] sm:$0xff]
    %v783 = vld [vmem:[#allocation2 + $0x150] sm:$0xff]
    %v784 = vld [vmem:[#allocation2 + $0x158] sm:$0xff]
    %v785 = vld [vmem:[#allocation2 + $0x160] sm:$0xff]
    %v786 = vld [vmem:[#allocation2 + $0x168] sm:$0xff]
    %v787 = vld [vmem:[#allocation2 + $0x170] sm:$0xff]
    %v788 = vld [vmem:[#allocation2 + $0x178] sm:$0xff]
    %v789 = vld [vmem:[#allocation2 + $0x180] sm:$0xff]
    %v790 = vld [vmem:[#allocation2 + $0x188] sm:$0xff]
    %v791 = vld [vmem:[#allocation2 + $0x190] sm:$0xff]
    %v792 = vld [vmem:[#allocation2 + $0x198] sm:$0xff]
    %v793 = vld [vmem:[#allocation2 + $0x1a0] sm:$0xff]
    %v794 = vld [vmem:[#allocation2 + $0x1a8] sm:$0xff]
    %v795 = vld [vmem:[#allocation2 + $0x1b0] sm:$0xff]
    %v796 = vld [vmem:[#allocation2 + $0x1b8] sm:$0xff]
    %v797 = vld [vmem:[#allocation2 + $0x1c0] sm:$0xff]
    %v798 = vld [vmem:[#allocation2 + $0x1c8] sm:$0xff]
    %v799 = vld [vmem:[#allocation2 + $0x1d0] sm:$0xff]
    %v800 = vld [vmem:[#allocation2 + $0x1d8] sm:$0xff]
    %v801 = vld [vmem:[#allocation2 + $0x1e0] sm:$0xff]
    %v802 = vld [vmem:[#allocation2 + $0x1e8] sm:$0xff]
    %v803 = vld [vmem:[#allocation2 + $0x1f0] sm:$0xff]
    %v804 = vld [vmem:[#allocation2 + $0x1f8] sm:$0xff]
    %v805 = vld [vmem:[#allocation2 + $0x200] sm:$0xff]
    %v806 = vld [vmem:[#allocation2 + $0x208] sm:$0xff]
    %807 = vmatprep.subr.mxu0 0.0
    %808 = vmatpush1.msra.mxu0 %v789
    %809 = vmatprep.subr.mxu0 0.0
    %810 = vmatpush1.msra.mxu0 %v788
    %811 = vmatprep.subr.mxu0 0.0
    %812 = vmatpush1.msra.mxu0 %v787
    %813 = vmatprep.subr.mxu0 0.0
    %814 = vmatpush1.msra.mxu0 %v786
    %815 = vmatprep.subr.mxu0 0.0
    %816 = vmatpush1.msra.mxu0 %v785
    %817 = vmatprep.subr.mxu0 0.0
    %818 = vmatpush1.msra.mxu0 %v784
    %819 = vmatprep.subr.mxu0 0.0
    %820 = vmatpush1.msra.mxu0 %v783
    %821 = vmatprep.subr.mxu0 0.0
    %822 = vmatpush1.msra.mxu0 %v782
    %823 = vmatprep.subr.mxu0 0.0
    %824 = vmatpush1.msra.mxu0 %v781
    %825 = vmatprep.subr.mxu0 0.0
    %826 = vmatpush1.msra.mxu0 %v780
    %827 = vmatprep.subr.mxu0 0.0
    %828 = vmatpush1.msra.mxu0 %v779
    %829 = vmatprep.subr.mxu0 0.0
    %830 = vmatpush1.msra.mxu0 %v778
    %831 = vmatprep.subr.mxu0 0.0
    %832 = vmatpush1.msra.mxu0 %v777
    %833 = vmatprep.subr.mxu0 0.0
    %834 = vmatpush1.msra.mxu0 %v776
    %835 = vmatprep.subr.mxu0 0.0
    %836 = vmatpush1.msra.mxu0 %v775
    %837 = vmatprep.subr.mxu0 0.0
    %838 = vmatpush1.msra.mxu0 %v774
    %839 = vmatprep.subr.mxu0 0.0
    %840 = vmatpush2.msra.mxu0 0.0
    %841 = vmatprep.subr.mxu0 0.0
    %842 = vmatpush2.msra.mxu0 0.0
    %843 = vmatprep.subr.mxu0 0.0
    %844 = vmatpush2.msra.mxu0 0.0
    %845 = vmatprep.subr.mxu0 0.0
    %846 = vmatpush2.msra.mxu0 0.0
    %847 = vmatprep.subr.mxu0 0.0
    %848 = vmatpush2.msra.mxu0 0.0
    %849 = vmatprep.subr.mxu0 0.0
    %850 = vmatpush2.msra.mxu0 0.0
    %851 = vmatprep.subr.mxu0 0.0
    %852 = vmatpush2.msra.mxu0 0.0
    %853 = vmatprep.subr.mxu0 0.0
    %854 = vmatpush2.msra.mxu0 0.0
    %855 = vmatprep.subr.mxu0 0.0
    %856 = vmatpush2.msra.mxu0 0.0
    %857 = vmatprep.subr.mxu0 0.0
    %858 = vmatpush2.msra.mxu0 0.0
    %859 = vmatprep.subr.mxu0 0.0
    %860 = vmatpush2.msra.mxu0 0.0
    %861 = vmatprep.subr.mxu0 0.0
    %862 = vmatpush2.msra.mxu0 0.0
    %863 = vmatprep.subr.mxu0 0.0
    %864 = vmatpush2.msra.mxu0 0.0
    %865 = vmatprep.subr.mxu0 0.0
    %866 = vmatpush2.msra.mxu0 0.0
    %867 = vmatprep.subr.mxu0 0.0
    %868 = vmatpush2.msra.mxu0 0.0
    %869 = vmatprep.subr.mxu0 0.0
    %870 = vmatpush2.msra.mxu0 0.0
    %871 = vmatprep.mubr.f32.mxu0 0.0
    %872 = vmatmul.mubr.f32.gmra.mxu0 %v766
    %v873 = vpop.f32.mrf.mxu0
    %v874 = vadd.f32 0.0, %v873
    %v875 = vpop.f32.mrf.mxu0
    %876 = vmatprep.mubr.f32.mxu0 0.0
    %877 = vmatmul.mubr.f32.gmra.mxu0 %v767
    %v878 = vpop.f32.mrf.mxu0
    %v879 = vadd.f32 0.0, %v878
    %v880 = vpop.f32.mrf.mxu0
    %881 = vmatprep.mubr.f32.mxu0 0.0
    %882 = vmatmul.mubr.f32.gmra.mxu0 %v768
    %v883 = vpop.f32.mrf.mxu0
    %v884 = vadd.f32 0.0, %v883
    %v885 = vpop.f32.mrf.mxu0
    %886 = vmatprep.mubr.f32.mxu0 0.0
    %887 = vmatmul.mubr.f32.gmra.mxu0 %v769
    %v888 = vpop.f32.mrf.mxu0
    %v889 = vadd.f32 0.0, %v888
    %v890 = vpop.f32.mrf.mxu0
    %891 = vmatprep.mubr.f32.mxu0 0.0
    %892 = vmatmul.mubr.f32.gmra.mxu0 %v770
    %v893 = vpop.f32.mrf.mxu0
    %v894 = vadd.f32 0.0, %v893
    %v895 = vpop.f32.mrf.mxu0
    %896 = vmatprep.mubr.f32.mxu0 0.0
    %897 = vmatmul.mubr.f32.gmra.mxu0 %v771
    %v898 = vpop.f32.mrf.mxu0
    %v899 = vadd.f32 0.0, %v898
    %v900 = vpop.f32.mrf.mxu0
    %901 = vmatprep.mubr.f32.mxu0 0.0
    %902 = vmatmul.mubr.f32.gmra.mxu0 %v772
    %v903 = vpop.f32.mrf.mxu0
    %v904 = vadd.f32 0.0, %v903
    %v905 = vpop.f32.mrf.mxu0
    %906 = vmatprep.mubr.f32.mxu0 0.0
    %907 = vmatmul.mubr.f32.gmra.mxu0 %v773
    %v908 = vpop.f32.mrf.mxu0
    %v909 = vadd.f32 0.0, %v908
    %v910 = vpop.f32.mrf.mxu0
    %911 = vdwg.mxu0
    %v912 = vsel %vm173, %v874, %v909
    %v913 = vadd.f32 %v912, %v806
    %914 = vmatprep.subr.mxu0 0.0
    %915 = vmatpush1.msra.mxu0 %v805
    %916 = vmatprep.subr.mxu0 0.0
    %917 = vmatpush1.msra.mxu0 %v804
    %918 = vmatprep.subr.mxu0 0.0
    %919 = vmatpush1.msra.mxu0 %v803
    %920 = vmatprep.subr.mxu0 0.0
    %921 = vmatpush1.msra.mxu0 %v802
    %922 = vmatprep.subr.mxu0 0.0
    %923 = vmatpush1.msra.mxu0 %v801
    %924 = vmatprep.subr.mxu0 0.0
    %925 = vmatpush1.msra.mxu0 %v800
    %926 = vmatprep.subr.mxu0 0.0
    %927 = vmatpush1.msra.mxu0 %v799
    %928 = vmatprep.subr.mxu0 0.0
    %929 = vmatpush1.msra.mxu0 %v798
    %930 = vmatprep.subr.mxu0 0.0
    %931 = vmatpush1.msra.mxu0 %v797
    %932 = vmatprep.subr.mxu0 0.0
    %933 = vmatpush1.msra.mxu0 %v796
    %934 = vmatprep.subr.mxu0 0.0
    %935 = vmatpush1.msra.mxu0 %v795
    %936 = vmatprep.subr.mxu0 0.0
    %937 = vmatpush1.msra.mxu0 %v794
    %938 = vmatprep.subr.mxu0 0.0
    %939 = vmatpush1.msra.mxu0 %v793
    %940 = vmatprep.subr.mxu0 0.0
    %941 = vmatpush1.msra.mxu0 %v792
    %942 = vmatprep.subr.mxu0 0.0
    %943 = vmatpush1.msra.mxu0 %v791
    %944 = vmatprep.subr.mxu0 0.0
    %945 = vmatpush1.msra.mxu0 %v790
    %946 = vmatprep.subr.mxu0 0.0
    %947 = vmatpush2.msra.mxu0 0.0
    %948 = vmatprep.subr.mxu0 0.0
    %949 = vmatpush2.msra.mxu0 0.0
    %950 = vmatprep.subr.mxu0 0.0
    %951 = vmatpush2.msra.mxu0 0.0
    %952 = vmatprep.subr.mxu0 0.0
    %953 = vmatpush2.msra.mxu0 0.0
    %954 = vmatprep.subr.mxu0 0.0
    %955 = vmatpush2.msra.mxu0 0.0
    %956 = vmatprep.subr.mxu0 0.0
    %957 = vmatpush2.msra.mxu0 0.0
    %958 = vmatprep.subr.mxu0 0.0
    %959 = vmatpush2.msra.mxu0 0.0
    %960 = vmatprep.subr.mxu0 0.0
    %961 = vmatpush2.msra.mxu0 0.0
    %962 = vmatprep.subr.mxu0 0.0
    %963 = vmatpush2.msra.mxu0 0.0
    %964 = vmatprep.subr.mxu0 0.0
    %965 = vmatpush2.msra.mxu0 0.0
    %966 = vmatprep.subr.mxu0 0.0
    %967 = vmatpush2.msra.mxu0 0.0
    %968 = vmatprep.subr.mxu0 0.0
    %969 = vmatpush2.msra.mxu0 0.0
    %970 = vmatprep.subr.mxu0 0.0
    %971 = vmatpush2.msra.mxu0 0.0
    %972 = vmatprep.subr.mxu0 0.0
    %973 = vmatpush2.msra.mxu0 0.0
    %974 = vmatprep.subr.mxu0 0.0
    %975 = vmatpush2.msra.mxu0 0.0
    %976 = vmatprep.subr.mxu0 0.0
    %977 = vmatpush2.msra.mxu0 0.0
    %978 = vmatprep.mubr.f32.mxu0 0.0
    %979 = vmatmul.mubr.f32.gmra.mxu0 0.0
    %v980 = vpop.f32.mrf.mxu0
    %v981 = vadd.f32 0.0, %v980
    %v982 = vpop.f32.mrf.mxu0
    %983 = vdwg.mxu0
    %v984 = vadd.f32 %v913, %v981
    %v985 = vmax.f32 %v984, 0.0
    %v986 = vsel %vm173, %v879, %v904
    %v987 = vadd.f32 %v986, %v806
    %988 = vmatprep.subr.mxu0 0.0
    %989 = vmatpush1.msra.mxu0 %v805
    %990 = vmatprep.subr.mxu0 0.0
    %991 = vmatpush1.msra.mxu0 %v804
    %992 = vmatprep.subr.mxu0 0.0
    %993 = vmatpush1.msra.mxu0 %v803
    %994 = vmatprep.subr.mxu0 0.0
    %995 = vmatpush1.msra.mxu0 %v802
    %996 = vmatprep.subr.mxu0 0.0
    %997 = vmatpush1.msra.mxu0 %v801
    %998 = vmatprep.subr.mxu0 0.0
    %999 = vmatpush1.msra.mxu0 %v800
    %1000 = vmatprep.subr.mxu0 0.0
    %1001 = vmatpush1.msra.mxu0 %v799
    %1002 = vmatprep.subr.mxu0 0.0
    %1003 = vmatpush1.msra.mxu0 %v798
    %1004 = vmatprep.subr.mxu0 0.0
    %1005 = vmatpush1.msra.mxu0 %v797
    %1006 = vmatprep.subr.mxu0 0.0
    %1007 = vmatpush1.msra.mxu0 %v796
    %1008 = vmatprep.subr.mxu0 0.0
    %1009 = vmatpush1.msra.mxu0 %v795
    %1010 = vmatprep.subr.mxu0 0.0
    %1011 = vmatpush1.msra.mxu0 %v794
    %1012 = vmatprep.subr.mxu0 0.0
    %1013 = vmatpush1.msra.mxu0 %v793
    %1014 = vmatprep.subr.mxu0 0.0
    %1015 = vmatpush1.msra.mxu0 %v792
    %1016 = vmatprep.subr.mxu0 0.0
    %1017 = vmatpush1.msra.mxu0 %v791
    %1018 = vmatprep.subr.mxu0 0.0
    %1019 = vmatpush1.msra.mxu0 %v790
    %1020 = vmatprep.subr.mxu0 0.0
    %1021 = vmatpush2.msra.mxu0 0.0
    %1022 = vmatprep.subr.mxu0 0.0
    %1023 = vmatpush2.msra.mxu0 0.0
    %1024 = vmatprep.subr.mxu0 0.0
    %1025 = vmatpush2.msra.mxu0 0.0
    %1026 = vmatprep.subr.mxu0 0.0
    %1027 = vmatpush2.msra.mxu0 0.0
    %1028 = vmatprep.subr.mxu0 0.0
    %1029 = vmatpush2.msra.mxu0 0.0
    %1030 = vmatprep.subr.mxu0 0.0
    %1031 = vmatpush2.msra.mxu0 0.0
    %1032 = vmatprep.subr.mxu0 0.0
    %1033 = vmatpush2.msra.mxu0 0.0
    %1034 = vmatprep.subr.mxu0 0.0
    %1035 = vmatpush2.msra.mxu0 0.0
    %1036 = vmatprep.subr.mxu0 0.0
    %1037 = vmatpush2.msra.mxu0 0.0
    %1038 = vmatprep.subr.mxu0 0.0
    %1039 = vmatpush2.msra.mxu0 0.0
    %1040 = vmatprep.subr.mxu0 0.0
    %1041 = vmatpush2.msra.mxu0 0.0
    %1042 = vmatprep.subr.mxu0 0.0
    %1043 = vmatpush2.msra.mxu0 0.0
    %1044 = vmatprep.subr.mxu0 0.0
    %1045 = vmatpush2.msra.mxu0 0.0
    %1046 = vmatprep.subr.mxu0 0.0
    %1047 = vmatpush2.msra.mxu0 0.0
    %1048 = vmatprep.subr.mxu0 0.0
    %1049 = vmatpush2.msra.mxu0 0.0
    %1050 = vmatprep.subr.mxu0 0.0
    %1051 = vmatpush2.msra.mxu0 0.0
    %1052 = vmatprep.mubr.f32.mxu0 0.0
    %1053 = vmatmul.mubr.f32.gmra.mxu0 %v985
    %v1054 = vpop.f32.mrf.mxu0
    %v1055 = vadd.f32 0.0, %v1054
    %v1056 = vpop.f32.mrf.mxu0
    %1057 = vdwg.mxu0
    %v1058 = vadd.f32 %v987, %v1055
    %v1059 = vmax.f32 %v1058, 0.0
    %v1060 = vsel %vm173, %v884, %v899
    %v1061 = vadd.f32 %v1060, %v806
    %1062 = vmatprep.subr.mxu0 0.0
    %1063 = vmatpush1.msra.mxu0 %v805
    %1064 = vmatprep.subr.mxu0 0.0
    %1065 = vmatpush1.msra.mxu0 %v804
    %1066 = vmatprep.subr.mxu0 0.0
    %1067 = vmatpush1.msra.mxu0 %v803
    %1068 = vmatprep.subr.mxu0 0.0
    %1069 = vmatpush1.msra.mxu0 %v802
    %1070 = vmatprep.subr.mxu0 0.0
    %1071 = vmatpush1.msra.mxu0 %v801
    %1072 = vmatprep.subr.mxu0 0.0
    %1073 = vmatpush1.msra.mxu0 %v800
    %1074 = vmatprep.subr.mxu0 0.0
    %1075 = vmatpush1.msra.mxu0 %v799
    %1076 = vmatprep.subr.mxu0 0.0
    %1077 = vmatpush1.msra.mxu0 %v798
    %1078 = vmatprep.subr.mxu0 0.0
    %1079 = vmatpush1.msra.mxu0 %v797
    %1080 = vmatprep.subr.mxu0 0.0
    %1081 = vmatpush1.msra.mxu0 %v796
    %1082 = vmatprep.subr.mxu0 0.0
    %1083 = vmatpush1.msra.mxu0 %v795
    %1084 = vmatprep.subr.mxu0 0.0
    %1085 = vmatpush1.msra.mxu0 %v794
    %1086 = vmatprep.subr.mxu0 0.0
    %1087 = vmatpush1.msra.mxu0 %v793
    %1088 = vmatprep.subr.mxu0 0.0
    %1089 = vmatpush1.msra.mxu0 %v792
    %1090 = vmatprep.subr.mxu0 0.0
    %1091 = vmatpush1.msra.mxu0 %v791
    %1092 = vmatprep.subr.mxu0 0.0
    %1093 = vmatpush1.msra.mxu0 %v790
    %1094 = vmatprep.subr.mxu0 0.0
    %1095 = vmatpush2.msra.mxu0 0.0
    %1096 = vmatprep.subr.mxu0 0.0
    %1097 = vmatpush2.msra.mxu0 0.0
    %1098 = vmatprep.subr.mxu0 0.0
    %1099 = vmatpush2.msra.mxu0 0.0
    %1100 = vmatprep.subr.mxu0 0.0
    %1101 = vmatpush2.msra.mxu0 0.0
    %1102 = vmatprep.subr.mxu0 0.0
    %1103 = vmatpush2.msra.mxu0 0.0
    %1104 = vmatprep.subr.mxu0 0.0
    %1105 = vmatpush2.msra.mxu0 0.0
    %1106 = vmatprep.subr.mxu0 0.0
    %1107 = vmatpush2.msra.mxu0 0.0
    %1108 = vmatprep.subr.mxu0 0.0
    %1109 = vmatpush2.msra.mxu0 0.0
    %1110 = vmatprep.subr.mxu0 0.0
    %1111 = vmatpush2.msra.mxu0 0.0
    %1112 = vmatprep.subr.mxu0 0.0
    %1113 = vmatpush2.msra.mxu0 0.0
    %1114 = vmatprep.subr.mxu0 0.0
    %1115 = vmatpush2.msra.mxu0 0.0
    %1116 = vmatprep.subr.mxu0 0.0
    %1117 = vmatpush2.msra.mxu0 0.0
    %1118 = vmatprep.subr.mxu0 0.0
    %1119 = vmatpush2.msra.mxu0 0.0
    %1120 = vmatprep.subr.mxu0 0.0
    %1121 = vmatpush2.msra.mxu0 0.0
    %1122 = vmatprep.subr.mxu0 0.0
    %1123 = vmatpush2.msra.mxu0 0.0
    %1124 = vmatprep.subr.mxu0 0.0
    %1125 = vmatpush2.msra.mxu0 0.0
    %1126 = vmatprep.mubr.f32.mxu0 0.0
    %1127 = vmatmul.mubr.f32.gmra.mxu0 %v1059
    %v1128 = vpop.f32.mrf.mxu0
    %v1129 = vadd.f32 0.0, %v1128
    %v1130 = vpop.f32.mrf.mxu0
    %1131 = vdwg.mxu0
    %v1132 = vadd.f32 %v1061, %v1129
    %v1133 = vmax.f32 %v1132, 0.0
    %v1134 = vsel %vm173, %v889, %v894
    %v1135 = vadd.f32 %v1134, %v806
    %1136 = vmatprep.subr.mxu0 0.0
    %1137 = vmatpush1.msra.mxu0 %v805
    %1138 = vmatprep.subr.mxu0 0.0
    %1139 = vmatpush1.msra.mxu0 %v804
    %1140 = vmatprep.subr.mxu0 0.0
    %1141 = vmatpush1.msra.mxu0 %v803
    %1142 = vmatprep.subr.mxu0 0.0
    %1143 = vmatpush1.msra.mxu0 %v802
    %1144 = vmatprep.subr.mxu0 0.0
    %1145 = vmatpush1.msra.mxu0 %v801
    %1146 = vmatprep.subr.mxu0 0.0
    %1147 = vmatpush1.msra.mxu0 %v800
    %1148 = vmatprep.subr.mxu0 0.0
    %1149 = vmatpush1.msra.mxu0 %v799
    %1150 = vmatprep.subr.mxu0 0.0
    %1151 = vmatpush1.msra.mxu0 %v798
    %1152 = vmatprep.subr.mxu0 0.0
    %1153 = vmatpush1.msra.mxu0 %v797
    %1154 = vmatprep.subr.mxu0 0.0
    %1155 = vmatpush1.msra.mxu0 %v796
    %1156 = vmatprep.subr.mxu0 0.0
    %1157 = vmatpush1.msra.mxu0 %v795
    %1158 = vmatprep.subr.mxu0 0.0
    %1159 = vmatpush1.msra.mxu0 %v794
    %1160 = vmatprep.subr.mxu0 0.0
    %1161 = vmatpush1.msra.mxu0 %v793
    %1162 = vmatprep.subr.mxu0 0.0
    %1163 = vmatpush1.msra.mxu0 %v792
    %1164 = vmatprep.subr.mxu0 0.0
    %1165 = vmatpush1.msra.mxu0 %v791
    %1166 = vmatprep.subr.mxu0 0.0
    %1167 = vmatpush1.msra.mxu0 %v790
    %1168 = vmatprep.subr.mxu0 0.0
    %1169 = vmatpush2.msra.mxu0 0.0
    %1170 = vmatprep.subr.mxu0 0.0
    %1171 = vmatpush2.msra.mxu0 0.0
    %1172 = vmatprep.subr.mxu0 0.0
    %1173 = vmatpush2.msra.mxu0 0.0
    %1174 = vmatprep.subr.mxu0 0.0
    %1175 = vmatpush2.msra.mxu0 0.0
    %1176 = vmatprep.subr.mxu0 0.0
    %1177 = vmatpush2.msra.mxu0 0.0
    %1178 = vmatprep.subr.mxu0 0.0
    %1179 = vmatpush2.msra.mxu0 0.0
    %1180 = vmatprep.subr.mxu0 0.0
    %1181 = vmatpush2.msra.mxu0 0.0
    %1182 = vmatprep.subr.mxu0 0.0
    %1183 = vmatpush2.msra.mxu0 0.0
    %1184 = vmatprep.subr.mxu0 0.0
    %1185 = vmatpush2.msra.mxu0 0.0
    %1186 = vmatprep.subr.mxu0 0.0
    %1187 = vmatpush2.msra.mxu0 0.0
    %1188 = vmatprep.subr.mxu0 0.0
    %1189 = vmatpush2.msra.mxu0 0.0
    %1190 = vmatprep.subr.mxu0 0.0
    %1191 = vmatpush2.msra.mxu0 0.0
    %1192 = vmatprep.subr.mxu0 0.0
    %1193 = vmatpush2.msra.mxu0 0.0
    %1194 = vmatprep.subr.mxu0 0.0
    %1195 = vmatpush2.msra.mxu0 0.0
    %1196 = vmatprep.subr.mxu0 0.0
    %1197 = vmatpush2.msra.mxu0 0.0
    %1198 = vmatprep.subr.mxu0 0.0
    %1199 = vmatpush2.msra.mxu0 0.0
    %1200 = vmatprep.mubr.f32.mxu0 0.0
    %1201 = vmatmul.mubr.f32.gmra.mxu0 %v1133
    %v1202 = vpop.f32.mrf.mxu0
    %v1203 = vadd.f32 0.0, %v1202
    %v1204 = vpop.f32.mrf.mxu0
    %1205 = vdwg.mxu0
    %v1206 = vadd.f32 %v1135, %v1203
    %v1207 = vmax.f32 %v1206, 0.0
    %v1208 = vsel %vm173, %v894, %v889
    %v1209 = vadd.f32 %v1208, %v806
    %1210 = vmatprep.subr.mxu0 0.0
    %1211 = vmatpush1.msra.mxu0 %v805
    %1212 = vmatprep.subr.mxu0 0.0
    %1213 = vmatpush1.msra.mxu0 %v804
    %1214 = vmatprep.subr.mxu0 0.0
    %1215 = vmatpush1.msra.mxu0 %v803
    %1216 = vmatprep.subr.mxu0 0.0
    %1217 = vmatpush1.msra.mxu0 %v802
    %1218 = vmatprep.subr.mxu0 0.0
    %1219 = vmatpush1.msra.mxu0 %v801
    %1220 = vmatprep.subr.mxu0 0.0
    %1221 = vmatpush1.msra.mxu0 %v800
    %1222 = vmatprep.subr.mxu0 0.0
    %1223 = vmatpush1.msra.mxu0 %v799
    %1224 = vmatprep.subr.mxu0 0.0
    %1225 = vmatpush1.msra.mxu0 %v798
    %1226 = vmatprep.subr.mxu0 0.0
    %1227 = vmatpush1.msra.mxu0 %v797
    %1228 = vmatprep.subr.mxu0 0.0
    %1229 = vmatpush1.msra.mxu0 %v796
    %1230 = vmatprep.subr.mxu0 0.0
    %1231 = vmatpush1.msra.mxu0 %v795
    %1232 = vmatprep.subr.mxu0 0.0
    %1233 = vmatpush1.msra.mxu0 %v794
    %1234 = vmatprep.subr.mxu0 0.0
    %1235 = vmatpush1.msra.mxu0 %v793
    %1236 = vmatprep.subr.mxu0 0.0
    %1237 = vmatpush1.msra.mxu0 %v792
    %1238 = vmatprep.subr.mxu0 0.0
    %1239 = vmatpush1.msra.mxu0 %v791
    %1240 = vmatprep.subr.mxu0 0.0
    %1241 = vmatpush1.msra.mxu0 %v790
    %1242 = vmatprep.subr.mxu0 0.0
    %1243 = vmatpush2.msra.mxu0 0.0
    %1244 = vmatprep.subr.mxu0 0.0
    %1245 = vmatpush2.msra.mxu0 0.0
    %1246 = vmatprep.subr.mxu0 0.0
    %1247 = vmatpush2.msra.mxu0 0.0
    %1248 = vmatprep.subr.mxu0 0.0
    %1249 = vmatpush2.msra.mxu0 0.0
    %1250 = vmatprep.subr.mxu0 0.0
    %1251 = vmatpush2.msra.mxu0 0.0
    %1252 = vmatprep.subr.mxu0 0.0
    %1253 = vmatpush2.msra.mxu0 0.0
    %1254 = vmatprep.subr.mxu0 0.0
    %1255 = vmatpush2.msra.mxu0 0.0
    %1256 = vmatprep.subr.mxu0 0.0
    %1257 = vmatpush2.msra.mxu0 0.0
    %1258 = vmatprep.subr.mxu0 0.0
    %1259 = vmatpush2.msra.mxu0 0.0
    %1260 = vmatprep.subr.mxu0 0.0
    %1261 = vmatpush2.msra.mxu0 0.0
    %1262 = vmatprep.subr.mxu0 0.0
    %1263 = vmatpush2.msra.mxu0 0.0
    %1264 = vmatprep.subr.mxu0 0.0
    %1265 = vmatpush2.msra.mxu0 0.0
    %1266 = vmatprep.subr.mxu0 0.0
    %1267 = vmatpush2.msra.mxu0 0.0
    %1268 = vmatprep.subr.mxu0 0.0
    %1269 = vmatpush2.msra.mxu0 0.0
    %1270 = vmatprep.subr.mxu0 0.0
    %1271 = vmatpush2.msra.mxu0 0.0
    %1272 = vmatprep.subr.mxu0 0.0
    %1273 = vmatpush2.msra.mxu0 0.0
    %1274 = vmatprep.mubr.f32.mxu0 0.0
    %1275 = vmatmul.mubr.f32.gmra.mxu0 %v1207
    %v1276 = vpop.f32.mrf.mxu0
    %v1277 = vadd.f32 0.0, %v1276
    %v1278 = vpop.f32.mrf.mxu0
    %1279 = vdwg.mxu0
    %v1280 = vadd.f32 %v1209, %v1277
    %v1281 = vmax.f32 %v1280, 0.0
    %v1282 = vsel %vm173, %v899, %v884
    %v1283 = vadd.f32 %v1282, %v806
    %1284 = vmatprep.subr.mxu0 0.0
    %1285 = vmatpush1.msra.mxu0 %v805
    %1286 = vmatprep.subr.mxu0 0.0
    %1287 = vmatpush1.msra.mxu0 %v804
    %1288 = vmatprep.subr.mxu0 0.0
    %1289 = vmatpush1.msra.mxu0 %v803
    %1290 = vmatprep.subr.mxu0 0.0
    %1291 = vmatpush1.msra.mxu0 %v802
    %1292 = vmatprep.subr.mxu0 0.0
    %1293 = vmatpush1.msra.mxu0 %v801
    %1294 = vmatprep.subr.mxu0 0.0
    %1295 = vmatpush1.msra.mxu0 %v800
    %1296 = vmatprep.subr.mxu0 0.0
    %1297 = vmatpush1.msra.mxu0 %v799
    %1298 = vmatprep.subr.mxu0 0.0
    %1299 = vmatpush1.msra.mxu0 %v798
    %1300 = vmatprep.subr.mxu0 0.0
    %1301 = vmatpush1.msra.mxu0 %v797
    %1302 = vmatprep.subr.mxu0 0.0
    %1303 = vmatpush1.msra.mxu0 %v796
    %1304 = vmatprep.subr.mxu0 0.0
    %1305 = vmatpush1.msra.mxu0 %v795
    %1306 = vmatprep.subr.mxu0 0.0
    %1307 = vmatpush1.msra.mxu0 %v794
    %1308 = vmatprep.subr.mxu0 0.0
    %1309 = vmatpush1.msra.mxu0 %v793
    %1310 = vmatprep.subr.mxu0 0.0
    %1311 = vmatpush1.msra.mxu0 %v792
    %1312 = vmatprep.subr.mxu0 0.0
    %1313 = vmatpush1.msra.mxu0 %v791
    %1314 = vmatprep.subr.mxu0 0.0
    %1315 = vmatpush1.msra.mxu0 %v790
    %1316 = vmatprep.subr.mxu0 0.0
    %1317 = vmatpush2.msra.mxu0 0.0
    %1318 = vmatprep.subr.mxu0 0.0
    %1319 = vmatpush2.msra.mxu0 0.0
    %1320 = vmatprep.subr.mxu0 0.0
    %1321 = vmatpush2.msra.mxu0 0.0
    %1322 = vmatprep.subr.mxu0 0.0
    %1323 = vmatpush2.msra.mxu0 0.0
    %1324 = vmatprep.subr.mxu0 0.0
    %1325 = vmatpush2.msra.mxu0 0.0
    %1326 = vmatprep.subr.mxu0 0.0
    %1327 = vmatpush2.msra.mxu0 0.0
    %1328 = vmatprep.subr.mxu0 0.0
    %1329 = vmatpush2.msra.mxu0 0.0
    %1330 = vmatprep.subr.mxu0 0.0
    %1331 = vmatpush2.msra.mxu0 0.0
    %1332 = vmatprep.subr.mxu0 0.0
    %1333 = vmatpush2.msra.mxu0 0.0
    %1334 = vmatprep.subr.mxu0 0.0
    %1335 = vmatpush2.msra.mxu0 0.0
    %1336 = vmatprep.subr.mxu0 0.0
    %1337 = vmatpush2.msra.mxu0 0.0
    %1338 = vmatprep.subr.mxu0 0.0
    %1339 = vmatpush2.msra.mxu0 0.0
    %1340 = vmatprep.subr.mxu0 0.0
    %1341 = vmatpush2.msra.mxu0 0.0
    %1342 = vmatprep.subr.mxu0 0.0
    %1343 = vmatpush2.msra.mxu0 0.0
    %1344 = vmatprep.subr.mxu0 0.0
    %1345 = vmatpush2.msra.mxu0 0.0
    %1346 = vmatprep.subr.mxu0 0.0
    %1347 = vmatpush2.msra.mxu0 0.0
    %1348 = vmatprep.mubr.f32.mxu0 0.0
    %1349 = vmatmul.mubr.f32.gmra.mxu0 %v1281
    %v1350 = vpop.f32.mrf.mxu0
    %v1351 = vadd.f32 0.0, %v1350
    %v1352 = vpop.f32.mrf.mxu0
    %1353 = vdwg.mxu0
    %v1354 = vadd.f32 %v1283, %v1351
    %v1355 = vmax.f32 %v1354, 0.0
    %v1356 = vsel %vm173, %v904, %v879
    %v1357 = vadd.f32 %v1356, %v806
    %1358 = vmatprep.subr.mxu0 0.0
    %1359 = vmatpush1.msra.mxu0 %v805
    %1360 = vmatprep.subr.mxu0 0.0
    %1361 = vmatpush1.msra.mxu0 %v804
    %1362 = vmatprep.subr.mxu0 0.0
    %1363 = vmatpush1.msra.mxu0 %v803
    %1364 = vmatprep.subr.mxu0 0.0
    %1365 = vmatpush1.msra.mxu0 %v802
    %1366 = vmatprep.subr.mxu0 0.0
    %1367 = vmatpush1.msra.mxu0 %v801
    %1368 = vmatprep.subr.mxu0 0.0
    %1369 = vmatpush1.msra.mxu0 %v800
    %1370 = vmatprep.subr.mxu0 0.0
    %1371 = vmatpush1.msra.mxu0 %v799
    %1372 = vmatprep.subr.mxu0 0.0
    %1373 = vmatpush1.msra.mxu0 %v798
    %1374 = vmatprep.subr.mxu0 0.0
    %1375 = vmatpush1.msra.mxu0 %v797
    %1376 = vmatprep.subr.mxu0 0.0
    %1377 = vmatpush1.msra.mxu0 %v796
    %1378 = vmatprep.subr.mxu0 0.0
    %1379 = vmatpush1.msra.mxu0 %v795
    %1380 = vmatprep.subr.mxu0 0.0
    %1381 = vmatpush1.msra.mxu0 %v794
    %1382 = vmatprep.subr.mxu0 0.0
    %1383 = vmatpush1.msra.mxu0 %v793
    %1384 = vmatprep.subr.mxu0 0.0
    %1385 = vmatpush1.msra.mxu0 %v792
    %1386 = vmatprep.subr.mxu0 0.0
    %1387 = vmatpush1.msra.mxu0 %v791
    %1388 = vmatprep.subr.mxu0 0.0
    %1389 = vmatpush1.msra.mxu0 %v790
    %1390 = vmatprep.subr.mxu0 0.0
    %1391 = vmatpush2.msra.mxu0 0.0
    %1392 = vmatprep.subr.mxu0 0.0
    %1393 = vmatpush2.msra.mxu0 0.0
    %1394 = vmatprep.subr.mxu0 0.0
    %1395 = vmatpush2.msra.mxu0 0.0
    %1396 = vmatprep.subr.mxu0 0.0
    %1397 = vmatpush2.msra.mxu0 0.0
    %1398 = vmatprep.subr.mxu0 0.0
    %1399 = vmatpush2.msra.mxu0 0.0
    %1400 = vmatprep.subr.mxu0 0.0
    %1401 = vmatpush2.msra.mxu0 0.0
    %1402 = vmatprep.subr.mxu0 0.0
    %1403 = vmatpush2.msra.mxu0 0.0
    %1404 = vmatprep.subr.mxu0 0.0
    %1405 = vmatpush2.msra.mxu0 0.0
    %1406 = vmatprep.subr.mxu0 0.0
    %1407 = vmatpush2.msra.mxu0 0.0
    %1408 = vmatprep.subr.mxu0 0.0
    %1409 = vmatpush2.msra.mxu0 0.0
    %1410 = vmatprep.subr.mxu0 0.0
    %1411 = vmatpush2.msra.mxu0 0.0
    %1412 = vmatprep.subr.mxu0 0.0
    %1413 = vmatpush2.msra.mxu0 0.0
    %1414 = vmatprep.subr.mxu0 0.0
    %1415 = vmatpush2.msra.mxu0 0.0
    %1416 = vmatprep.subr.mxu0 0.0
    %1417 = vmatpush2.msra.mxu0 0.0
    %1418 = vmatprep.subr.mxu0 0.0
    %1419 = vmatpush2.msra.mxu0 0.0
    %1420 = vmatprep.subr.mxu0 0.0
    %1421 = vmatpush2.msra.mxu0 0.0
    %1422 = vmatprep.mubr.f32.mxu0 0.0
    %1423 = vmatmul.mubr.f32.gmra.mxu0 %v1355
    %v1424 = vpop.f32.mrf.mxu0
    %v1425 = vadd.f32 0.0, %v1424
    %v1426 = vpop.f32.mrf.mxu0
    %1427 = vdwg.mxu0
    %v1428 = vadd.f32 %v1357, %v1425
    %v1429 = vmax.f32 %v1428, 0.0
    %v1430 = vsel %vm173, %v909, %v874
    %v1431 = vadd.f32 %v1430, %v806
    %1432 = vmatprep.subr.mxu0 0.0
    %1433 = vmatpush1.msra.mxu0 %v805
    %1434 = vmatprep.subr.mxu0 0.0
    %1435 = vmatpush1.msra.mxu0 %v804
    %1436 = vmatprep.subr.mxu0 0.0
    %1437 = vmatpush1.msra.mxu0 %v803
    %1438 = vmatprep.subr.mxu0 0.0
    %1439 = vmatpush1.msra.mxu0 %v802
    %1440 = vmatprep.subr.mxu0 0.0
    %1441 = vmatpush1.msra.mxu0 %v801
    %1442 = vmatprep.subr.mxu0 0.0
    %1443 = vmatpush1.msra.mxu0 %v800
    %1444 = vmatprep.subr.mxu0 0.0
    %1445 = vmatpush1.msra.mxu0 %v799
    %1446 = vmatprep.subr.mxu0 0.0
    %1447 = vmatpush1.msra.mxu0 %v798
    %1448 = vmatprep.subr.mxu0 0.0
    %1449 = vmatpush1.msra.mxu0 %v797
    %1450 = vmatprep.subr.mxu0 0.0
    %1451 = vmatpush1.msra.mxu0 %v796
    %1452 = vmatprep.subr.mxu0 0.0
    %1453 = vmatpush1.msra.mxu0 %v795
    %1454 = vmatprep.subr.mxu0 0.0
    %1455 = vmatpush1.msra.mxu0 %v794
    %1456 = vmatprep.subr.mxu0 0.0
    %1457 = vmatpush1.msra.mxu0 %v793
    %1458 = vmatprep.subr.mxu0 0.0
    %1459 = vmatpush1.msra.mxu0 %v792
    %1460 = vmatprep.subr.mxu0 0.0
    %1461 = vmatpush1.msra.mxu0 %v791
    %1462 = vmatprep.subr.mxu0 0.0
    %1463 = vmatpush1.msra.mxu0 %v790
    %1464 = vmatprep.subr.mxu0 0.0
    %1465 = vmatpush2.msra.mxu0 0.0
    %1466 = vmatprep.subr.mxu0 0.0
    %1467 = vmatpush2.msra.mxu0 0.0
    %1468 = vmatprep.subr.mxu0 0.0
    %1469 = vmatpush2.msra.mxu0 0.0
    %1470 = vmatprep.subr.mxu0 0.0
    %1471 = vmatpush2.msra.mxu0 0.0
    %1472 = vmatprep.subr.mxu0 0.0
    %1473 = vmatpush2.msra.mxu0 0.0
    %1474 = vmatprep.subr.mxu0 0.0
    %1475 = vmatpush2.msra.mxu0 0.0
    %1476 = vmatprep.subr.mxu0 0.0
    %1477 = vmatpush2.msra.mxu0 0.0
    %1478 = vmatprep.subr.mxu0 0.0
    %1479 = vmatpush2.msra.mxu0 0.0
    %1480 = vmatprep.subr.mxu0 0.0
    %1481 = vmatpush2.msra.mxu0 0.0
    %1482 = vmatprep.subr.mxu0 0.0
    %1483 = vmatpush2.msra.mxu0 0.0
    %1484 = vmatprep.subr.mxu0 0.0
    %1485 = vmatpush2.msra.mxu0 0.0
    %1486 = vmatprep.subr.mxu0 0.0
    %1487 = vmatpush2.msra.mxu0 0.0
    %1488 = vmatprep.subr.mxu0 0.0
    %1489 = vmatpush2.msra.mxu0 0.0
    %1490 = vmatprep.subr.mxu0 0.0
    %1491 = vmatpush2.msra.mxu0 0.0
    %1492 = vmatprep.subr.mxu0 0.0
    %1493 = vmatpush2.msra.mxu0 0.0
    %1494 = vmatprep.subr.mxu0 0.0
    %1495 = vmatpush2.msra.mxu0 0.0
    %1496 = vmatprep.mubr.f32.mxu0 0.0
    %1497 = vmatmul.mubr.f32.gmra.mxu0 %v1429
    %v1498 = vpop.f32.mrf.mxu0
    %v1499 = vadd.f32 0.0, %v1498
    %v1500 = vpop.f32.mrf.mxu0
    %1501 = vdwg.mxu0
    %v1502 = vadd.f32 %v1431, %v1499
    %v1503 = vmax.f32 %v1502, 0.0
    %v1504 = vsel %vm173, %v985, %v1503
    %v1505 = vsel %vm173, %v1059, %v1429
    %v1506 = vsel %vm173, %v1133, %v1355
    %v1507 = vsel %vm173, %v1207, %v1281
    %v1508 = vsel %vm173, %v1281, %v1207
    %v1509 = vsel %vm173, %v1355, %v1133
    %v1510 = vsel %vm173, %v1429, %v1059
    %v1511 = vsel %vm173, %v1503, %v985
    %v1512 = vld [vmem:[#allocation2 + $0x210] sm:$0xff]
    %v1513 = vld [vmem:[#allocation2 + $0x218] sm:$0xff]
    %v1514 = vld [vmem:[#allocation2 + $0x220] sm:$0xff]
    %v1515 = vld [vmem:[#allocation2 + $0x228] sm:$0xff]
    %v1516 = vld [vmem:[#allocation2 + $0x230] sm:$0xff]
    %v1517 = vld [vmem:[#allocation2 + $0x238] sm:$0xff]
    %v1518 = vld [vmem:[#allocation2 + $0x240] sm:$0xff]
    %v1519 = vld [vmem:[#allocation2 + $0x248] sm:$0xff]
    %v1520 = vld [vmem:[#allocation2 + $0x250] sm:$0xff]
    %v1521 = vld [vmem:[#allocation2 + $0x258] sm:$0xff]
    %v1522 = vld [vmem:[#allocation2 + $0x260] sm:$0xff]
    %v1523 = vld [vmem:[#allocation2 + $0x268] sm:$0xff]
    %v1524 = vld [vmem:[#allocation2 + $0x270] sm:$0xff]
    %v1525 = vld [vmem:[#allocation2 + $0x278] sm:$0xff]
    %v1526 = vld [vmem:[#allocation2 + $0x280] sm:$0xff]
    %v1527 = vld [vmem:[#allocation2 + $0x288] sm:$0xff]
    %v1528 = vld [vmem:[#allocation2 + $0x290] sm:$0xff]
    %v1529 = vld [vmem:[#allocation2 + $0x298] sm:$0xff]
    %v1530 = vld [vmem:[#allocation2 + $0x2a0] sm:$0xff]
    %v1531 = vld [vmem:[#allocation2 + $0x2a8] sm:$0xff]
    %v1532 = vld [vmem:[#allocation2 + $0x2b0] sm:$0xff]
    %v1533 = vld [vmem:[#allocation2 + $0x2b8] sm:$0xff]
    %v1534 = vld [vmem:[#allocation2 + $0x2c0] sm:$0xff]
    %v1535 = vld [vmem:[#allocation2 + $0x2c8] sm:$0xff]
    %v1536 = vld [vmem:[#allocation2 + $0x2d0] sm:$0xff]
    %v1537 = vld [vmem:[#allocation2 + $0x2d8] sm:$0xff]
    %v1538 = vld [vmem:[#allocation2 + $0x2e0] sm:$0xff]
    %v1539 = vld [vmem:[#allocation2 + $0x2e8] sm:$0xff]
    %v1540 = vld [vmem:[#allocation2 + $0x2f0] sm:$0xff]
    %v1541 = vld [vmem:[#allocation2 + $0x2f8] sm:$0xff]
    %v1542 = vld [vmem:[#allocation2 + $0x300] sm:$0xff]
    %v1543 = vld [vmem:[#allocation2 + $0x308] sm:$0xff]
    %v1544 = vld [vmem:[#allocation2 + $0x310] sm:$0xff]
    %1545 = vmatprep.subr.mxu0 0.0
    %1546 = vmatpush1.msra.mxu0 %v1527
    %1547 = vmatprep.subr.mxu0 0.0
    %1548 = vmatpush1.msra.mxu0 %v1526
    %1549 = vmatprep.subr.mxu0 0.0
    %1550 = vmatpush1.msra.mxu0 %v1525
    %1551 = vmatprep.subr.mxu0 0.0
    %1552 = vmatpush1.msra.mxu0 %v1524
    %1553 = vmatprep.subr.mxu0 0.0
    %1554 = vmatpush1.msra.mxu0 %v1523
    %1555 = vmatprep.subr.mxu0 0.0
    %1556 = vmatpush1.msra.mxu0 %v1522
    %1557 = vmatprep.subr.mxu0 0.0
    %1558 = vmatpush1.msra.mxu0 %v1521
    %1559 = vmatprep.subr.mxu0 0.0
    %1560 = vmatpush1.msra.mxu0 %v1520
    %1561 = vmatprep.subr.mxu0 0.0
    %1562 = vmatpush1.msra.mxu0 %v1519
    %1563 = vmatprep.subr.mxu0 0.0
    %1564 = vmatpush1.msra.mxu0 %v1518
    %1565 = vmatprep.subr.mxu0 0.0
    %1566 = vmatpush1.msra.mxu0 %v1517
    %1567 = vmatprep.subr.mxu0 0.0
    %1568 = vmatpush1.msra.mxu0 %v1516
    %1569 = vmatprep.subr.mxu0 0.0
    %1570 = vmatpush1.msra.mxu0 %v1515
    %1571 = vmatprep.subr.mxu0 0.0
    %1572 = vmatpush1.msra.mxu0 %v1514
    %1573 = vmatprep.subr.mxu0 0.0
    %1574 = vmatpush1.msra.mxu0 %v1513
    %1575 = vmatprep.subr.mxu0 0.0
    %1576 = vmatpush1.msra.mxu0 %v1512
    %1577 = vmatprep.subr.mxu0 0.0
    %1578 = vmatpush2.msra.mxu0 0.0
    %1579 = vmatprep.subr.mxu0 0.0
    %1580 = vmatpush2.msra.mxu0 0.0
    %1581 = vmatprep.subr.mxu0 0.0
    %1582 = vmatpush2.msra.mxu0 0.0
    %1583 = vmatprep.subr.mxu0 0.0
    %1584 = vmatpush2.msra.mxu0 0.0
    %1585 = vmatprep.subr.mxu0 0.0
    %1586 = vmatpush2.msra.mxu0 0.0
    %1587 = vmatprep.subr.mxu0 0.0
    %1588 = vmatpush2.msra.mxu0 0.0
    %1589 = vmatprep.subr.mxu0 0.0
    %1590 = vmatpush2.msra.mxu0 0.0
    %1591 = vmatprep.subr.mxu0 0.0
    %1592 = vmatpush2.msra.mxu0 0.0
    %1593 = vmatprep.subr.mxu0 0.0
    %1594 = vmatpush2.msra.mxu0 0.0
    %1595 = vmatprep.subr.mxu0 0.0
    %1596 = vmatpush2.msra.mxu0 0.0
    %1597 = vmatprep.subr.mxu0 0.0
    %1598 = vmatpush2.msra.mxu0 0.0
    %1599 = vmatprep.subr.mxu0 0.0
    %1600 = vmatpush2.msra.mxu0 0.0
    %1601 = vmatprep.subr.mxu0 0.0
    %1602 = vmatpush2.msra.mxu0 0.0
    %1603 = vmatprep.subr.mxu0 0.0
    %1604 = vmatpush2.msra.mxu0 0.0
    %1605 = vmatprep.subr.mxu0 0.0
    %1606 = vmatpush2.msra.mxu0 0.0
    %1607 = vmatprep.subr.mxu0 0.0
    %1608 = vmatpush2.msra.mxu0 0.0
    %1609 = vmatprep.mubr.f32.mxu0 0.0
    %1610 = vmatmul.mubr.f32.gmra.mxu0 %v1504
    %v1611 = vpop.f32.mrf.mxu0
    %v1612 = vadd.f32 0.0, %v1611
    %v1613 = vpop.f32.mrf.mxu0
    %1614 = vmatprep.mubr.f32.mxu0 0.0
    %1615 = vmatmul.mubr.f32.gmra.mxu0 %v1505
    %v1616 = vpop.f32.mrf.mxu0
    %v1617 = vadd.f32 0.0, %v1616
    %v1618 = vpop.f32.mrf.mxu0
    %1619 = vmatprep.mubr.f32.mxu0 0.0
    %1620 = vmatmul.mubr.f32.gmra.mxu0 %v1506
    %v1621 = vpop.f32.mrf.mxu0
    %v1622 = vadd.f32 0.0, %v1621
    %v1623 = vpop.f32.mrf.mxu0
    %1624 = vmatprep.mubr.f32.mxu0 0.0
    %1625 = vmatmul.mubr.f32.gmra.mxu0 %v1507
    %v1626 = vpop.f32.mrf.mxu0
    %v1627 = vadd.f32 0.0, %v1626
    %v1628 = vpop.f32.mrf.mxu0
    %1629 = vmatprep.mubr.f32.mxu0 0.0
    %1630 = vmatmul.mubr.f32.gmra.mxu0 %v1508
    %v1631 = vpop.f32.mrf.mxu0
    %v1632 = vadd.f32 0.0, %v1631
    %v1633 = vpop.f32.mrf.mxu0
    %1634 = vmatprep.mubr.f32.mxu0 0.0
    %1635 = vmatmul.mubr.f32.gmra.mxu0 %v1509
    %v1636 = vpop.f32.mrf.mxu0
    %v1637 = vadd.f32 0.0, %v1636
    %v1638 = vpop.f32.mrf.mxu0
    %1639 = vmatprep.mubr.f32.mxu0 0.0
    %1640 = vmatmul.mubr.f32.gmra.mxu0 %v1510
    %v1641 = vpop.f32.mrf.mxu0
    %v1642 = vadd.f32 0.0, %v1641
    %v1643 = vpop.f32.mrf.mxu0
    %1644 = vmatprep.mubr.f32.mxu0 0.0
    %1645 = vmatmul.mubr.f32.gmra.mxu0 %v1511
    %v1646 = vpop.f32.mrf.mxu0
    %v1647 = vadd.f32 0.0, %v1646
    %v1648 = vpop.f32.mrf.mxu0
    %1649 = vdwg.mxu0
    %v1650 = vadd.f32 %v1612, %v1544
    %1651 = vmatprep.subr.mxu0 0.0
    %1652 = vmatpush1.msra.mxu0 %v1543
    %1653 = vmatprep.subr.mxu0 0.0
    %1654 = vmatpush1.msra.mxu0 %v1542
    %1655 = vmatprep.subr.mxu0 0.0
    %1656 = vmatpush1.msra.mxu0 %v1541
    %1657 = vmatprep.subr.mxu0 0.0
    %1658 = vmatpush1.msra.mxu0 %v1540
    %1659 = vmatprep.subr.mxu0 0.0
    %1660 = vmatpush1.msra.mxu0 %v1539
    %1661 = vmatprep.subr.mxu0 0.0
    %1662 = vmatpush1.msra.mxu0 %v1538
    %1663 = vmatprep.subr.mxu0 0.0
    %1664 = vmatpush1.msra.mxu0 %v1537
    %1665 = vmatprep.subr.mxu0 0.0
    %1666 = vmatpush1.msra.mxu0 %v1536
    %1667 = vmatprep.subr.mxu0 0.0
    %1668 = vmatpush1.msra.mxu0 %v1535
    %1669 = vmatprep.subr.mxu0 0.0
    %1670 = vmatpush1.msra.mxu0 %v1534
    %1671 = vmatprep.subr.mxu0 0.0
    %1672 = vmatpush1.msra.mxu0 %v1533
    %1673 = vmatprep.subr.mxu0 0.0
    %1674 = vmatpush1.msra.mxu0 %v1532
    %1675 = vmatprep.subr.mxu0 0.0
    %1676 = vmatpush1.msra.mxu0 %v1531
    %1677 = vmatprep.subr.mxu0 0.0
    %1678 = vmatpush1.msra.mxu0 %v1530
    %1679 = vmatprep.subr.mxu0 0.0
    %1680 = vmatpush1.msra.mxu0 %v1529
    %1681 = vmatprep.subr.mxu0 0.0
    %1682 = vmatpush1.msra.mxu0 %v1528
    %1683 = vmatprep.subr.mxu0 0.0
    %1684 = vmatpush2.msra.mxu0 0.0
    %1685 = vmatprep.subr.mxu0 0.0
    %1686 = vmatpush2.msra.mxu0 0.0
    %1687 = vmatprep.subr.mxu0 0.0
    %1688 = vmatpush2.msra.mxu0 0.0
    %1689 = vmatprep.subr.mxu0 0.0
    %1690 = vmatpush2.msra.mxu0 0.0
    %1691 = vmatprep.subr.mxu0 0.0
    %1692 = vmatpush2.msra.mxu0 0.0
    %1693 = vmatprep.subr.mxu0 0.0
    %1694 = vmatpush2.msra.mxu0 0.0
    %1695 = vmatprep.subr.mxu0 0.0
    %1696 = vmatpush2.msra.mxu0 0.0
    %1697 = vmatprep.subr.mxu0 0.0
    %1698 = vmatpush2.msra.mxu0 0.0
    %1699 = vmatprep.subr.mxu0 0.0
    %1700 = vmatpush2.msra.mxu0 0.0
    %1701 = vmatprep.subr.mxu0 0.0
    %1702 = vmatpush2.msra.mxu0 0.0
    %1703 = vmatprep.subr.mxu0 0.0
    %1704 = vmatpush2.msra.mxu0 0.0
    %1705 = vmatprep.subr.mxu0 0.0
    %1706 = vmatpush2.msra.mxu0 0.0
    %1707 = vmatprep.subr.mxu0 0.0
    %1708 = vmatpush2.msra.mxu0 0.0
    %1709 = vmatprep.subr.mxu0 0.0
    %1710 = vmatpush2.msra.mxu0 0.0
    %1711 = vmatprep.subr.mxu0 0.0
    %1712 = vmatpush2.msra.mxu0 0.0
    %1713 = vmatprep.subr.mxu0 0.0
    %1714 = vmatpush2.msra.mxu0 0.0
    %1715 = vmatprep.mubr.f32.mxu0 0.0
    %1716 = vmatmul.mubr.f32.gmra.mxu0 0.0
    %v1717 = vpop.f32.mrf.mxu0
    %v1718 = vadd.f32 0.0, %v1717
    %v1719 = vpop.f32.mrf.mxu0
    %1720 = vdwg.mxu0
    %v1721 = vadd.f32 %v1650, %v1718
    %v1722 = vmax.f32 %v1721, 0.0
    %v1723 = vadd.f32 %v1617, %v1544
    %1724 = vmatprep.subr.mxu0 0.0
    %1725 = vmatpush1.msra.mxu0 %v1543
    %1726 = vmatprep.subr.mxu0 0.0
    %1727 = vmatpush1.msra.mxu0 %v1542
    %1728 = vmatprep.subr.mxu0 0.0
    %1729 = vmatpush1.msra.mxu0 %v1541
    %1730 = vmatprep.subr.mxu0 0.0
    %1731 = vmatpush1.msra.mxu0 %v1540
    %1732 = vmatprep.subr.mxu0 0.0
    %1733 = vmatpush1.msra.mxu0 %v1539
    %1734 = vmatprep.subr.mxu0 0.0
    %1735 = vmatpush1.msra.mxu0 %v1538
    %1736 = vmatprep.subr.mxu0 0.0
    %1737 = vmatpush1.msra.mxu0 %v1537
    %1738 = vmatprep.subr.mxu0 0.0
    %1739 = vmatpush1.msra.mxu0 %v1536
    %1740 = vmatprep.subr.mxu0 0.0
    %1741 = vmatpush1.msra.mxu0 %v1535
    %1742 = vmatprep.subr.mxu0 0.0
    %1743 = vmatpush1.msra.mxu0 %v1534
    %1744 = vmatprep.subr.mxu0 0.0
    %1745 = vmatpush1.msra.mxu0 %v1533
    %1746 = vmatprep.subr.mxu0 0.0
    %1747 = vmatpush1.msra.mxu0 %v1532
    %1748 = vmatprep.subr.mxu0 0.0
    %1749 = vmatpush1.msra.mxu0 %v1531
    %1750 = vmatprep.subr.mxu0 0.0
    %1751 = vmatpush1.msra.mxu0 %v1530
    %1752 = vmatprep.subr.mxu0 0.0
    %1753 = vmatpush1.msra.mxu0 %v1529
    %1754 = vmatprep.subr.mxu0 0.0
    %1755 = vmatpush1.msra.mxu0 %v1528
    %1756 = vmatprep.subr.mxu0 0.0
    %1757 = vmatpush2.msra.mxu0 0.0
    %1758 = vmatprep.subr.mxu0 0.0
    %1759 = vmatpush2.msra.mxu0 0.0
    %1760 = vmatprep.subr.mxu0 0.0
    %1761 = vmatpush2.msra.mxu0 0.0
    %1762 = vmatprep.subr.mxu0 0.0
    %1763 = vmatpush2.msra.mxu0 0.0
    %1764 = vmatprep.subr.mxu0 0.0
    %1765 = vmatpush2.msra.mxu0 0.0
    %1766 = vmatprep.subr.mxu0 0.0
    %1767 = vmatpush2.msra.mxu0 0.0
    %1768 = vmatprep.subr.mxu0 0.0
    %1769 = vmatpush2.msra.mxu0 0.0
    %1770 = vmatprep.subr.mxu0 0.0
    %1771 = vmatpush2.msra.mxu0 0.0
    %1772 = vmatprep.subr.mxu0 0.0
    %1773 = vmatpush2.msra.mxu0 0.0
    %1774 = vmatprep.subr.mxu0 0.0
    %1775 = vmatpush2.msra.mxu0 0.0
    %1776 = vmatprep.subr.mxu0 0.0
    %1777 = vmatpush2.msra.mxu0 0.0
    %1778 = vmatprep.subr.mxu0 0.0
    %1779 = vmatpush2.msra.mxu0 0.0
    %1780 = vmatprep.subr.mxu0 0.0
    %1781 = vmatpush2.msra.mxu0 0.0
    %1782 = vmatprep.subr.mxu0 0.0
    %1783 = vmatpush2.msra.mxu0 0.0
    %1784 = vmatprep.subr.mxu0 0.0
    %1785 = vmatpush2.msra.mxu0 0.0
    %1786 = vmatprep.subr.mxu0 0.0
    %1787 = vmatpush2.msra.mxu0 0.0
    %1788 = vmatprep.mubr.f32.mxu0 0.0
    %1789 = vmatmul.mubr.f32.gmra.mxu0 %v1722
    %v1790 = vpop.f32.mrf.mxu0
    %v1791 = vadd.f32 0.0, %v1790
    %v1792 = vpop.f32.mrf.mxu0
    %1793 = vdwg.mxu0
    %v1794 = vadd.f32 %v1723, %v1791
    %v1795 = vmax.f32 %v1794, 0.0
    %v1796 = vadd.f32 %v1622, %v1544
    %1797 = vmatprep.subr.mxu0 0.0
    %1798 = vmatpush1.msra.mxu0 %v1543
    %1799 = vmatprep.subr.mxu0 0.0
    %1800 = vmatpush1.msra.mxu0 %v1542
    %1801 = vmatprep.subr.mxu0 0.0
    %1802 = vmatpush1.msra.mxu0 %v1541
    %1803 = vmatprep.subr.mxu0 0.0
    %1804 = vmatpush1.msra.mxu0 %v1540
    %1805 = vmatprep.subr.mxu0 0.0
    %1806 = vmatpush1.msra.mxu0 %v1539
    %1807 = vmatprep.subr.mxu0 0.0
    %1808 = vmatpush1.msra.mxu0 %v1538
    %1809 = vmatprep.subr.mxu0 0.0
    %1810 = vmatpush1.msra.mxu0 %v1537
    %1811 = vmatprep.subr.mxu0 0.0
    %1812 = vmatpush1.msra.mxu0 %v1536
    %1813 = vmatprep.subr.mxu0 0.0
    %1814 = vmatpush1.msra.mxu0 %v1535
    %1815 = vmatprep.subr.mxu0 0.0
    %1816 = vmatpush1.msra.mxu0 %v1534
    %1817 = vmatprep.subr.mxu0 0.0
    %1818 = vmatpush1.msra.mxu0 %v1533
    %1819 = vmatprep.subr.mxu0 0.0
    %1820 = vmatpush1.msra.mxu0 %v1532
    %1821 = vmatprep.subr.mxu0 0.0
    %1822 = vmatpush1.msra.mxu0 %v1531
    %1823 = vmatprep.subr.mxu0 0.0
    %1824 = vmatpush1.msra.mxu0 %v1530
    %1825 = vmatprep.subr.mxu0 0.0
    %1826 = vmatpush1.msra.mxu0 %v1529
    %1827 = vmatprep.subr.mxu0 0.0
    %1828 = vmatpush1.msra.mxu0 %v1528
    %1829 = vmatprep.subr.mxu0 0.0
    %1830 = vmatpush2.msra.mxu0 0.0
    %1831 = vmatprep.subr.mxu0 0.0
    %1832 = vmatpush2.msra.mxu0 0.0
    %1833 = vmatprep.subr.mxu0 0.0
    %1834 = vmatpush2.msra.mxu0 0.0
    %1835 = vmatprep.subr.mxu0 0.0
    %1836 = vmatpush2.msra.mxu0 0.0
    %1837 = vmatprep.subr.mxu0 0.0
    %1838 = vmatpush2.msra.mxu0 0.0
    %1839 = vmatprep.subr.mxu0 0.0
    %1840 = vmatpush2.msra.mxu0 0.0
    %1841 = vmatprep.subr.mxu0 0.0
    %1842 = vmatpush2.msra.mxu0 0.0
    %1843 = vmatprep.subr.mxu0 0.0
    %1844 = vmatpush2.msra.mxu0 0.0
    %1845 = vmatprep.subr.mxu0 0.0
    %1846 = vmatpush2.msra.mxu0 0.0
    %1847 = vmatprep.subr.mxu0 0.0
    %1848 = vmatpush2.msra.mxu0 0.0
    %1849 = vmatprep.subr.mxu0 0.0
    %1850 = vmatpush2.msra.mxu0 0.0
    %1851 = vmatprep.subr.mxu0 0.0
    %1852 = vmatpush2.msra.mxu0 0.0
    %1853 = vmatprep.subr.mxu0 0.0
    %1854 = vmatpush2.msra.mxu0 0.0
    %1855 = vmatprep.subr.mxu0 0.0
    %1856 = vmatpush2.msra.mxu0 0.0
    %1857 = vmatprep.subr.mxu0 0.0
    %1858 = vmatpush2.msra.mxu0 0.0
    %1859 = vmatprep.subr.mxu0 0.0
    %1860 = vmatpush2.msra.mxu0 0.0
    %1861 = vmatprep.mubr.f32.mxu0 0.0
    %1862 = vmatmul.mubr.f32.gmra.mxu0 %v1795
    %v1863 = vpop.f32.mrf.mxu0
    %v1864 = vadd.f32 0.0, %v1863
    %v1865 = vpop.f32.mrf.mxu0
    %1866 = vdwg.mxu0
    %v1867 = vadd.f32 %v1796, %v1864
    %v1868 = vmax.f32 %v1867, 0.0
    %v1869 = vadd.f32 %v1627, %v1544
    %1870 = vmatprep.subr.mxu0 0.0
    %1871 = vmatpush1.msra.mxu0 %v1543
    %1872 = vmatprep.subr.mxu0 0.0
    %1873 = vmatpush1.msra.mxu0 %v1542
    %1874 = vmatprep.subr.mxu0 0.0
    %1875 = vmatpush1.msra.mxu0 %v1541
    %1876 = vmatprep.subr.mxu0 0.0
    %1877 = vmatpush1.msra.mxu0 %v1540
    %1878 = vmatprep.subr.mxu0 0.0
    %1879 = vmatpush1.msra.mxu0 %v1539
    %1880 = vmatprep.subr.mxu0 0.0
    %1881 = vmatpush1.msra.mxu0 %v1538
    %1882 = vmatprep.subr.mxu0 0.0
    %1883 = vmatpush1.msra.mxu0 %v1537
    %1884 = vmatprep.subr.mxu0 0.0
    %1885 = vmatpush1.msra.mxu0 %v1536
    %1886 = vmatprep.subr.mxu0 0.0
    %1887 = vmatpush1.msra.mxu0 %v1535
    %1888 = vmatprep.subr.mxu0 0.0
    %1889 = vmatpush1.msra.mxu0 %v1534
    %1890 = vmatprep.subr.mxu0 0.0
    %1891 = vmatpush1.msra.mxu0 %v1533
    %1892 = vmatprep.subr.mxu0 0.0
    %1893 = vmatpush1.msra.mxu0 %v1532
    %1894 = vmatprep.subr.mxu0 0.0
    %1895 = vmatpush1.msra.mxu0 %v1531
    %1896 = vmatprep.subr.mxu0 0.0
    %1897 = vmatpush1.msra.mxu0 %v1530
    %1898 = vmatprep.subr.mxu0 0.0
    %1899 = vmatpush1.msra.mxu0 %v1529
    %1900 = vmatprep.subr.mxu0 0.0
    %1901 = vmatpush1.msra.mxu0 %v1528
    %1902 = vmatprep.subr.mxu0 0.0
    %1903 = vmatpush2.msra.mxu0 0.0
    %1904 = vmatprep.subr.mxu0 0.0
    %1905 = vmatpush2.msra.mxu0 0.0
    %1906 = vmatprep.subr.mxu0 0.0
    %1907 = vmatpush2.msra.mxu0 0.0
    %1908 = vmatprep.subr.mxu0 0.0
    %1909 = vmatpush2.msra.mxu0 0.0
    %1910 = vmatprep.subr.mxu0 0.0
    %1911 = vmatpush2.msra.mxu0 0.0
    %1912 = vmatprep.subr.mxu0 0.0
    %1913 = vmatpush2.msra.mxu0 0.0
    %1914 = vmatprep.subr.mxu0 0.0
    %1915 = vmatpush2.msra.mxu0 0.0
    %1916 = vmatprep.subr.mxu0 0.0
    %1917 = vmatpush2.msra.mxu0 0.0
    %1918 = vmatprep.subr.mxu0 0.0
    %1919 = vmatpush2.msra.mxu0 0.0
    %1920 = vmatprep.subr.mxu0 0.0
    %1921 = vmatpush2.msra.mxu0 0.0
    %1922 = vmatprep.subr.mxu0 0.0
    %1923 = vmatpush2.msra.mxu0 0.0
    %1924 = vmatprep.subr.mxu0 0.0
    %1925 = vmatpush2.msra.mxu0 0.0
    %1926 = vmatprep.subr.mxu0 0.0
    %1927 = vmatpush2.msra.mxu0 0.0
    %1928 = vmatprep.subr.mxu0 0.0
    %1929 = vmatpush2.msra.mxu0 0.0
    %1930 = vmatprep.subr.mxu0 0.0
    %1931 = vmatpush2.msra.mxu0 0.0
    %1932 = vmatprep.subr.mxu0 0.0
    %1933 = vmatpush2.msra.mxu0 0.0
    %1934 = vmatprep.mubr.f32.mxu0 0.0
    %1935 = vmatmul.mubr.f32.gmra.mxu0 %v1868
    %v1936 = vpop.f32.mrf.mxu0
    %v1937 = vadd.f32 0.0, %v1936
    %v1938 = vpop.f32.mrf.mxu0
    %1939 = vdwg.mxu0
    %v1940 = vadd.f32 %v1869, %v1937
    %v1941 = vmax.f32 %v1940, 0.0
    %v1942 = vadd.f32 %v1632, %v1544
    %1943 = vmatprep.subr.mxu0 0.0
    %1944 = vmatpush1.msra.mxu0 %v1543
    %1945 = vmatprep.subr.mxu0 0.0
    %1946 = vmatpush1.msra.mxu0 %v1542
    %1947 = vmatprep.subr.mxu0 0.0
    %1948 = vmatpush1.msra.mxu0 %v1541
    %1949 = vmatprep.subr.mxu0 0.0
    %1950 = vmatpush1.msra.mxu0 %v1540
    %1951 = vmatprep.subr.mxu0 0.0
    %1952 = vmatpush1.msra.mxu0 %v1539
    %1953 = vmatprep.subr.mxu0 0.0
    %1954 = vmatpush1.msra.mxu0 %v1538
    %1955 = vmatprep.subr.mxu0 0.0
    %1956 = vmatpush1.msra.mxu0 %v1537
    %1957 = vmatprep.subr.mxu0 0.0
    %1958 = vmatpush1.msra.mxu0 %v1536
    %1959 = vmatprep.subr.mxu0 0.0
    %1960 = vmatpush1.msra.mxu0 %v1535
    %1961 = vmatprep.subr.mxu0 0.0
    %1962 = vmatpush1.msra.mxu0 %v1534
    %1963 = vmatprep.subr.mxu0 0.0
    %1964 = vmatpush1.msra.mxu0 %v1533
    %1965 = vmatprep.subr.mxu0 0.0
    %1966 = vmatpush1.msra.mxu0 %v1532
    %1967 = vmatprep.subr.mxu0 0.0
    %1968 = vmatpush1.msra.mxu0 %v1531
    %1969 = vmatprep.subr.mxu0 0.0
    %1970 = vmatpush1.msra.mxu0 %v1530
    %1971 = vmatprep.subr.mxu0 0.0
    %1972 = vmatpush1.msra.mxu0 %v1529
    %1973 = vmatprep.subr.mxu0 0.0
    %1974 = vmatpush1.msra.mxu0 %v1528
    %1975 = vmatprep.subr.mxu0 0.0
    %1976 = vmatpush2.msra.mxu0 0.0
    %1977 = vmatprep.subr.mxu0 0.0
    %1978 = vmatpush2.msra.mxu0 0.0
    %1979 = vmatprep.subr.mxu0 0.0
    %1980 = vmatpush2.msra.mxu0 0.0
    %1981 = vmatprep.subr.mxu0 0.0
    %1982 = vmatpush2.msra.mxu0 0.0
    %1983 = vmatprep.subr.mxu0 0.0
    %1984 = vmatpush2.msra.mxu0 0.0
    %1985 = vmatprep.subr.mxu0 0.0
    %1986 = vmatpush2.msra.mxu0 0.0
    %1987 = vmatprep.subr.mxu0 0.0
    %1988 = vmatpush2.msra.mxu0 0.0
    %1989 = vmatprep.subr.mxu0 0.0
    %1990 = vmatpush2.msra.mxu0 0.0
    %1991 = vmatprep.subr.mxu0 0.0
    %1992 = vmatpush2.msra.mxu0 0.0
    %1993 = vmatprep.subr.mxu0 0.0
    %1994 = vmatpush2.msra.mxu0 0.0
    %1995 = vmatprep.subr.mxu0 0.0
    %1996 = vmatpush2.msra.mxu0 0.0
    %1997 = vmatprep.subr.mxu0 0.0
    %1998 = vmatpush2.msra.mxu0 0.0
    %1999 = vmatprep.subr.mxu0 0.0
    %2000 = vmatpush2.msra.mxu0 0.0
    %2001 = vmatprep.subr.mxu0 0.0
    %2002 = vmatpush2.msra.mxu0 0.0
    %2003 = vmatprep.subr.mxu0 0.0
    %2004 = vmatpush2.msra.mxu0 0.0
    %2005 = vmatprep.subr.mxu0 0.0
    %2006 = vmatpush2.msra.mxu0 0.0
    %2007 = vmatprep.mubr.f32.mxu0 0.0
    %2008 = vmatmul.mubr.f32.gmra.mxu0 %v1941
    %v2009 = vpop.f32.mrf.mxu0
    %v2010 = vadd.f32 0.0, %v2009
    %v2011 = vpop.f32.mrf.mxu0
    %2012 = vdwg.mxu0
    %v2013 = vadd.f32 %v1942, %v2010
    %v2014 = vmax.f32 %v2013, 0.0
    %v2015 = vadd.f32 %v1637, %v1544
    %2016 = vmatprep.subr.mxu0 0.0
    %2017 = vmatpush1.msra.mxu0 %v1543
    %2018 = vmatprep.subr.mxu0 0.0
    %2019 = vmatpush1.msra.mxu0 %v1542
    %2020 = vmatprep.subr.mxu0 0.0
    %2021 = vmatpush1.msra.mxu0 %v1541
    %2022 = vmatprep.subr.mxu0 0.0
    %2023 = vmatpush1.msra.mxu0 %v1540
    %2024 = vmatprep.subr.mxu0 0.0
    %2025 = vmatpush1.msra.mxu0 %v1539
    %2026 = vmatprep.subr.mxu0 0.0
    %2027 = vmatpush1.msra.mxu0 %v1538
    %2028 = vmatprep.subr.mxu0 0.0
    %2029 = vmatpush1.msra.mxu0 %v1537
    %2030 = vmatprep.subr.mxu0 0.0
    %2031 = vmatpush1.msra.mxu0 %v1536
    %2032 = vmatprep.subr.mxu0 0.0
    %2033 = vmatpush1.msra.mxu0 %v1535
    %2034 = vmatprep.subr.mxu0 0.0
    %2035 = vmatpush1.msra.mxu0 %v1534
    %2036 = vmatprep.subr.mxu0 0.0
    %2037 = vmatpush1.msra.mxu0 %v1533
    %2038 = vmatprep.subr.mxu0 0.0
    %2039 = vmatpush1.msra.mxu0 %v1532
    %2040 = vmatprep.subr.mxu0 0.0
    %2041 = vmatpush1.msra.mxu0 %v1531
    %2042 = vmatprep.subr.mxu0 0.0
    %2043 = vmatpush1.msra.mxu0 %v1530
    %2044 = vmatprep.subr.mxu0 0.0
    %2045 = vmatpush1.msra.mxu0 %v1529
    %2046 = vmatprep.subr.mxu0 0.0
    %2047 = vmatpush1.msra.mxu0 %v1528
    %2048 = vmatprep.subr.mxu0 0.0
    %2049 = vmatpush2.msra.mxu0 0.0
    %2050 = vmatprep.subr.mxu0 0.0
    %2051 = vmatpush2.msra.mxu0 0.0
    %2052 = vmatprep.subr.mxu0 0.0
    %2053 = vmatpush2.msra.mxu0 0.0
    %2054 = vmatprep.subr.mxu0 0.0
    %2055 = vmatpush2.msra.mxu0 0.0
    %2056 = vmatprep.subr.mxu0 0.0
    %2057 = vmatpush2.msra.mxu0 0.0
    %2058 = vmatprep.subr.mxu0 0.0
    %2059 = vmatpush2.msra.mxu0 0.0
    %2060 = vmatprep.subr.mxu0 0.0
    %2061 = vmatpush2.msra.mxu0 0.0
    %2062 = vmatprep.subr.mxu0 0.0
    %2063 = vmatpush2.msra.mxu0 0.0
    %2064 = vmatprep.subr.mxu0 0.0
    %2065 = vmatpush2.msra.mxu0 0.0
    %2066 = vmatprep.subr.mxu0 0.0
    %2067 = vmatpush2.msra.mxu0 0.0
    %2068 = vmatprep.subr.mxu0 0.0
    %2069 = vmatpush2.msra.mxu0 0.0
    %2070 = vmatprep.subr.mxu0 0.0
    %2071 = vmatpush2.msra.mxu0 0.0
    %2072 = vmatprep.subr.mxu0 0.0
    %2073 = vmatpush2.msra.mxu0 0.0
    %2074 = vmatprep.subr.mxu0 0.0
    %2075 = vmatpush2.msra.mxu0 0.0
    %2076 = vmatprep.subr.mxu0 0.0
    %2077 = vmatpush2.msra.mxu0 0.0
    %2078 = vmatprep.subr.mxu0 0.0
    %2079 = vmatpush2.msra.mxu0 0.0
    %2080 = vmatprep.mubr.f32.mxu0 0.0
    %2081 = vmatmul.mubr.f32.gmra.mxu0 %v2014
    %v2082 = vpop.f32.mrf.mxu0
    %v2083 = vadd.f32 0.0, %v2082
    %v2084 = vpop.f32.mrf.mxu0
    %2085 = vdwg.mxu0
    %v2086 = vadd.f32 %v2015, %v2083
    %v2087 = vmax.f32 %v2086, 0.0
    %v2088 = vadd.f32 %v1642, %v1544
    %2089 = vmatprep.subr.mxu0 0.0
    %2090 = vmatpush1.msra.mxu0 %v1543
    %2091 = vmatprep.subr.mxu0 0.0
    %2092 = vmatpush1.msra.mxu0 %v1542
    %2093 = vmatprep.subr.mxu0 0.0
    %2094 = vmatpush1.msra.mxu0 %v1541
    %2095 = vmatprep.subr.mxu0 0.0
    %2096 = vmatpush1.msra.mxu0 %v1540
    %2097 = vmatprep.subr.mxu0 0.0
    %2098 = vmatpush1.msra.mxu0 %v1539
    %2099 = vmatprep.subr.mxu0 0.0
    %2100 = vmatpush1.msra.mxu0 %v1538
    %2101 = vmatprep.subr.mxu0 0.0
    %2102 = vmatpush1.msra.mxu0 %v1537
    %2103 = vmatprep.subr.mxu0 0.0
    %2104 = vmatpush1.msra.mxu0 %v1536
    %2105 = vmatprep.subr.mxu0 0.0
    %2106 = vmatpush1.msra.mxu0 %v1535
    %2107 = vmatprep.subr.mxu0 0.0
    %2108 = vmatpush1.msra.mxu0 %v1534
    %2109 = vmatprep.subr.mxu0 0.0
    %2110 = vmatpush1.msra.mxu0 %v1533
    %2111 = vmatprep.subr.mxu0 0.0
    %2112 = vmatpush1.msra.mxu0 %v1532
    %2113 = vmatprep.subr.mxu0 0.0
    %2114 = vmatpush1.msra.mxu0 %v1531
    %2115 = vmatprep.subr.mxu0 0.0
    %2116 = vmatpush1.msra.mxu0 %v1530
    %2117 = vmatprep.subr.mxu0 0.0
    %2118 = vmatpush1.msra.mxu0 %v1529
    %2119 = vmatprep.subr.mxu0 0.0
    %2120 = vmatpush1.msra.mxu0 %v1528
    %2121 = vmatprep.subr.mxu0 0.0
    %2122 = vmatpush2.msra.mxu0 0.0
    %2123 = vmatprep.subr.mxu0 0.0
    %2124 = vmatpush2.msra.mxu0 0.0
    %2125 = vmatprep.subr.mxu0 0.0
    %2126 = vmatpush2.msra.mxu0 0.0
    %2127 = vmatprep.subr.mxu0 0.0
    %2128 = vmatpush2.msra.mxu0 0.0
    %2129 = vmatprep.subr.mxu0 0.0
    %2130 = vmatpush2.msra.mxu0 0.0
    %2131 = vmatprep.subr.mxu0 0.0
    %2132 = vmatpush2.msra.mxu0 0.0
    %2133 = vmatprep.subr.mxu0 0.0
    %2134 = vmatpush2.msra.mxu0 0.0
    %2135 = vmatprep.subr.mxu0 0.0
    %2136 = vmatpush2.msra.mxu0 0.0
    %2137 = vmatprep.subr.mxu0 0.0
    %2138 = vmatpush2.msra.mxu0 0.0
    %2139 = vmatprep.subr.mxu0 0.0
    %2140 = vmatpush2.msra.mxu0 0.0
    %2141 = vmatprep.subr.mxu0 0.0
    %2142 = vmatpush2.msra.mxu0 0.0
    %2143 = vmatprep.subr.mxu0 0.0
    %2144 = vmatpush2.msra.mxu0 0.0
    %2145 = vmatprep.subr.mxu0 0.0
    %2146 = vmatpush2.msra.mxu0 0.0
    %2147 = vmatprep.subr.mxu0 0.0
    %2148 = vmatpush2.msra.mxu0 0.0
    %2149 = vmatprep.subr.mxu0 0.0
    %2150 = vmatpush2.msra.mxu0 0.0
    %2151 = vmatprep.subr.mxu0 0.0
    %2152 = vmatpush2.msra.mxu0 0.0
    %2153 = vmatprep.mubr.f32.mxu0 0.0
    %2154 = vmatmul.mubr.f32.gmra.mxu0 %v2087
    %v2155 = vpop.f32.mrf.mxu0
    %v2156 = vadd.f32 0.0, %v2155
    %v2157 = vpop.f32.mrf.mxu0
    %2158 = vdwg.mxu0
    %v2159 = vadd.f32 %v2088, %v2156
    %v2160 = vmax.f32 %v2159, 0.0
    %v2161 = vadd.f32 %v1647, %v1544
    %2162 = vmatprep.subr.mxu0 0.0
    %2163 = vmatpush1.msra.mxu0 %v1543
    %2164 = vmatprep.subr.mxu0 0.0
    %2165 = vmatpush1.msra.mxu0 %v1542
    %2166 = vmatprep.subr.mxu0 0.0
    %2167 = vmatpush1.msra.mxu0 %v1541
    %2168 = vmatprep.subr.mxu0 0.0
    %2169 = vmatpush1.msra.mxu0 %v1540
    %2170 = vmatprep.subr.mxu0 0.0
    %2171 = vmatpush1.msra.mxu0 %v1539
    %2172 = vmatprep.subr.mxu0 0.0
    %2173 = vmatpush1.msra.mxu0 %v1538
    %2174 = vmatprep.subr.mxu0 0.0
    %2175 = vmatpush1.msra.mxu0 %v1537
    %2176 = vmatprep.subr.mxu0 0.0
    %2177 = vmatpush1.msra.mxu0 %v1536
    %2178 = vmatprep.subr.mxu0 0.0
    %2179 = vmatpush1.msra.mxu0 %v1535
    %2180 = vmatprep.subr.mxu0 0.0
    %2181 = vmatpush1.msra.mxu0 %v1534
    %2182 = vmatprep.subr.mxu0 0.0
    %2183 = vmatpush1.msra.mxu0 %v1533
    %2184 = vmatprep.subr.mxu0 0.0
    %2185 = vmatpush1.msra.mxu0 %v1532
    %2186 = vmatprep.subr.mxu0 0.0
    %2187 = vmatpush1.msra.mxu0 %v1531
    %2188 = vmatprep.subr.mxu0 0.0
    %2189 = vmatpush1.msra.mxu0 %v1530
    %2190 = vmatprep.subr.mxu0 0.0
    %2191 = vmatpush1.msra.mxu0 %v1529
    %2192 = vmatprep.subr.mxu0 0.0
    %2193 = vmatpush1.msra.mxu0 %v1528
    %2194 = vmatprep.subr.mxu0 0.0
    %2195 = vmatpush2.msra.mxu0 0.0
    %2196 = vmatprep.subr.mxu0 0.0
    %2197 = vmatpush2.msra.mxu0 0.0
    %2198 = vmatprep.subr.mxu0 0.0
    %2199 = vmatpush2.msra.mxu0 0.0
    %2200 = vmatprep.subr.mxu0 0.0
    %2201 = vmatpush2.msra.mxu0 0.0
    %2202 = vmatprep.subr.mxu0 0.0
    %2203 = vmatpush2.msra.mxu0 0.0
    %2204 = vmatprep.subr.mxu0 0.0
    %2205 = vmatpush2.msra.mxu0 0.0
    %2206 = vmatprep.subr.mxu0 0.0
    %2207 = vmatpush2.msra.mxu0 0.0
    %2208 = vmatprep.subr.mxu0 0.0
    %2209 = vmatpush2.msra.mxu0 0.0
    %2210 = vmatprep.subr.mxu0 0.0
    %2211 = vmatpush2.msra.mxu0 0.0
    %2212 = vmatprep.subr.mxu0 0.0
    %2213 = vmatpush2.msra.mxu0 0.0
    %2214 = vmatprep.subr.mxu0 0.0
    %2215 = vmatpush2.msra.mxu0 0.0
    %2216 = vmatprep.subr.mxu0 0.0
    %2217 = vmatpush2.msra.mxu0 0.0
    %2218 = vmatprep.subr.mxu0 0.0
    %2219 = vmatpush2.msra.mxu0 0.0
    %2220 = vmatprep.subr.mxu0 0.0
    %2221 = vmatpush2.msra.mxu0 0.0
    %2222 = vmatprep.subr.mxu0 0.0
    %2223 = vmatpush2.msra.mxu0 0.0
    %2224 = vmatprep.subr.mxu0 0.0
    %2225 = vmatpush2.msra.mxu0 0.0
    %2226 = vmatprep.mubr.f32.mxu0 0.0
    %2227 = vmatmul.mubr.f32.gmra.mxu0 %v2160
    %v2228 = vpop.f32.mrf.mxu0
    %v2229 = vadd.f32 0.0, %v2228
    %v2230 = vpop.f32.mrf.mxu0
    %2231 = vdwg.mxu0
    %v2232 = vadd.f32 %v2161, %v2229
    %v2233 = vmax.f32 %v2232, 0.0
    %v2234 = vld [vmem:[#allocation2 + $0x318] sm:$0xff]
    %v2235 = vld [vmem:[#allocation2 + $0x320] sm:$0xff]
    %v2236 = vld [vmem:[#allocation2 + $0x328] sm:$0xff]
    %v2237 = vld [vmem:[#allocation2 + $0x330] sm:$0xff]
    %v2238 = vld [vmem:[#allocation2 + $0x338] sm:$0xff]
    %v2239 = vld [vmem:[#allocation2 + $0x340] sm:$0xff]
    %v2240 = vld [vmem:[#allocation2 + $0x348] sm:$0xff]
    %v2241 = vld [vmem:[#allocation2 + $0x350] sm:$0xff]
    %v2242 = vld [vmem:[#allocation2 + $0x358] sm:$0xff]
    %v2243 = vld [vmem:[#allocation2 + $0x360] sm:$0xff]
    %v2244 = vld [vmem:[#allocation2 + $0x368] sm:$0xff]
    %v2245 = vld [vmem:[#allocation2 + $0x370] sm:$0xff]
    %v2246 = vld [vmem:[#allocation2 + $0x378] sm:$0xff]
    %v2247 = vld [vmem:[#allocation2 + $0x380] sm:$0xff]
    %v2248 = vld [vmem:[#allocation2 + $0x388] sm:$0xff]
    %v2249 = vld [vmem:[#allocation2 + $0x390] sm:$0xff]
    %v2250 = vld [vmem:[#allocation2 + $0x398] sm:$0xff]
    %v2251 = vld [vmem:[#allocation2 + $0x3a0] sm:$0xff]
    %v2252 = vld [vmem:[#allocation2 + $0x3a8] sm:$0xff]
    %v2253 = vld [vmem:[#allocation2 + $0x3b0] sm:$0xff]
    %v2254 = vld [vmem:[#allocation2 + $0x3b8] sm:$0xff]
    %v2255 = vld [vmem:[#allocation2 + $0x3c0] sm:$0xff]
    %v2256 = vld [vmem:[#allocation2 + $0x3c8] sm:$0xff]
    %v2257 = vld [vmem:[#allocation2 + $0x3d0] sm:$0xff]
    %v2258 = vld [vmem:[#allocation2 + $0x3d8] sm:$0xff]
    %v2259 = vld [vmem:[#allocation2 + $0x3e0] sm:$0xff]
    %v2260 = vld [vmem:[#allocation2 + $0x3e8] sm:$0xff]
    %v2261 = vld [vmem:[#allocation2 + $0x3f0] sm:$0xff]
    %v2262 = vld [vmem:[#allocation2 + $0x3f8] sm:$0xff]
    %v2263 = vld [vmem:[#allocation2 + $0x400] sm:$0xff]
    %v2264 = vld [vmem:[#allocation2 + $0x408] sm:$0xff]
    %v2265 = vld [vmem:[#allocation2 + $0x410] sm:$0xff]
    %v2266 = vld [vmem:[#allocation2 + $0x418] sm:$0xff]
    %2267 = vmatprep.subr.mxu0 0.0
    %2268 = vmatpush1.msra.mxu0 %v2249
    %2269 = vmatprep.subr.mxu0 0.0
    %2270 = vmatpush1.msra.mxu0 %v2248
    %2271 = vmatprep.subr.mxu0 0.0
    %2272 = vmatpush1.msra.mxu0 %v2247
    %2273 = vmatprep.subr.mxu0 0.0
    %2274 = vmatpush1.msra.mxu0 %v2246
    %2275 = vmatprep.subr.mxu0 0.0
    %2276 = vmatpush1.msra.mxu0 %v2245
    %2277 = vmatprep.subr.mxu0 0.0
    %2278 = vmatpush1.msra.mxu0 %v2244
    %2279 = vmatprep.subr.mxu0 0.0
    %2280 = vmatpush1.msra.mxu0 %v2243
    %2281 = vmatprep.subr.mxu0 0.0
    %2282 = vmatpush1.msra.mxu0 %v2242
    %2283 = vmatprep.subr.mxu0 0.0
    %2284 = vmatpush1.msra.mxu0 %v2241
    %2285 = vmatprep.subr.mxu0 0.0
    %2286 = vmatpush1.msra.mxu0 %v2240
    %2287 = vmatprep.subr.mxu0 0.0
    %2288 = vmatpush1.msra.mxu0 %v2239
    %2289 = vmatprep.subr.mxu0 0.0
    %2290 = vmatpush1.msra.mxu0 %v2238
    %2291 = vmatprep.subr.mxu0 0.0
    %2292 = vmatpush1.msra.mxu0 %v2237
    %2293 = vmatprep.subr.mxu0 0.0
    %2294 = vmatpush1.msra.mxu0 %v2236
    %2295 = vmatprep.subr.mxu0 0.0
    %2296 = vmatpush1.msra.mxu0 %v2235
    %2297 = vmatprep.subr.mxu0 0.0
    %2298 = vmatpush1.msra.mxu0 %v2234
    %2299 = vmatprep.subr.mxu0 0.0
    %2300 = vmatpush2.msra.mxu0 0.0
    %2301 = vmatprep.subr.mxu0 0.0
    %2302 = vmatpush2.msra.mxu0 0.0
    %2303 = vmatprep.subr.mxu0 0.0
    %2304 = vmatpush2.msra.mxu0 0.0
    %2305 = vmatprep.subr.mxu0 0.0
    %2306 = vmatpush2.msra.mxu0 0.0
    %2307 = vmatprep.subr.mxu0 0.0
    %2308 = vmatpush2.msra.mxu0 0.0
    %2309 = vmatprep.subr.mxu0 0.0
    %2310 = vmatpush2.msra.mxu0 0.0
    %2311 = vmatprep.subr.mxu0 0.0
    %2312 = vmatpush2.msra.mxu0 0.0
    %2313 = vmatprep.subr.mxu0 0.0
    %2314 = vmatpush2.msra.mxu0 0.0
    %2315 = vmatprep.subr.mxu0 0.0
    %2316 = vmatpush2.msra.mxu0 0.0
    %2317 = vmatprep.subr.mxu0 0.0
    %2318 = vmatpush2.msra.mxu0 0.0
    %2319 = vmatprep.subr.mxu0 0.0
    %2320 = vmatpush2.msra.mxu0 0.0
    %2321 = vmatprep.subr.mxu0 0.0
    %2322 = vmatpush2.msra.mxu0 0.0
    %2323 = vmatprep.subr.mxu0 0.0
    %2324 = vmatpush2.msra.mxu0 0.0
    %2325 = vmatprep.subr.mxu0 0.0
    %2326 = vmatpush2.msra.mxu0 0.0
    %2327 = vmatprep.subr.mxu0 0.0
    %2328 = vmatpush2.msra.mxu0 0.0
    %2329 = vmatprep.subr.mxu0 0.0
    %2330 = vmatpush2.msra.mxu0 0.0
    %2331 = vmatprep.mubr.f32.mxu0 0.0
    %2332 = vmatmul.mubr.f32.gmra.mxu0 %v1722
    %v2333 = vpop.f32.mrf.mxu0
    %v2334 = vadd.f32 0.0, %v2333
    %v2335 = vpop.f32.mrf.mxu0
    %2336 = vmatprep.mubr.f32.mxu0 0.0
    %2337 = vmatmul.mubr.f32.gmra.mxu0 %v1795
    %v2338 = vpop.f32.mrf.mxu0
    %v2339 = vadd.f32 0.0, %v2338
    %v2340 = vpop.f32.mrf.mxu0
    %2341 = vmatprep.mubr.f32.mxu0 0.0
    %2342 = vmatmul.mubr.f32.gmra.mxu0 %v1868
    %v2343 = vpop.f32.mrf.mxu0
    %v2344 = vadd.f32 0.0, %v2343
    %v2345 = vpop.f32.mrf.mxu0
    %2346 = vmatprep.mubr.f32.mxu0 0.0
    %2347 = vmatmul.mubr.f32.gmra.mxu0 %v1941
    %v2348 = vpop.f32.mrf.mxu0
    %v2349 = vadd.f32 0.0, %v2348
    %v2350 = vpop.f32.mrf.mxu0
    %2351 = vmatprep.mubr.f32.mxu0 0.0
    %2352 = vmatmul.mubr.f32.gmra.mxu0 %v2014
    %v2353 = vpop.f32.mrf.mxu0
    %v2354 = vadd.f32 0.0, %v2353
    %v2355 = vpop.f32.mrf.mxu0
    %2356 = vmatprep.mubr.f32.mxu0 0.0
    %2357 = vmatmul.mubr.f32.gmra.mxu0 %v2087
    %v2358 = vpop.f32.mrf.mxu0
    %v2359 = vadd.f32 0.0, %v2358
    %v2360 = vpop.f32.mrf.mxu0
    %2361 = vmatprep.mubr.f32.mxu0 0.0
    %2362 = vmatmul.mubr.f32.gmra.mxu0 %v2160
    %v2363 = vpop.f32.mrf.mxu0
    %v2364 = vadd.f32 0.0, %v2363
    %v2365 = vpop.f32.mrf.mxu0
    %2366 = vmatprep.mubr.f32.mxu0 0.0
    %2367 = vmatmul.mubr.f32.gmra.mxu0 %v2233
    %v2368 = vpop.f32.mrf.mxu0
    %v2369 = vadd.f32 0.0, %v2368
    %v2370 = vpop.f32.mrf.mxu0
    %2371 = vdwg.mxu0
    %v2372 = vadd.f32 %v2334, %v2266
    %2373 = vmatprep.subr.mxu0 0.0
    %2374 = vmatpush1.msra.mxu0 %v2265
    %2375 = vmatprep.subr.mxu0 0.0
    %2376 = vmatpush1.msra.mxu0 %v2264
    %2377 = vmatprep.subr.mxu0 0.0
    %2378 = vmatpush1.msra.mxu0 %v2263
    %2379 = vmatprep.subr.mxu0 0.0
    %2380 = vmatpush1.msra.mxu0 %v2262
    %2381 = vmatprep.subr.mxu0 0.0
    %2382 = vmatpush1.msra.mxu0 %v2261
    %2383 = vmatprep.subr.mxu0 0.0
    %2384 = vmatpush1.msra.mxu0 %v2260
    %2385 = vmatprep.subr.mxu0 0.0
    %2386 = vmatpush1.msra.mxu0 %v2259
    %2387 = vmatprep.subr.mxu0 0.0
    %2388 = vmatpush1.msra.mxu0 %v2258
    %2389 = vmatprep.subr.mxu0 0.0
    %2390 = vmatpush1.msra.mxu0 %v2257
    %2391 = vmatprep.subr.mxu0 0.0
    %2392 = vmatpush1.msra.mxu0 %v2256
    %2393 = vmatprep.subr.mxu0 0.0
    %2394 = vmatpush1.msra.mxu0 %v2255
    %2395 = vmatprep.subr.mxu0 0.0
    %2396 = vmatpush1.msra.mxu0 %v2254
    %2397 = vmatprep.subr.mxu0 0.0
    %2398 = vmatpush1.msra.mxu0 %v2253
    %2399 = vmatprep.subr.mxu0 0.0
    %2400 = vmatpush1.msra.mxu0 %v2252
    %2401 = vmatprep.subr.mxu0 0.0
    %2402 = vmatpush1.msra.mxu0 %v2251
    %2403 = vmatprep.subr.mxu0 0.0
    %2404 = vmatpush1.msra.mxu0 %v2250
    %2405 = vmatprep.subr.mxu0 0.0
    %2406 = vmatpush2.msra.mxu0 0.0
    %2407 = vmatprep.subr.mxu0 0.0
    %2408 = vmatpush2.msra.mxu0 0.0
    %2409 = vmatprep.subr.mxu0 0.0
    %2410 = vmatpush2.msra.mxu0 0.0
    %2411 = vmatprep.subr.mxu0 0.0
    %2412 = vmatpush2.msra.mxu0 0.0
    %2413 = vmatprep.subr.mxu0 0.0
    %2414 = vmatpush2.msra.mxu0 0.0
    %2415 = vmatprep.subr.mxu0 0.0
    %2416 = vmatpush2.msra.mxu0 0.0
    %2417 = vmatprep.subr.mxu0 0.0
    %2418 = vmatpush2.msra.mxu0 0.0
    %2419 = vmatprep.subr.mxu0 0.0
    %2420 = vmatpush2.msra.mxu0 0.0
    %2421 = vmatprep.subr.mxu0 0.0
    %2422 = vmatpush2.msra.mxu0 0.0
    %2423 = vmatprep.subr.mxu0 0.0
    %2424 = vmatpush2.msra.mxu0 0.0
    %2425 = vmatprep.subr.mxu0 0.0
    %2426 = vmatpush2.msra.mxu0 0.0
    %2427 = vmatprep.subr.mxu0 0.0
    %2428 = vmatpush2.msra.mxu0 0.0
    %2429 = vmatprep.subr.mxu0 0.0
    %2430 = vmatpush2.msra.mxu0 0.0
    %2431 = vmatprep.subr.mxu0 0.0
    %2432 = vmatpush2.msra.mxu0 0.0
    %2433 = vmatprep.subr.mxu0 0.0
    %2434 = vmatpush2.msra.mxu0 0.0
    %2435 = vmatprep.subr.mxu0 0.0
    %2436 = vmatpush2.msra.mxu0 0.0
    %2437 = vmatprep.mubr.f32.mxu0 0.0
    %2438 = vmatmul.mubr.f32.gmra.mxu0 0.0
    %v2439 = vpop.f32.mrf.mxu0
    %v2440 = vadd.f32 0.0, %v2439
    %v2441 = vpop.f32.mrf.mxu0
    %2442 = vdwg.mxu0
    %v2443 = vadd.f32 %v2372, %v2440
    %v2444 = vmax.f32 %v2443, 0.0
    %v2445 = vadd.f32 %v2339, %v2266
    %2446 = vmatprep.subr.mxu0 0.0
    %2447 = vmatpush1.msra.mxu0 %v2265
    %2448 = vmatprep.subr.mxu0 0.0
    %2449 = vmatpush1.msra.mxu0 %v2264
    %2450 = vmatprep.subr.mxu0 0.0
    %2451 = vmatpush1.msra.mxu0 %v2263
    %2452 = vmatprep.subr.mxu0 0.0
    %2453 = vmatpush1.msra.mxu0 %v2262
    %2454 = vmatprep.subr.mxu0 0.0
    %2455 = vmatpush1.msra.mxu0 %v2261
    %2456 = vmatprep.subr.mxu0 0.0
    %2457 = vmatpush1.msra.mxu0 %v2260
    %2458 = vmatprep.subr.mxu0 0.0
    %2459 = vmatpush1.msra.mxu0 %v2259
    %2460 = vmatprep.subr.mxu0 0.0
    %2461 = vmatpush1.msra.mxu0 %v2258
    %2462 = vmatprep.subr.mxu0 0.0
    %2463 = vmatpush1.msra.mxu0 %v2257
    %2464 = vmatprep.subr.mxu0 0.0
    %2465 = vmatpush1.msra.mxu0 %v2256
    %2466 = vmatprep.subr.mxu0 0.0
    %2467 = vmatpush1.msra.mxu0 %v2255
    %2468 = vmatprep.subr.mxu0 0.0
    %2469 = vmatpush1.msra.mxu0 %v2254
    %2470 = vmatprep.subr.mxu0 0.0
    %2471 = vmatpush1.msra.mxu0 %v2253
    %2472 = vmatprep.subr.mxu0 0.0
    %2473 = vmatpush1.msra.mxu0 %v2252
    %2474 = vmatprep.subr.mxu0 0.0
    %2475 = vmatpush1.msra.mxu0 %v2251
    %2476 = vmatprep.subr.mxu0 0.0
    %2477 = vmatpush1.msra.mxu0 %v2250
    %2478 = vmatprep.subr.mxu0 0.0
    %2479 = vmatpush2.msra.mxu0 0.0
    %2480 = vmatprep.subr.mxu0 0.0
    %2481 = vmatpush2.msra.mxu0 0.0
    %2482 = vmatprep.subr.mxu0 0.0
    %2483 = vmatpush2.msra.mxu0 0.0
    %2484 = vmatprep.subr.mxu0 0.0
    %2485 = vmatpush2.msra.mxu0 0.0
    %2486 = vmatprep.subr.mxu0 0.0
    %2487 = vmatpush2.msra.mxu0 0.0
    %2488 = vmatprep.subr.mxu0 0.0
    %2489 = vmatpush2.msra.mxu0 0.0
    %2490 = vmatprep.subr.mxu0 0.0
    %2491 = vmatpush2.msra.mxu0 0.0
    %2492 = vmatprep.subr.mxu0 0.0
    %2493 = vmatpush2.msra.mxu0 0.0
    %2494 = vmatprep.subr.mxu0 0.0
    %2495 = vmatpush2.msra.mxu0 0.0
    %2496 = vmatprep.subr.mxu0 0.0
    %2497 = vmatpush2.msra.mxu0 0.0
    %2498 = vmatprep.subr.mxu0 0.0
    %2499 = vmatpush2.msra.mxu0 0.0
    %2500 = vmatprep.subr.mxu0 0.0
    %2501 = vmatpush2.msra.mxu0 0.0
    %2502 = vmatprep.subr.mxu0 0.0
    %2503 = vmatpush2.msra.mxu0 0.0
    %2504 = vmatprep.subr.mxu0 0.0
    %2505 = vmatpush2.msra.mxu0 0.0
    %2506 = vmatprep.subr.mxu0 0.0
    %2507 = vmatpush2.msra.mxu0 0.0
    %2508 = vmatprep.subr.mxu0 0.0
    %2509 = vmatpush2.msra.mxu0 0.0
    %2510 = vmatprep.mubr.f32.mxu0 0.0
    %2511 = vmatmul.mubr.f32.gmra.mxu0 %v2444
    %v2512 = vpop.f32.mrf.mxu0
    %v2513 = vadd.f32 0.0, %v2512
    %v2514 = vpop.f32.mrf.mxu0
    %2515 = vdwg.mxu0
    %v2516 = vadd.f32 %v2445, %v2513
    %v2517 = vmax.f32 %v2516, 0.0
    %v2518 = vadd.f32 %v2344, %v2266
    %2519 = vmatprep.subr.mxu0 0.0
    %2520 = vmatpush1.msra.mxu0 %v2265
    %2521 = vmatprep.subr.mxu0 0.0
    %2522 = vmatpush1.msra.mxu0 %v2264
    %2523 = vmatprep.subr.mxu0 0.0
    %2524 = vmatpush1.msra.mxu0 %v2263
    %2525 = vmatprep.subr.mxu0 0.0
    %2526 = vmatpush1.msra.mxu0 %v2262
    %2527 = vmatprep.subr.mxu0 0.0
    %2528 = vmatpush1.msra.mxu0 %v2261
    %2529 = vmatprep.subr.mxu0 0.0
    %2530 = vmatpush1.msra.mxu0 %v2260
    %2531 = vmatprep.subr.mxu0 0.0
    %2532 = vmatpush1.msra.mxu0 %v2259
    %2533 = vmatprep.subr.mxu0 0.0
    %2534 = vmatpush1.msra.mxu0 %v2258
    %2535 = vmatprep.subr.mxu0 0.0
    %2536 = vmatpush1.msra.mxu0 %v2257
    %2537 = vmatprep.subr.mxu0 0.0
    %2538 = vmatpush1.msra.mxu0 %v2256
    %2539 = vmatprep.subr.mxu0 0.0
    %2540 = vmatpush1.msra.mxu0 %v2255
    %2541 = vmatprep.subr.mxu0 0.0
    %2542 = vmatpush1.msra.mxu0 %v2254
    %2543 = vmatprep.subr.mxu0 0.0
    %2544 = vmatpush1.msra.mxu0 %v2253
    %2545 = vmatprep.subr.mxu0 0.0
    %2546 = vmatpush1.msra.mxu0 %v2252
    %2547 = vmatprep.subr.mxu0 0.0
    %2548 = vmatpush1.msra.mxu0 %v2251
    %2549 = vmatprep.subr.mxu0 0.0
    %2550 = vmatpush1.msra.mxu0 %v2250
    %2551 = vmatprep.subr.mxu0 0.0
    %2552 = vmatpush2.msra.mxu0 0.0
    %2553 = vmatprep.subr.mxu0 0.0
    %2554 = vmatpush2.msra.mxu0 0.0
    %2555 = vmatprep.subr.mxu0 0.0
    %2556 = vmatpush2.msra.mxu0 0.0
    %2557 = vmatprep.subr.mxu0 0.0
    %2558 = vmatpush2.msra.mxu0 0.0
    %2559 = vmatprep.subr.mxu0 0.0
    %2560 = vmatpush2.msra.mxu0 0.0
    %2561 = vmatprep.subr.mxu0 0.0
    %2562 = vmatpush2.msra.mxu0 0.0
    %2563 = vmatprep.subr.mxu0 0.0
    %2564 = vmatpush2.msra.mxu0 0.0
    %2565 = vmatprep.subr.mxu0 0.0
    %2566 = vmatpush2.msra.mxu0 0.0
    %2567 = vmatprep.subr.mxu0 0.0
    %2568 = vmatpush2.msra.mxu0 0.0
    %2569 = vmatprep.subr.mxu0 0.0
    %2570 = vmatpush2.msra.mxu0 0.0
    %2571 = vmatprep.subr.mxu0 0.0
    %2572 = vmatpush2.msra.mxu0 0.0
    %2573 = vmatprep.subr.mxu0 0.0
    %2574 = vmatpush2.msra.mxu0 0.0
    %2575 = vmatprep.subr.mxu0 0.0
    %2576 = vmatpush2.msra.mxu0 0.0
    %2577 = vmatprep.subr.mxu0 0.0
    %2578 = vmatpush2.msra.mxu0 0.0
    %2579 = vmatprep.subr.mxu0 0.0
    %2580 = vmatpush2.msra.mxu0 0.0
    %2581 = vmatprep.subr.mxu0 0.0
    %2582 = vmatpush2.msra.mxu0 0.0
    %2583 = vmatprep.mubr.f32.mxu0 0.0
    %2584 = vmatmul.mubr.f32.gmra.mxu0 %v2517
    %v2585 = vpop.f32.mrf.mxu0
    %v2586 = vadd.f32 0.0, %v2585
    %v2587 = vpop.f32.mrf.mxu0
    %2588 = vdwg.mxu0
    %v2589 = vadd.f32 %v2518, %v2586
    %v2590 = vmax.f32 %v2589, 0.0
    %v2591 = vadd.f32 %v2349, %v2266
    %2592 = vmatprep.subr.mxu0 0.0
    %2593 = vmatpush1.msra.mxu0 %v2265
    %2594 = vmatprep.subr.mxu0 0.0
    %2595 = vmatpush1.msra.mxu0 %v2264
    %2596 = vmatprep.subr.mxu0 0.0
    %2597 = vmatpush1.msra.mxu0 %v2263
    %2598 = vmatprep.subr.mxu0 0.0
    %2599 = vmatpush1.msra.mxu0 %v2262
    %2600 = vmatprep.subr.mxu0 0.0
    %2601 = vmatpush1.msra.mxu0 %v2261
    %2602 = vmatprep.subr.mxu0 0.0
    %2603 = vmatpush1.msra.mxu0 %v2260
    %2604 = vmatprep.subr.mxu0 0.0
    %2605 = vmatpush1.msra.mxu0 %v2259
    %2606 = vmatprep.subr.mxu0 0.0
    %2607 = vmatpush1.msra.mxu0 %v2258
    %2608 = vmatprep.subr.mxu0 0.0
    %2609 = vmatpush1.msra.mxu0 %v2257
    %2610 = vmatprep.subr.mxu0 0.0
    %2611 = vmatpush1.msra.mxu0 %v2256
    %2612 = vmatprep.subr.mxu0 0.0
    %2613 = vmatpush1.msra.mxu0 %v2255
    %2614 = vmatprep.subr.mxu0 0.0
    %2615 = vmatpush1.msra.mxu0 %v2254
    %2616 = vmatprep.subr.mxu0 0.0
    %2617 = vmatpush1.msra.mxu0 %v2253
    %2618 = vmatprep.subr.mxu0 0.0
    %2619 = vmatpush1.msra.mxu0 %v2252
    %2620 = vmatprep.subr.mxu0 0.0
    %2621 = vmatpush1.msra.mxu0 %v2251
    %2622 = vmatprep.subr.mxu0 0.0
    %2623 = vmatpush1.msra.mxu0 %v2250
    %2624 = vmatprep.subr.mxu0 0.0
    %2625 = vmatpush2.msra.mxu0 0.0
    %2626 = vmatprep.subr.mxu0 0.0
    %2627 = vmatpush2.msra.mxu0 0.0
    %2628 = vmatprep.subr.mxu0 0.0
    %2629 = vmatpush2.msra.mxu0 0.0
    %2630 = vmatprep.subr.mxu0 0.0
    %2631 = vmatpush2.msra.mxu0 0.0
    %2632 = vmatprep.subr.mxu0 0.0
    %2633 = vmatpush2.msra.mxu0 0.0
    %2634 = vmatprep.subr.mxu0 0.0
    %2635 = vmatpush2.msra.mxu0 0.0
    %2636 = vmatprep.subr.mxu0 0.0
    %2637 = vmatpush2.msra.mxu0 0.0
    %2638 = vmatprep.subr.mxu0 0.0
    %2639 = vmatpush2.msra.mxu0 0.0
    %2640 = vmatprep.subr.mxu0 0.0
    %2641 = vmatpush2.msra.mxu0 0.0
    %2642 = vmatprep.subr.mxu0 0.0
    %2643 = vmatpush2.msra.mxu0 0.0
    %2644 = vmatprep.subr.mxu0 0.0
    %2645 = vmatpush2.msra.mxu0 0.0
    %2646 = vmatprep.subr.mxu0 0.0
    %2647 = vmatpush2.msra.mxu0 0.0
    %2648 = vmatprep.subr.mxu0 0.0
    %2649 = vmatpush2.msra.mxu0 0.0
    %2650 = vmatprep.subr.mxu0 0.0
    %2651 = vmatpush2.msra.mxu0 0.0
    %2652 = vmatprep.subr.mxu0 0.0
    %2653 = vmatpush2.msra.mxu0 0.0
    %2654 = vmatprep.subr.mxu0 0.0
    %2655 = vmatpush2.msra.mxu0 0.0
    %2656 = vmatprep.mubr.f32.mxu0 0.0
    %2657 = vmatmul.mubr.f32.gmra.mxu0 %v2590
    %v2658 = vpop.f32.mrf.mxu0
    %v2659 = vadd.f32 0.0, %v2658
    %v2660 = vpop.f32.mrf.mxu0
    %2661 = vdwg.mxu0
    %v2662 = vadd.f32 %v2591, %v2659
    %v2663 = vmax.f32 %v2662, 0.0
    %v2664 = vadd.f32 %v2354, %v2266
    %2665 = vmatprep.subr.mxu0 0.0
    %2666 = vmatpush1.msra.mxu0 %v2265
    %2667 = vmatprep.subr.mxu0 0.0
    %2668 = vmatpush1.msra.mxu0 %v2264
    %2669 = vmatprep.subr.mxu0 0.0
    %2670 = vmatpush1.msra.mxu0 %v2263
    %2671 = vmatprep.subr.mxu0 0.0
    %2672 = vmatpush1.msra.mxu0 %v2262
    %2673 = vmatprep.subr.mxu0 0.0
    %2674 = vmatpush1.msra.mxu0 %v2261
    %2675 = vmatprep.subr.mxu0 0.0
    %2676 = vmatpush1.msra.mxu0 %v2260
    %2677 = vmatprep.subr.mxu0 0.0
    %2678 = vmatpush1.msra.mxu0 %v2259
    %2679 = vmatprep.subr.mxu0 0.0
    %2680 = vmatpush1.msra.mxu0 %v2258
    %2681 = vmatprep.subr.mxu0 0.0
    %2682 = vmatpush1.msra.mxu0 %v2257
    %2683 = vmatprep.subr.mxu0 0.0
    %2684 = vmatpush1.msra.mxu0 %v2256
    %2685 = vmatprep.subr.mxu0 0.0
    %2686 = vmatpush1.msra.mxu0 %v2255
    %2687 = vmatprep.subr.mxu0 0.0
    %2688 = vmatpush1.msra.mxu0 %v2254
    %2689 = vmatprep.subr.mxu0 0.0
    %2690 = vmatpush1.msra.mxu0 %v2253
    %2691 = vmatprep.subr.mxu0 0.0
    %2692 = vmatpush1.msra.mxu0 %v2252
    %2693 = vmatprep.subr.mxu0 0.0
    %2694 = vmatpush1.msra.mxu0 %v2251
    %2695 = vmatprep.subr.mxu0 0.0
    %2696 = vmatpush1.msra.mxu0 %v2250
    %2697 = vmatprep.subr.mxu0 0.0
    %2698 = vmatpush2.msra.mxu0 0.0
    %2699 = vmatprep.subr.mxu0 0.0
    %2700 = vmatpush2.msra.mxu0 0.0
    %2701 = vmatprep.subr.mxu0 0.0
    %2702 = vmatpush2.msra.mxu0 0.0
    %2703 = vmatprep.subr.mxu0 0.0
    %2704 = vmatpush2.msra.mxu0 0.0
    %2705 = vmatprep.subr.mxu0 0.0
    %2706 = vmatpush2.msra.mxu0 0.0
    %2707 = vmatprep.subr.mxu0 0.0
    %2708 = vmatpush2.msra.mxu0 0.0
    %2709 = vmatprep.subr.mxu0 0.0
    %2710 = vmatpush2.msra.mxu0 0.0
    %2711 = vmatprep.subr.mxu0 0.0
    %2712 = vmatpush2.msra.mxu0 0.0
    %2713 = vmatprep.subr.mxu0 0.0
    %2714 = vmatpush2.msra.mxu0 0.0
    %2715 = vmatprep.subr.mxu0 0.0
    %2716 = vmatpush2.msra.mxu0 0.0
    %2717 = vmatprep.subr.mxu0 0.0
    %2718 = vmatpush2.msra.mxu0 0.0
    %2719 = vmatprep.subr.mxu0 0.0
    %2720 = vmatpush2.msra.mxu0 0.0
    %2721 = vmatprep.subr.mxu0 0.0
    %2722 = vmatpush2.msra.mxu0 0.0
    %2723 = vmatprep.subr.mxu0 0.0
    %2724 = vmatpush2.msra.mxu0 0.0
    %2725 = vmatprep.subr.mxu0 0.0
    %2726 = vmatpush2.msra.mxu0 0.0
    %2727 = vmatprep.subr.mxu0 0.0
    %2728 = vmatpush2.msra.mxu0 0.0
    %2729 = vmatprep.mubr.f32.mxu0 0.0
    %2730 = vmatmul.mubr.f32.gmra.mxu0 %v2663
    %v2731 = vpop.f32.mrf.mxu0
    %v2732 = vadd.f32 0.0, %v2731
    %v2733 = vpop.f32.mrf.mxu0
    %2734 = vdwg.mxu0
    %v2735 = vadd.f32 %v2664, %v2732
    %v2736 = vmax.f32 %v2735, 0.0
    %v2737 = vadd.f32 %v2359, %v2266
    %2738 = vmatprep.subr.mxu0 0.0
    %2739 = vmatpush1.msra.mxu0 %v2265
    %2740 = vmatprep.subr.mxu0 0.0
    %2741 = vmatpush1.msra.mxu0 %v2264
    %2742 = vmatprep.subr.mxu0 0.0
    %2743 = vmatpush1.msra.mxu0 %v2263
    %2744 = vmatprep.subr.mxu0 0.0
    %2745 = vmatpush1.msra.mxu0 %v2262
    %2746 = vmatprep.subr.mxu0 0.0
    %2747 = vmatpush1.msra.mxu0 %v2261
    %2748 = vmatprep.subr.mxu0 0.0
    %2749 = vmatpush1.msra.mxu0 %v2260
    %2750 = vmatprep.subr.mxu0 0.0
    %2751 = vmatpush1.msra.mxu0 %v2259
    %2752 = vmatprep.subr.mxu0 0.0
    %2753 = vmatpush1.msra.mxu0 %v2258
    %2754 = vmatprep.subr.mxu0 0.0
    %2755 = vmatpush1.msra.mxu0 %v2257
    %2756 = vmatprep.subr.mxu0 0.0
    %2757 = vmatpush1.msra.mxu0 %v2256
    %2758 = vmatprep.subr.mxu0 0.0
    %2759 = vmatpush1.msra.mxu0 %v2255
    %2760 = vmatprep.subr.mxu0 0.0
    %2761 = vmatpush1.msra.mxu0 %v2254
    %2762 = vmatprep.subr.mxu0 0.0
    %2763 = vmatpush1.msra.mxu0 %v2253
    %2764 = vmatprep.subr.mxu0 0.0
    %2765 = vmatpush1.msra.mxu0 %v2252
    %2766 = vmatprep.subr.mxu0 0.0
    %2767 = vmatpush1.msra.mxu0 %v2251
    %2768 = vmatprep.subr.mxu0 0.0
    %2769 = vmatpush1.msra.mxu0 %v2250
    %2770 = vmatprep.subr.mxu0 0.0
    %2771 = vmatpush2.msra.mxu0 0.0
    %2772 = vmatprep.subr.mxu0 0.0
    %2773 = vmatpush2.msra.mxu0 0.0
    %2774 = vmatprep.subr.mxu0 0.0
    %2775 = vmatpush2.msra.mxu0 0.0
    %2776 = vmatprep.subr.mxu0 0.0
    %2777 = vmatpush2.msra.mxu0 0.0
    %2778 = vmatprep.subr.mxu0 0.0
    %2779 = vmatpush2.msra.mxu0 0.0
    %2780 = vmatprep.subr.mxu0 0.0
    %2781 = vmatpush2.msra.mxu0 0.0
    %2782 = vmatprep.subr.mxu0 0.0
    %2783 = vmatpush2.msra.mxu0 0.0
    %2784 = vmatprep.subr.mxu0 0.0
    %2785 = vmatpush2.msra.mxu0 0.0
    %2786 = vmatprep.subr.mxu0 0.0
    %2787 = vmatpush2.msra.mxu0 0.0
    %2788 = vmatprep.subr.mxu0 0.0
    %2789 = vmatpush2.msra.mxu0 0.0
    %2790 = vmatprep.subr.mxu0 0.0
    %2791 = vmatpush2.msra.mxu0 0.0
    %2792 = vmatprep.subr.mxu0 0.0
    %2793 = vmatpush2.msra.mxu0 0.0
    %2794 = vmatprep.subr.mxu0 0.0
    %2795 = vmatpush2.msra.mxu0 0.0
    %2796 = vmatprep.subr.mxu0 0.0
    %2797 = vmatpush2.msra.mxu0 0.0
    %2798 = vmatprep.subr.mxu0 0.0
    %2799 = vmatpush2.msra.mxu0 0.0
    %2800 = vmatprep.subr.mxu0 0.0
    %2801 = vmatpush2.msra.mxu0 0.0
    %2802 = vmatprep.mubr.f32.mxu0 0.0
    %2803 = vmatmul.mubr.f32.gmra.mxu0 %v2736
    %v2804 = vpop.f32.mrf.mxu0
    %v2805 = vadd.f32 0.0, %v2804
    %v2806 = vpop.f32.mrf.mxu0
    %2807 = vdwg.mxu0
    %v2808 = vadd.f32 %v2737, %v2805
    %v2809 = vmax.f32 %v2808, 0.0
    %v2810 = vadd.f32 %v2364, %v2266
    %2811 = vmatprep.subr.mxu0 0.0
    %2812 = vmatpush1.msra.mxu0 %v2265
    %2813 = vmatprep.subr.mxu0 0.0
    %2814 = vmatpush1.msra.mxu0 %v2264
    %2815 = vmatprep.subr.mxu0 0.0
    %2816 = vmatpush1.msra.mxu0 %v2263
    %2817 = vmatprep.subr.mxu0 0.0
    %2818 = vmatpush1.msra.mxu0 %v2262
    %2819 = vmatprep.subr.mxu0 0.0
    %2820 = vmatpush1.msra.mxu0 %v2261
    %2821 = vmatprep.subr.mxu0 0.0
    %2822 = vmatpush1.msra.mxu0 %v2260
    %2823 = vmatprep.subr.mxu0 0.0
    %2824 = vmatpush1.msra.mxu0 %v2259
    %2825 = vmatprep.subr.mxu0 0.0
    %2826 = vmatpush1.msra.mxu0 %v2258
    %2827 = vmatprep.subr.mxu0 0.0
    %2828 = vmatpush1.msra.mxu0 %v2257
    %2829 = vmatprep.subr.mxu0 0.0
    %2830 = vmatpush1.msra.mxu0 %v2256
    %2831 = vmatprep.subr.mxu0 0.0
    %2832 = vmatpush1.msra.mxu0 %v2255
    %2833 = vmatprep.subr.mxu0 0.0
    %2834 = vmatpush1.msra.mxu0 %v2254
    %2835 = vmatprep.subr.mxu0 0.0
    %2836 = vmatpush1.msra.mxu0 %v2253
    %2837 = vmatprep.subr.mxu0 0.0
    %2838 = vmatpush1.msra.mxu0 %v2252
    %2839 = vmatprep.subr.mxu0 0.0
    %2840 = vmatpush1.msra.mxu0 %v2251
    %2841 = vmatprep.subr.mxu0 0.0
    %2842 = vmatpush1.msra.mxu0 %v2250
    %2843 = vmatprep.subr.mxu0 0.0
    %2844 = vmatpush2.msra.mxu0 0.0
    %2845 = vmatprep.subr.mxu0 0.0
    %2846 = vmatpush2.msra.mxu0 0.0
    %2847 = vmatprep.subr.mxu0 0.0
    %2848 = vmatpush2.msra.mxu0 0.0
    %2849 = vmatprep.subr.mxu0 0.0
    %2850 = vmatpush2.msra.mxu0 0.0
    %2851 = vmatprep.subr.mxu0 0.0
    %2852 = vmatpush2.msra.mxu0 0.0
    %2853 = vmatprep.subr.mxu0 0.0
    %2854 = vmatpush2.msra.mxu0 0.0
    %2855 = vmatprep.subr.mxu0 0.0
    %2856 = vmatpush2.msra.mxu0 0.0
    %2857 = vmatprep.subr.mxu0 0.0
    %2858 = vmatpush2.msra.mxu0 0.0
    %2859 = vmatprep.subr.mxu0 0.0
    %2860 = vmatpush2.msra.mxu0 0.0
    %2861 = vmatprep.subr.mxu0 0.0
    %2862 = vmatpush2.msra.mxu0 0.0
    %2863 = vmatprep.subr.mxu0 0.0
    %2864 = vmatpush2.msra.mxu0 0.0
    %2865 = vmatprep.subr.mxu0 0.0
    %2866 = vmatpush2.msra.mxu0 0.0
    %2867 = vmatprep.subr.mxu0 0.0
    %2868 = vmatpush2.msra.mxu0 0.0
    %2869 = vmatprep.subr.mxu0 0.0
    %2870 = vmatpush2.msra.mxu0 0.0
    %2871 = vmatprep.subr.mxu0 0.0
    %2872 = vmatpush2.msra.mxu0 0.0
    %2873 = vmatprep.subr.mxu0 0.0
    %2874 = vmatpush2.msra.mxu0 0.0
    %2875 = vmatprep.mubr.f32.mxu0 0.0
    %2876 = vmatmul.mubr.f32.gmra.mxu0 %v2809
    %v2877 = vpop.f32.mrf.mxu0
    %v2878 = vadd.f32 0.0, %v2877
    %v2879 = vpop.f32.mrf.mxu0
    %2880 = vdwg.mxu0
    %v2881 = vadd.f32 %v2810, %v2878
    %v2882 = vmax.f32 %v2881, 0.0
    %v2883 = vadd.f32 %v2369, %v2266
    %2884 = vmatprep.subr.mxu0 0.0
    %2885 = vmatpush1.msra.mxu0 %v2265
    %2886 = vmatprep.subr.mxu0 0.0
    %2887 = vmatpush1.msra.mxu0 %v2264
    %2888 = vmatprep.subr.mxu0 0.0
    %2889 = vmatpush1.msra.mxu0 %v2263
    %2890 = vmatprep.subr.mxu0 0.0
    %2891 = vmatpush1.msra.mxu0 %v2262
    %2892 = vmatprep.subr.mxu0 0.0
    %2893 = vmatpush1.msra.mxu0 %v2261
    %2894 = vmatprep.subr.mxu0 0.0
    %2895 = vmatpush1.msra.mxu0 %v2260
    %2896 = vmatprep.subr.mxu0 0.0
    %2897 = vmatpush1.msra.mxu0 %v2259
    %2898 = vmatprep.subr.mxu0 0.0
    %2899 = vmatpush1.msra.mxu0 %v2258
    %2900 = vmatprep.subr.mxu0 0.0
    %2901 = vmatpush1.msra.mxu0 %v2257
    %2902 = vmatprep.subr.mxu0 0.0
    %2903 = vmatpush1.msra.mxu0 %v2256
    %2904 = vmatprep.subr.mxu0 0.0
    %2905 = vmatpush1.msra.mxu0 %v2255
    %2906 = vmatprep.subr.mxu0 0.0
    %2907 = vmatpush1.msra.mxu0 %v2254
    %2908 = vmatprep.subr.mxu0 0.0
    %2909 = vmatpush1.msra.mxu0 %v2253
    %2910 = vmatprep.subr.mxu0 0.0
    %2911 = vmatpush1.msra.mxu0 %v2252
    %2912 = vmatprep.subr.mxu0 0.0
    %2913 = vmatpush1.msra.mxu0 %v2251
    %2914 = vmatprep.subr.mxu0 0.0
    %2915 = vmatpush1.msra.mxu0 %v2250
    %2916 = vmatprep.subr.mxu0 0.0
    %2917 = vmatpush2.msra.mxu0 0.0
    %2918 = vmatprep.subr.mxu0 0.0
    %2919 = vmatpush2.msra.mxu0 0.0
    %2920 = vmatprep.subr.mxu0 0.0
    %2921 = vmatpush2.msra.mxu0 0.0
    %2922 = vmatprep.subr.mxu0 0.0
    %2923 = vmatpush2.msra.mxu0 0.0
    %2924 = vmatprep.subr.mxu0 0.0
    %2925 = vmatpush2.msra.mxu0 0.0
    %2926 = vmatprep.subr.mxu0 0.0
    %2927 = vmatpush2.msra.mxu0 0.0
    %2928 = vmatprep.subr.mxu0 0.0
    %2929 = vmatpush2.msra.mxu0 0.0
    %2930 = vmatprep.subr.mxu0 0.0
    %2931 = vmatpush2.msra.mxu0 0.0
    %2932 = vmatprep.subr.mxu0 0.0
    %2933 = vmatpush2.msra.mxu0 0.0
    %2934 = vmatprep.subr.mxu0 0.0
    %2935 = vmatpush2.msra.mxu0 0.0
    %2936 = vmatprep.subr.mxu0 0.0
    %2937 = vmatpush2.msra.mxu0 0.0
    %2938 = vmatprep.subr.mxu0 0.0
    %2939 = vmatpush2.msra.mxu0 0.0
    %2940 = vmatprep.subr.mxu0 0.0
    %2941 = vmatpush2.msra.mxu0 0.0
    %2942 = vmatprep.subr.mxu0 0.0
    %2943 = vmatpush2.msra.mxu0 0.0
    %2944 = vmatprep.subr.mxu0 0.0
    %2945 = vmatpush2.msra.mxu0 0.0
    %2946 = vmatprep.subr.mxu0 0.0
    %2947 = vmatpush2.msra.mxu0 0.0
    %2948 = vmatprep.mubr.f32.mxu0 0.0
    %2949 = vmatmul.mubr.f32.gmra.mxu0 %v2882
    %v2950 = vpop.f32.mrf.mxu0
    %v2951 = vadd.f32 0.0, %v2950
    %v2952 = vpop.f32.mrf.mxu0
    %2953 = vdwg.mxu0
    %v2954 = vadd.f32 %v2883, %v2951
    %v2955 = vmax.f32 %v2954, 0.0
    %v2956 = vld [vmem:[#allocation2 + $0x8e0] sm:$0xff]
    %v2957 = vld [vmem:[#allocation2 + $0x8e8] sm:$0xff]
    %v2958 = vld [vmem:[#allocation2 + $0x8f0] sm:$0xff]
    %v2959 = vld [vmem:[#allocation2 + $0x8f8] sm:$0xff]
    %v2960 = vld [vmem:[#allocation2 + $0x900] sm:$0xff]
    %v2961 = vld [vmem:[#allocation2 + $0x908] sm:$0xff]
    %v2962 = vld [vmem:[#allocation2 + $0x910] sm:$0xff]
    %v2963 = vld [vmem:[#allocation2 + $0x918] sm:$0xff]
    %v2964 = vld [vmem:[#allocation2 + $0x920] sm:$0xff]
    %v2965 = vld [vmem:[#allocation2 + $0x928] sm:$0xff]
    %v2966 = vld [vmem:[#allocation2 + $0x930] sm:$0xff]
    %v2967 = vld [vmem:[#allocation2 + $0x938] sm:$0xff]
    %v2968 = vld [vmem:[#allocation2 + $0x940] sm:$0xff]
    %v2969 = vld [vmem:[#allocation2 + $0x948] sm:$0xff]
    %v2970 = vld [vmem:[#allocation2 + $0x950] sm:$0xff]
    %v2971 = vld [vmem:[#allocation2 + $0x958] sm:$0xff]
    %v2972 = vld [vmem:[#allocation2 + $0x960] sm:$0xff]
    %2973 = vmatprep.subr.mxu0 0.0
    %2974 = vmatpush1.msra.mxu0 %v2971
    %2975 = vmatprep.subr.mxu0 0.0
    %2976 = vmatpush1.msra.mxu0 %v2970
    %2977 = vmatprep.subr.mxu0 0.0
    %2978 = vmatpush1.msra.mxu0 %v2969
    %2979 = vmatprep.subr.mxu0 0.0
    %2980 = vmatpush1.msra.mxu0 %v2968
    %2981 = vmatprep.subr.mxu0 0.0
    %2982 = vmatpush1.msra.mxu0 %v2967
    %2983 = vmatprep.subr.mxu0 0.0
    %2984 = vmatpush1.msra.mxu0 %v2966
    %2985 = vmatprep.subr.mxu0 0.0
    %2986 = vmatpush1.msra.mxu0 %v2965
    %2987 = vmatprep.subr.mxu0 0.0
    %2988 = vmatpush1.msra.mxu0 %v2964
    %2989 = vmatprep.subr.mxu0 0.0
    %2990 = vmatpush1.msra.mxu0 %v2963
    %2991 = vmatprep.subr.mxu0 0.0
    %2992 = vmatpush1.msra.mxu0 %v2962
    %2993 = vmatprep.subr.mxu0 0.0
    %2994 = vmatpush1.msra.mxu0 %v2961
    %2995 = vmatprep.subr.mxu0 0.0
    %2996 = vmatpush1.msra.mxu0 %v2960
    %2997 = vmatprep.subr.mxu0 0.0
    %2998 = vmatpush1.msra.mxu0 %v2959
    %2999 = vmatprep.subr.mxu0 0.0
    %3000 = vmatpush1.msra.mxu0 %v2958
    %3001 = vmatprep.subr.mxu0 0.0
    %3002 = vmatpush1.msra.mxu0 %v2957
    %3003 = vmatprep.subr.mxu0 0.0
    %3004 = vmatpush1.msra.mxu0 %v2956
    %3005 = vmatprep.subr.mxu0 0.0
    %3006 = vmatpush2.msra.mxu0 0.0
    %3007 = vmatprep.subr.mxu0 0.0
    %3008 = vmatpush2.msra.mxu0 0.0
    %3009 = vmatprep.subr.mxu0 0.0
    %3010 = vmatpush2.msra.mxu0 0.0
    %3011 = vmatprep.subr.mxu0 0.0
    %3012 = vmatpush2.msra.mxu0 0.0
    %3013 = vmatprep.subr.mxu0 0.0
    %3014 = vmatpush2.msra.mxu0 0.0
    %3015 = vmatprep.subr.mxu0 0.0
    %3016 = vmatpush2.msra.mxu0 0.0
    %3017 = vmatprep.subr.mxu0 0.0
    %3018 = vmatpush2.msra.mxu0 0.0
    %3019 = vmatprep.subr.mxu0 0.0
    %3020 = vmatpush2.msra.mxu0 0.0
    %3021 = vmatprep.subr.mxu0 0.0
    %3022 = vmatpush2.msra.mxu0 0.0
    %3023 = vmatprep.subr.mxu0 0.0
    %3024 = vmatpush2.msra.mxu0 0.0
    %3025 = vmatprep.subr.mxu0 0.0
    %3026 = vmatpush2.msra.mxu0 0.0
    %3027 = vmatprep.subr.mxu0 0.0
    %3028 = vmatpush2.msra.mxu0 0.0
    %3029 = vmatprep.subr.mxu0 0.0
    %3030 = vmatpush2.msra.mxu0 0.0
    %3031 = vmatprep.subr.mxu0 0.0
    %3032 = vmatpush2.msra.mxu0 0.0
    %3033 = vmatprep.subr.mxu0 0.0
    %3034 = vmatpush2.msra.mxu0 0.0
    %3035 = vmatprep.subr.mxu0 0.0
    %3036 = vmatpush2.msra.mxu0 0.0
    %3037 = vmatprep.mubr.f32.mxu0 0.0
    %3038 = vmatmul.mubr.f32.gmra.mxu0 %v2955
    %v3039 = vpop.f32.mrf.mxu0
    %v3040 = vadd.f32 %v2972, %v3039
    %v3041 = vpop.f32.mrf.mxu0
    %3042 = vdwg.mxu0
    %v3043 = vxor.u32 %v3040, 2147483648
    %v3044 = vmul.f32 %v3043, 1.442695
    %v3045 = vpow.pop %v3044
    %v3046 = vadd.f32 %v3045, 1.0
    %v3047 = vrcp.pop %v3046
    %v3048 = vmul.f32 1.0, %v3047
    %v3049 = vld [vmem:[#allocation2 + $0x968] sm:$0xff]
    %v3050 = vld [vmem:[#allocation2 + $0x970] sm:$0xff]
    %v3051 = vld [vmem:[#allocation2 + $0x978] sm:$0xff]
    %v3052 = vld [vmem:[#allocation2 + $0x980] sm:$0xff]
    %v3053 = vld [vmem:[#allocation2 + $0x988] sm:$0xff]
    %v3054 = vld [vmem:[#allocation2 + $0x990] sm:$0xff]
    %v3055 = vld [vmem:[#allocation2 + $0x998] sm:$0xff]
    %v3056 = vld [vmem:[#allocation2 + $0x9a0] sm:$0xff]
    %v3057 = vld [vmem:[#allocation2 + $0x9a8] sm:$0xff]
    %v3058 = vld [vmem:[#allocation2 + $0x9b0] sm:$0xff]
    %v3059 = vld [vmem:[#allocation2 + $0x9b8] sm:$0xff]
    %v3060 = vld [vmem:[#allocation2 + $0x9c0] sm:$0xff]
    %v3061 = vld [vmem:[#allocation2 + $0x9c8] sm:$0xff]
    %v3062 = vld [vmem:[#allocation2 + $0x9d0] sm:$0xff]
    %v3063 = vld [vmem:[#allocation2 + $0x9d8] sm:$0xff]
    %v3064 = vld [vmem:[#allocation2 + $0x9e0] sm:$0xff]
    %v3065 = vld [vmem:[#allocation2 + $0x9e8] sm:$0xff]
    %3066 = vmatprep.subr.mxu0 0.0
    %3067 = vmatpush1.msra.mxu0 %v3064
    %3068 = vmatprep.subr.mxu0 0.0
    %3069 = vmatpush1.msra.mxu0 %v3063
    %3070 = vmatprep.subr.mxu0 0.0
    %3071 = vmatpush1.msra.mxu0 %v3062
    %3072 = vmatprep.subr.mxu0 0.0
    %3073 = vmatpush1.msra.mxu0 %v3061
    %3074 = vmatprep.subr.mxu0 0.0
    %3075 = vmatpush1.msra.mxu0 %v3060
    %3076 = vmatprep.subr.mxu0 0.0
    %3077 = vmatpush1.msra.mxu0 %v3059
    %3078 = vmatprep.subr.mxu0 0.0
    %3079 = vmatpush1.msra.mxu0 %v3058
    %3080 = vmatprep.subr.mxu0 0.0
    %3081 = vmatpush1.msra.mxu0 %v3057
    %3082 = vmatprep.subr.mxu0 0.0
    %3083 = vmatpush1.msra.mxu0 %v3056
    %3084 = vmatprep.subr.mxu0 0.0
    %3085 = vmatpush1.msra.mxu0 %v3055
    %3086 = vmatprep.subr.mxu0 0.0
    %3087 = vmatpush1.msra.mxu0 %v3054
    %3088 = vmatprep.subr.mxu0 0.0
    %3089 = vmatpush1.msra.mxu0 %v3053
    %3090 = vmatprep.subr.mxu0 0.0
    %3091 = vmatpush1.msra.mxu0 %v3052
    %3092 = vmatprep.subr.mxu0 0.0
    %3093 = vmatpush1.msra.mxu0 %v3051
    %3094 = vmatprep.subr.mxu0 0.0
    %3095 = vmatpush1.msra.mxu0 %v3050
    %3096 = vmatprep.subr.mxu0 0.0
    %3097 = vmatpush1.msra.mxu0 %v3049
    %3098 = vmatprep.subr.mxu0 0.0
    %3099 = vmatpush2.msra.mxu0 0.0
    %3100 = vmatprep.subr.mxu0 0.0
    %3101 = vmatpush2.msra.mxu0 0.0
    %3102 = vmatprep.subr.mxu0 0.0
    %3103 = vmatpush2.msra.mxu0 0.0
    %3104 = vmatprep.subr.mxu0 0.0
    %3105 = vmatpush2.msra.mxu0 0.0
    %3106 = vmatprep.subr.mxu0 0.0
    %3107 = vmatpush2.msra.mxu0 0.0
    %3108 = vmatprep.subr.mxu0 0.0
    %3109 = vmatpush2.msra.mxu0 0.0
    %3110 = vmatprep.subr.mxu0 0.0
    %3111 = vmatpush2.msra.mxu0 0.0
    %3112 = vmatprep.subr.mxu0 0.0
    %3113 = vmatpush2.msra.mxu0 0.0
    %3114 = vmatprep.subr.mxu0 0.0
    %3115 = vmatpush2.msra.mxu0 0.0
    %3116 = vmatprep.subr.mxu0 0.0
    %3117 = vmatpush2.msra.mxu0 0.0
    %3118 = vmatprep.subr.mxu0 0.0
    %3119 = vmatpush2.msra.mxu0 0.0
    %3120 = vmatprep.subr.mxu0 0.0
    %3121 = vmatpush2.msra.mxu0 0.0
    %3122 = vmatprep.subr.mxu0 0.0
    %3123 = vmatpush2.msra.mxu0 0.0
    %3124 = vmatprep.subr.mxu0 0.0
    %3125 = vmatpush2.msra.mxu0 0.0
    %3126 = vmatprep.subr.mxu0 0.0
    %3127 = vmatpush2.msra.mxu0 0.0
    %3128 = vmatprep.subr.mxu0 0.0
    %3129 = vmatpush2.msra.mxu0 0.0
    %3130 = vmatprep.mubr.f32.mxu0 0.0
    %3131 = vmatmul.mubr.f32.gmra.mxu0 %v3048
    %v3132 = vpop.f32.mrf.mxu0
    %v3133 = vadd.f32 %v3065, %v3132
    %v3134 = vpop.f32.mrf.mxu0
    %3135 = vdwg.mxu0
    %3137 = vset.pattern.permute.xlu0 0
    %3138 = vperm.xlu0 %3137, %v3133
    %v3139 = vpop.permute.xlu0 %3138
    %v3141 = vld [vmem:[#allocation2 + $0x420] sm:$0xff]
    %v3142 = vld [vmem:[#allocation2 + $0x428] sm:$0xff]
    %v3143 = vld [vmem:[#allocation2 + $0x430] sm:$0xff]
    %v3144 = vld [vmem:[#allocation2 + $0x438] sm:$0xff]
    %v3145 = vld [vmem:[#allocation2 + $0x440] sm:$0xff]
    %v3146 = vld [vmem:[#allocation2 + $0x448] sm:$0xff]
    %v3147 = vld [vmem:[#allocation2 + $0x450] sm:$0xff]
    %v3148 = vld [vmem:[#allocation2 + $0x458] sm:$0xff]
    %v3149 = vld [vmem:[#allocation2 + $0x460] sm:$0xff]
    %v3150 = vld [vmem:[#allocation2 + $0x468] sm:$0xff]
    %v3151 = vld [vmem:[#allocation2 + $0x470] sm:$0xff]
    %v3152 = vld [vmem:[#allocation2 + $0x478] sm:$0xff]
    %v3153 = vld [vmem:[#allocation2 + $0x480] sm:$0xff]
    %v3154 = vld [vmem:[#allocation2 + $0x488] sm:$0xff]
    %v3155 = vld [vmem:[#allocation2 + $0x490] sm:$0xff]
    %v3156 = vld [vmem:[#allocation2 + $0x498] sm:$0xff]
    %v3157 = vld [vmem:[#allocation2 + $0x4a0] sm:$0xff]
    %3158 = vmatprep.subr.mxu0 0.0
    %3159 = vmatpush1.msra.mxu0 %v3156
    %3160 = vmatprep.subr.mxu0 0.0
    %3161 = vmatpush1.msra.mxu0 %v3155
    %3162 = vmatprep.subr.mxu0 0.0
    %3163 = vmatpush1.msra.mxu0 %v3154
    %3164 = vmatprep.subr.mxu0 0.0
    %3165 = vmatpush1.msra.mxu0 %v3153
    %3166 = vmatprep.subr.mxu0 0.0
    %3167 = vmatpush1.msra.mxu0 %v3152
    %3168 = vmatprep.subr.mxu0 0.0
    %3169 = vmatpush1.msra.mxu0 %v3151
    %3170 = vmatprep.subr.mxu0 0.0
    %3171 = vmatpush1.msra.mxu0 %v3150
    %3172 = vmatprep.subr.mxu0 0.0
    %3173 = vmatpush1.msra.mxu0 %v3149
    %3174 = vmatprep.subr.mxu0 0.0
    %3175 = vmatpush1.msra.mxu0 %v3148
    %3176 = vmatprep.subr.mxu0 0.0
    %3177 = vmatpush1.msra.mxu0 %v3147
    %3178 = vmatprep.subr.mxu0 0.0
    %3179 = vmatpush1.msra.mxu0 %v3146
    %3180 = vmatprep.subr.mxu0 0.0
    %3181 = vmatpush1.msra.mxu0 %v3145
    %3182 = vmatprep.subr.mxu0 0.0
    %3183 = vmatpush1.msra.mxu0 %v3144
    %3184 = vmatprep.subr.mxu0 0.0
    %3185 = vmatpush1.msra.mxu0 %v3143
    %3186 = vmatprep.subr.mxu0 0.0
    %3187 = vmatpush1.msra.mxu0 %v3142
    %3188 = vmatprep.subr.mxu0 0.0
    %3189 = vmatpush1.msra.mxu0 %v3141
    %3190 = vmatprep.subr.mxu0 0.0
    %3191 = vmatpush2.msra.mxu0 0.0
    %3192 = vmatprep.subr.mxu0 0.0
    %3193 = vmatpush2.msra.mxu0 0.0
    %3194 = vmatprep.subr.mxu0 0.0
    %3195 = vmatpush2.msra.mxu0 0.0
    %3196 = vmatprep.subr.mxu0 0.0
    %3197 = vmatpush2.msra.mxu0 0.0
    %3198 = vmatprep.subr.mxu0 0.0
    %3199 = vmatpush2.msra.mxu0 0.0
    %3200 = vmatprep.subr.mxu0 0.0
    %3201 = vmatpush2.msra.mxu0 0.0
    %3202 = vmatprep.subr.mxu0 0.0
    %3203 = vmatpush2.msra.mxu0 0.0
    %3204 = vmatprep.subr.mxu0 0.0
    %3205 = vmatpush2.msra.mxu0 0.0
    %3206 = vmatprep.subr.mxu0 0.0
    %3207 = vmatpush2.msra.mxu0 0.0
    %3208 = vmatprep.subr.mxu0 0.0
    %3209 = vmatpush2.msra.mxu0 0.0
    %3210 = vmatprep.subr.mxu0 0.0
    %3211 = vmatpush2.msra.mxu0 0.0
    %3212 = vmatprep.subr.mxu0 0.0
    %3213 = vmatpush2.msra.mxu0 0.0
    %3214 = vmatprep.subr.mxu0 0.0
    %3215 = vmatpush2.msra.mxu0 0.0
    %3216 = vmatprep.subr.mxu0 0.0
    %3217 = vmatpush2.msra.mxu0 0.0
    %3218 = vmatprep.subr.mxu0 0.0
    %3219 = vmatpush2.msra.mxu0 0.0
    %3220 = vmatprep.subr.mxu0 0.0
    %3221 = vmatpush2.msra.mxu0 0.0
    %3222 = vmatprep.mubr.f32.mxu0 0.0
    %3223 = vmatmul.mubr.f32.gmra.mxu0 %v3139
    %v3224 = vpop.f32.mrf.mxu0
    %v3225 = vadd.f32 %v3157, %v3224
    %v3226 = vpop.f32.mrf.mxu0
    %3227 = vdwg.mxu0
    %v3228 = vmax.f32 %v3225, 0.0
    %v3229 = vld [vmem:[#allocation2 + $0x4a8] sm:$0xff]
    %v3230 = vld [vmem:[#allocation2 + $0x4b0] sm:$0xff]
    %v3231 = vld [vmem:[#allocation2 + $0x4b8] sm:$0xff]
    %v3232 = vld [vmem:[#allocation2 + $0x4c0] sm:$0xff]
    %v3233 = vld [vmem:[#allocation2 + $0x4c8] sm:$0xff]
    %v3234 = vld [vmem:[#allocation2 + $0x4d0] sm:$0xff]
    %v3235 = vld [vmem:[#allocation2 + $0x4d8] sm:$0xff]
    %v3236 = vld [vmem:[#allocation2 + $0x4e0] sm:$0xff]
    %v3237 = vld [vmem:[#allocation2 + $0x4e8] sm:$0xff]
    %v3238 = vld [vmem:[#allocation2 + $0x4f0] sm:$0xff]
    %v3239 = vld [vmem:[#allocation2 + $0x4f8] sm:$0xff]
    %v3240 = vld [vmem:[#allocation2 + $0x500] sm:$0xff]
    %v3241 = vld [vmem:[#allocation2 + $0x508] sm:$0xff]
    %v3242 = vld [vmem:[#allocation2 + $0x510] sm:$0xff]
    %v3243 = vld [vmem:[#allocation2 + $0x518] sm:$0xff]
    %v3244 = vld [vmem:[#allocation2 + $0x520] sm:$0xff]
    %v3245 = vld [vmem:[#allocation2 + $0x528] sm:$0xff]
    %3246 = vmatprep.subr.mxu0 0.0
    %3247 = vmatpush1.msra.mxu0 %v3244
    %3248 = vmatprep.subr.mxu0 0.0
    %3249 = vmatpush1.msra.mxu0 %v3243
    %3250 = vmatprep.subr.mxu0 0.0
    %3251 = vmatpush1.msra.mxu0 %v3242
    %3252 = vmatprep.subr.mxu0 0.0
    %3253 = vmatpush1.msra.mxu0 %v3241
    %3254 = vmatprep.subr.mxu0 0.0
    %3255 = vmatpush1.msra.mxu0 %v3240
    %3256 = vmatprep.subr.mxu0 0.0
    %3257 = vmatpush1.msra.mxu0 %v3239
    %3258 = vmatprep.subr.mxu0 0.0
    %3259 = vmatpush1.msra.mxu0 %v3238
    %3260 = vmatprep.subr.mxu0 0.0
    %3261 = vmatpush1.msra.mxu0 %v3237
    %3262 = vmatprep.subr.mxu0 0.0
    %3263 = vmatpush1.msra.mxu0 %v3236
    %3264 = vmatprep.subr.mxu0 0.0
    %3265 = vmatpush1.msra.mxu0 %v3235
    %3266 = vmatprep.subr.mxu0 0.0
    %3267 = vmatpush1.msra.mxu0 %v3234
    %3268 = vmatprep.subr.mxu0 0.0
    %3269 = vmatpush1.msra.mxu0 %v3233
    %3270 = vmatprep.subr.mxu0 0.0
    %3271 = vmatpush1.msra.mxu0 %v3232
    %3272 = vmatprep.subr.mxu0 0.0
    %3273 = vmatpush1.msra.mxu0 %v3231
    %3274 = vmatprep.subr.mxu0 0.0
    %3275 = vmatpush1.msra.mxu0 %v3230
    %3276 = vmatprep.subr.mxu0 0.0
    %3277 = vmatpush1.msra.mxu0 %v3229
    %3278 = vmatprep.subr.mxu0 0.0
    %3279 = vmatpush2.msra.mxu0 0.0
    %3280 = vmatprep.subr.mxu0 0.0
    %3281 = vmatpush2.msra.mxu0 0.0
    %3282 = vmatprep.subr.mxu0 0.0
    %3283 = vmatpush2.msra.mxu0 0.0
    %3284 = vmatprep.subr.mxu0 0.0
    %3285 = vmatpush2.msra.mxu0 0.0
    %3286 = vmatprep.subr.mxu0 0.0
    %3287 = vmatpush2.msra.mxu0 0.0
    %3288 = vmatprep.subr.mxu0 0.0
    %3289 = vmatpush2.msra.mxu0 0.0
    %3290 = vmatprep.subr.mxu0 0.0
    %3291 = vmatpush2.msra.mxu0 0.0
    %3292 = vmatprep.subr.mxu0 0.0
    %3293 = vmatpush2.msra.mxu0 0.0
    %3294 = vmatprep.subr.mxu0 0.0
    %3295 = vmatpush2.msra.mxu0 0.0
    %3296 = vmatprep.subr.mxu0 0.0
    %3297 = vmatpush2.msra.mxu0 0.0
    %3298 = vmatprep.subr.mxu0 0.0
    %3299 = vmatpush2.msra.mxu0 0.0
    %3300 = vmatprep.subr.mxu0 0.0
    %3301 = vmatpush2.msra.mxu0 0.0
    %3302 = vmatprep.subr.mxu0 0.0
    %3303 = vmatpush2.msra.mxu0 0.0
    %3304 = vmatprep.subr.mxu0 0.0
    %3305 = vmatpush2.msra.mxu0 0.0
    %3306 = vmatprep.subr.mxu0 0.0
    %3307 = vmatpush2.msra.mxu0 0.0
    %3308 = vmatprep.subr.mxu0 0.0
    %3309 = vmatpush2.msra.mxu0 0.0
    %3310 = vmatprep.mubr.f32.mxu0 0.0
    %3311 = vmatmul.mubr.f32.gmra.mxu0 %v3228
    %v3312 = vpop.f32.mrf.mxu0
    %v3313 = vadd.f32 %v3245, %v3312
    %v3314 = vpop.f32.mrf.mxu0
    %3315 = vdwg.mxu0
    %v3316 = vmax.f32 %v3313, 0.0
    %v3317 = vld [vmem:[#allocation2 + $0x530] sm:$0xff]
    %v3318 = vld [vmem:[#allocation2 + $0x538] sm:$0xff]
    %v3319 = vld [vmem:[#allocation2 + $0x540] sm:$0xff]
    %v3320 = vld [vmem:[#allocation2 + $0x548] sm:$0xff]
    %v3321 = vld [vmem:[#allocation2 + $0x550] sm:$0xff]
    %v3322 = vld [vmem:[#allocation2 + $0x558] sm:$0xff]
    %v3323 = vld [vmem:[#allocation2 + $0x560] sm:$0xff]
    %v3324 = vld [vmem:[#allocation2 + $0x568] sm:$0xff]
    %v3325 = vld [vmem:[#allocation2 + $0x570] sm:$0xff]
    %v3326 = vld [vmem:[#allocation2 + $0x578] sm:$0xff]
    %v3327 = vld [vmem:[#allocation2 + $0x580] sm:$0xff]
    %v3328 = vld [vmem:[#allocation2 + $0x588] sm:$0xff]
    %v3329 = vld [vmem:[#allocation2 + $0x590] sm:$0xff]
    %v3330 = vld [vmem:[#allocation2 + $0x598] sm:$0xff]
    %v3331 = vld [vmem:[#allocation2 + $0x5a0] sm:$0xff]
    %v3332 = vld [vmem:[#allocation2 + $0x5a8] sm:$0xff]
    %v3333 = vld [vmem:[#allocation2 + $0x5b0] sm:$0xff]
    %3334 = vmatprep.subr.mxu0 0.0
    %3335 = vmatpush1.msra.mxu0 %v3332
    %3336 = vmatprep.subr.mxu0 0.0
    %3337 = vmatpush1.msra.mxu0 %v3331
    %3338 = vmatprep.subr.mxu0 0.0
    %3339 = vmatpush1.msra.mxu0 %v3330
    %3340 = vmatprep.subr.mxu0 0.0
    %3341 = vmatpush1.msra.mxu0 %v3329
    %3342 = vmatprep.subr.mxu0 0.0
    %3343 = vmatpush1.msra.mxu0 %v3328
    %3344 = vmatprep.subr.mxu0 0.0
    %3345 = vmatpush1.msra.mxu0 %v3327
    %3346 = vmatprep.subr.mxu0 0.0
    %3347 = vmatpush1.msra.mxu0 %v3326
    %3348 = vmatprep.subr.mxu0 0.0
    %3349 = vmatpush1.msra.mxu0 %v3325
    %3350 = vmatprep.subr.mxu0 0.0
    %3351 = vmatpush1.msra.mxu0 %v3324
    %3352 = vmatprep.subr.mxu0 0.0
    %3353 = vmatpush1.msra.mxu0 %v3323
    %3354 = vmatprep.subr.mxu0 0.0
    %3355 = vmatpush1.msra.mxu0 %v3322
    %3356 = vmatprep.subr.mxu0 0.0
    %3357 = vmatpush1.msra.mxu0 %v3321
    %3358 = vmatprep.subr.mxu0 0.0
    %3359 = vmatpush1.msra.mxu0 %v3320
    %3360 = vmatprep.subr.mxu0 0.0
    %3361 = vmatpush1.msra.mxu0 %v3319
    %3362 = vmatprep.subr.mxu0 0.0
    %3363 = vmatpush1.msra.mxu0 %v3318
    %3364 = vmatprep.subr.mxu0 0.0
    %3365 = vmatpush1.msra.mxu0 %v3317
    %3366 = vmatprep.subr.mxu0 0.0
    %3367 = vmatpush2.msra.mxu0 0.0
    %3368 = vmatprep.subr.mxu0 0.0
    %3369 = vmatpush2.msra.mxu0 0.0
    %3370 = vmatprep.subr.mxu0 0.0
    %3371 = vmatpush2.msra.mxu0 0.0
    %3372 = vmatprep.subr.mxu0 0.0
    %3373 = vmatpush2.msra.mxu0 0.0
    %3374 = vmatprep.subr.mxu0 0.0
    %3375 = vmatpush2.msra.mxu0 0.0
    %3376 = vmatprep.subr.mxu0 0.0
    %3377 = vmatpush2.msra.mxu0 0.0
    %3378 = vmatprep.subr.mxu0 0.0
    %3379 = vmatpush2.msra.mxu0 0.0
    %3380 = vmatprep.subr.mxu0 0.0
    %3381 = vmatpush2.msra.mxu0 0.0
    %3382 = vmatprep.subr.mxu0 0.0
    %3383 = vmatpush2.msra.mxu0 0.0
    %3384 = vmatprep.subr.mxu0 0.0
    %3385 = vmatpush2.msra.mxu0 0.0
    %3386 = vmatprep.subr.mxu0 0.0
    %3387 = vmatpush2.msra.mxu0 0.0
    %3388 = vmatprep.subr.mxu0 0.0
    %3389 = vmatpush2.msra.mxu0 0.0
    %3390 = vmatprep.subr.mxu0 0.0
    %3391 = vmatpush2.msra.mxu0 0.0
    %3392 = vmatprep.subr.mxu0 0.0
    %3393 = vmatpush2.msra.mxu0 0.0
    %3394 = vmatprep.subr.mxu0 0.0
    %3395 = vmatpush2.msra.mxu0 0.0
    %3396 = vmatprep.subr.mxu0 0.0
    %3397 = vmatpush2.msra.mxu0 0.0
    %3398 = vmatprep.mubr.f32.mxu0 0.0
    %3399 = vmatmul.mubr.f32.gmra.mxu0 %v3316
    %v3400 = vpop.f32.mrf.mxu0
    %v3401 = vadd.f32 %v3333, %v3400
    %v3402 = vpop.f32.mrf.mxu0
    %3403 = vdwg.mxu0
    %v3404 = vmax.f32 %v3401, 0.0
    %v3405 = vld [vmem:[#allocation2 + $0x5b8] sm:$0xff]
    %v3406 = vld [vmem:[#allocation2 + $0x5c0] sm:$0xff]
    %v3407 = vld [vmem:[#allocation2 + $0x5c8] sm:$0xff]
    %v3408 = vld [vmem:[#allocation2 + $0x5d0] sm:$0xff]
    %v3409 = vld [vmem:[#allocation2 + $0x5d8] sm:$0xff]
    %v3410 = vld [vmem:[#allocation2 + $0x5e0] sm:$0xff]
    %v3411 = vld [vmem:[#allocation2 + $0x5e8] sm:$0xff]
    %v3412 = vld [vmem:[#allocation2 + $0x5f0] sm:$0xff]
    %v3413 = vld [vmem:[#allocation2 + $0x5f8] sm:$0xff]
    %v3414 = vld [vmem:[#allocation2 + $0x600] sm:$0xff]
    %v3415 = vld [vmem:[#allocation2 + $0x608] sm:$0xff]
    %v3416 = vld [vmem:[#allocation2 + $0x610] sm:$0xff]
    %v3417 = vld [vmem:[#allocation2 + $0x618] sm:$0xff]
    %v3418 = vld [vmem:[#allocation2 + $0x620] sm:$0xff]
    %v3419 = vld [vmem:[#allocation2 + $0x628] sm:$0xff]
    %v3420 = vld [vmem:[#allocation2 + $0x630] sm:$0xff]
    %v3421 = vld [vmem:[#allocation2 + $0x638] sm:$0xff]
    %3422 = vmatprep.subr.mxu0 0.0
    %3423 = vmatpush1.msra.mxu0 %v3420
    %3424 = vmatprep.subr.mxu0 0.0
    %3425 = vmatpush1.msra.mxu0 %v3419
    %3426 = vmatprep.subr.mxu0 0.0
    %3427 = vmatpush1.msra.mxu0 %v3418
    %3428 = vmatprep.subr.mxu0 0.0
    %3429 = vmatpush1.msra.mxu0 %v3417
    %3430 = vmatprep.subr.mxu0 0.0
    %3431 = vmatpush1.msra.mxu0 %v3416
    %3432 = vmatprep.subr.mxu0 0.0
    %3433 = vmatpush1.msra.mxu0 %v3415
    %3434 = vmatprep.subr.mxu0 0.0
    %3435 = vmatpush1.msra.mxu0 %v3414
    %3436 = vmatprep.subr.mxu0 0.0
    %3437 = vmatpush1.msra.mxu0 %v3413
    %3438 = vmatprep.subr.mxu0 0.0
    %3439 = vmatpush1.msra.mxu0 %v3412
    %3440 = vmatprep.subr.mxu0 0.0
    %3441 = vmatpush1.msra.mxu0 %v3411
    %3442 = vmatprep.subr.mxu0 0.0
    %3443 = vmatpush1.msra.mxu0 %v3410
    %3444 = vmatprep.subr.mxu0 0.0
    %3445 = vmatpush1.msra.mxu0 %v3409
    %3446 = vmatprep.subr.mxu0 0.0
    %3447 = vmatpush1.msra.mxu0 %v3408
    %3448 = vmatprep.subr.mxu0 0.0
    %3449 = vmatpush1.msra.mxu0 %v3407
    %3450 = vmatprep.subr.mxu0 0.0
    %3451 = vmatpush1.msra.mxu0 %v3406
    %3452 = vmatprep.subr.mxu0 0.0
    %3453 = vmatpush1.msra.mxu0 %v3405
    %3454 = vmatprep.subr.mxu0 0.0
    %3455 = vmatpush2.msra.mxu0 0.0
    %3456 = vmatprep.subr.mxu0 0.0
    %3457 = vmatpush2.msra.mxu0 0.0
    %3458 = vmatprep.subr.mxu0 0.0
    %3459 = vmatpush2.msra.mxu0 0.0
    %3460 = vmatprep.subr.mxu0 0.0
    %3461 = vmatpush2.msra.mxu0 0.0
    %3462 = vmatprep.subr.mxu0 0.0
    %3463 = vmatpush2.msra.mxu0 0.0
    %3464 = vmatprep.subr.mxu0 0.0
    %3465 = vmatpush2.msra.mxu0 0.0
    %3466 = vmatprep.subr.mxu0 0.0
    %3467 = vmatpush2.msra.mxu0 0.0
    %3468 = vmatprep.subr.mxu0 0.0
    %3469 = vmatpush2.msra.mxu0 0.0
    %3470 = vmatprep.subr.mxu0 0.0
    %3471 = vmatpush2.msra.mxu0 0.0
    %3472 = vmatprep.subr.mxu0 0.0
    %3473 = vmatpush2.msra.mxu0 0.0
    %3474 = vmatprep.subr.mxu0 0.0
    %3475 = vmatpush2.msra.mxu0 0.0
    %3476 = vmatprep.subr.mxu0 0.0
    %3477 = vmatpush2.msra.mxu0 0.0
    %3478 = vmatprep.subr.mxu0 0.0
    %3479 = vmatpush2.msra.mxu0 0.0
    %3480 = vmatprep.subr.mxu0 0.0
    %3481 = vmatpush2.msra.mxu0 0.0
    %3482 = vmatprep.subr.mxu0 0.0
    %3483 = vmatpush2.msra.mxu0 0.0
    %3484 = vmatprep.subr.mxu0 0.0
    %3485 = vmatpush2.msra.mxu0 0.0
    %3486 = vmatprep.mubr.f32.mxu0 0.0
    %3487 = vmatmul.mubr.f32.gmra.mxu0 %v3404
    %v3488 = vpop.f32.mrf.mxu0
    %v3489 = vadd.f32 %v3421, %v3488
    %v3490 = vpop.f32.mrf.mxu0
    %3491 = vdwg.mxu0
    %v3492 = vmax.f32 %v3489, 0.0
    %v3493 = vld [vmem:[#allocation2 + $0x9f0] sm:$0xff]
    %v3494 = vld [vmem:[#allocation2 + $0x9f8] sm:$0xff]
    %v3495 = vld [vmem:[#allocation2 + $0xa00] sm:$0xff]
    %v3496 = vld [vmem:[#allocation2 + $0xa08] sm:$0xff]
    %v3497 = vld [vmem:[#allocation2 + $0xa10] sm:$0xff]
    %v3498 = vld [vmem:[#allocation2 + $0xa18] sm:$0xff]
    %v3499 = vld [vmem:[#allocation2 + $0xa20] sm:$0xff]
    %v3500 = vld [vmem:[#allocation2 + $0xa28] sm:$0xff]
    %v3501 = vld [vmem:[#allocation2 + $0xa30] sm:$0xff]
    %v3502 = vld [vmem:[#allocation2 + $0xa38] sm:$0xff]
    %v3503 = vld [vmem:[#allocation2 + $0xa40] sm:$0xff]
    %v3504 = vld [vmem:[#allocation2 + $0xa48] sm:$0xff]
    %v3505 = vld [vmem:[#allocation2 + $0xa50] sm:$0xff]
    %v3506 = vld [vmem:[#allocation2 + $0xa58] sm:$0xff]
    %v3507 = vld [vmem:[#allocation2 + $0xa60] sm:$0xff]
    %v3508 = vld [vmem:[#allocation2 + $0xa68] sm:$0xff]
    %v3509 = vld [vmem:[#allocation2 + $0xa70] sm:$0xff]
    %3510 = vmatprep.subr.mxu0 0.0
    %3511 = vmatpush1.msra.mxu0 %v3508
    %3512 = vmatprep.subr.mxu0 0.0
    %3513 = vmatpush1.msra.mxu0 %v3507
    %3514 = vmatprep.subr.mxu0 0.0
    %3515 = vmatpush1.msra.mxu0 %v3506
    %3516 = vmatprep.subr.mxu0 0.0
    %3517 = vmatpush1.msra.mxu0 %v3505
    %3518 = vmatprep.subr.mxu0 0.0
    %3519 = vmatpush1.msra.mxu0 %v3504
    %3520 = vmatprep.subr.mxu0 0.0
    %3521 = vmatpush1.msra.mxu0 %v3503
    %3522 = vmatprep.subr.mxu0 0.0
    %3523 = vmatpush1.msra.mxu0 %v3502
    %3524 = vmatprep.subr.mxu0 0.0
    %3525 = vmatpush1.msra.mxu0 %v3501
    %3526 = vmatprep.subr.mxu0 0.0
    %3527 = vmatpush1.msra.mxu0 %v3500
    %3528 = vmatprep.subr.mxu0 0.0
    %3529 = vmatpush1.msra.mxu0 %v3499
    %3530 = vmatprep.subr.mxu0 0.0
    %3531 = vmatpush1.msra.mxu0 %v3498
    %3532 = vmatprep.subr.mxu0 0.0
    %3533 = vmatpush1.msra.mxu0 %v3497
    %3534 = vmatprep.subr.mxu0 0.0
    %3535 = vmatpush1.msra.mxu0 %v3496
    %3536 = vmatprep.subr.mxu0 0.0
    %3537 = vmatpush1.msra.mxu0 %v3495
    %3538 = vmatprep.subr.mxu0 0.0
    %3539 = vmatpush1.msra.mxu0 %v3494
    %3540 = vmatprep.subr.mxu0 0.0
    %3541 = vmatpush1.msra.mxu0 %v3493
    %3542 = vmatprep.subr.mxu0 0.0
    %3543 = vmatpush2.msra.mxu0 0.0
    %3544 = vmatprep.subr.mxu0 0.0
    %3545 = vmatpush2.msra.mxu0 0.0
    %3546 = vmatprep.subr.mxu0 0.0
    %3547 = vmatpush2.msra.mxu0 0.0
    %3548 = vmatprep.subr.mxu0 0.0
    %3549 = vmatpush2.msra.mxu0 0.0
    %3550 = vmatprep.subr.mxu0 0.0
    %3551 = vmatpush2.msra.mxu0 0.0
    %3552 = vmatprep.subr.mxu0 0.0
    %3553 = vmatpush2.msra.mxu0 0.0
    %3554 = vmatprep.subr.mxu0 0.0
    %3555 = vmatpush2.msra.mxu0 0.0
    %3556 = vmatprep.subr.mxu0 0.0
    %3557 = vmatpush2.msra.mxu0 0.0
    %3558 = vmatprep.subr.mxu0 0.0
    %3559 = vmatpush2.msra.mxu0 0.0
    %3560 = vmatprep.subr.mxu0 0.0
    %3561 = vmatpush2.msra.mxu0 0.0
    %3562 = vmatprep.subr.mxu0 0.0
    %3563 = vmatpush2.msra.mxu0 0.0
    %3564 = vmatprep.subr.mxu0 0.0
    %3565 = vmatpush2.msra.mxu0 0.0
    %3566 = vmatprep.subr.mxu0 0.0
    %3567 = vmatpush2.msra.mxu0 0.0
    %3568 = vmatprep.subr.mxu0 0.0
    %3569 = vmatpush2.msra.mxu0 0.0
    %3570 = vmatprep.subr.mxu0 0.0
    %3571 = vmatpush2.msra.mxu0 0.0
    %3572 = vmatprep.subr.mxu0 0.0
    %3573 = vmatpush2.msra.mxu0 0.0
    %3574 = vmatprep.mubr.f32.mxu0 0.0
    %3575 = vmatmul.mubr.f32.gmra.mxu0 %v3492
    %v3576 = vpop.f32.mrf.mxu0
    %v3577 = vadd.f32 %v3509, %v3576
    %v3578 = vpop.f32.mrf.mxu0
    %3579 = vdwg.mxu0
    %v3580 = vxor.u32 %v3577, 2147483648
    %v3581 = vmul.f32 %v3580, 1.442695
    %v3582 = vpow.pop %v3581
    %v3583 = vadd.f32 %v3582, 1.0
    %v3584 = vrcp.pop %v3583
    %v3585 = vmul.f32 1.0, %v3584
    %v3586 = vld [vmem:[#allocation2 + $0xa78] sm:$0xff]
    %v3587 = vld [vmem:[#allocation2 + $0xa80] sm:$0xff]
    %v3588 = vld [vmem:[#allocation2 + $0xa88] sm:$0xff]
    %v3589 = vld [vmem:[#allocation2 + $0xa90] sm:$0xff]
    %v3590 = vld [vmem:[#allocation2 + $0xa98] sm:$0xff]
    %v3591 = vld [vmem:[#allocation2 + $0xaa0] sm:$0xff]
    %v3592 = vld [vmem:[#allocation2 + $0xaa8] sm:$0xff]
    %v3593 = vld [vmem:[#allocation2 + $0xab0] sm:$0xff]
    %v3594 = vld [vmem:[#allocation2 + $0xab8] sm:$0xff]
    %v3595 = vld [vmem:[#allocation2 + $0xac0] sm:$0xff]
    %v3596 = vld [vmem:[#allocation2 + $0xac8] sm:$0xff]
    %v3597 = vld [vmem:[#allocation2 + $0xad0] sm:$0xff]
    %v3598 = vld [vmem:[#allocation2 + $0xad8] sm:$0xff]
    %v3599 = vld [vmem:[#allocation2 + $0xae0] sm:$0xff]
    %v3600 = vld [vmem:[#allocation2 + $0xae8] sm:$0xff]
    %v3601 = vld [vmem:[#allocation2 + $0xaf0] sm:$0xff]
    %v3602 = vld [vmem:[#allocation2 + $0xaf8] sm:$0xff]
    %3603 = vmatprep.subr.mxu0 0.0
    %3604 = vmatpush1.msra.mxu0 %v3601
    %3605 = vmatprep.subr.mxu0 0.0
    %3606 = vmatpush1.msra.mxu0 %v3600
    %3607 = vmatprep.subr.mxu0 0.0
    %3608 = vmatpush1.msra.mxu0 %v3599
    %3609 = vmatprep.subr.mxu0 0.0
    %3610 = vmatpush1.msra.mxu0 %v3598
    %3611 = vmatprep.subr.mxu0 0.0
    %3612 = vmatpush1.msra.mxu0 %v3597
    %3613 = vmatprep.subr.mxu0 0.0
    %3614 = vmatpush1.msra.mxu0 %v3596
    %3615 = vmatprep.subr.mxu0 0.0
    %3616 = vmatpush1.msra.mxu0 %v3595
    %3617 = vmatprep.subr.mxu0 0.0
    %3618 = vmatpush1.msra.mxu0 %v3594
    %3619 = vmatprep.subr.mxu0 0.0
    %3620 = vmatpush1.msra.mxu0 %v3593
    %3621 = vmatprep.subr.mxu0 0.0
    %3622 = vmatpush1.msra.mxu0 %v3592
    %3623 = vmatprep.subr.mxu0 0.0
    %3624 = vmatpush1.msra.mxu0 %v3591
    %3625 = vmatprep.subr.mxu0 0.0
    %3626 = vmatpush1.msra.mxu0 %v3590
    %3627 = vmatprep.subr.mxu0 0.0
    %3628 = vmatpush1.msra.mxu0 %v3589
    %3629 = vmatprep.subr.mxu0 0.0
    %3630 = vmatpush1.msra.mxu0 %v3588
    %3631 = vmatprep.subr.mxu0 0.0
    %3632 = vmatpush1.msra.mxu0 %v3587
    %3633 = vmatprep.subr.mxu0 0.0
    %3634 = vmatpush1.msra.mxu0 %v3586
    %3635 = vmatprep.subr.mxu0 0.0
    %3636 = vmatpush2.msra.mxu0 0.0
    %3637 = vmatprep.subr.mxu0 0.0
    %3638 = vmatpush2.msra.mxu0 0.0
    %3639 = vmatprep.subr.mxu0 0.0
    %3640 = vmatpush2.msra.mxu0 0.0
    %3641 = vmatprep.subr.mxu0 0.0
    %3642 = vmatpush2.msra.mxu0 0.0
    %3643 = vmatprep.subr.mxu0 0.0
    %3644 = vmatpush2.msra.mxu0 0.0
    %3645 = vmatprep.subr.mxu0 0.0
    %3646 = vmatpush2.msra.mxu0 0.0
    %3647 = vmatprep.subr.mxu0 0.0
    %3648 = vmatpush2.msra.mxu0 0.0
    %3649 = vmatprep.subr.mxu0 0.0
    %3650 = vmatpush2.msra.mxu0 0.0
    %3651 = vmatprep.subr.mxu0 0.0
    %3652 = vmatpush2.msra.mxu0 0.0
    %3653 = vmatprep.subr.mxu0 0.0
    %3654 = vmatpush2.msra.mxu0 0.0
    %3655 = vmatprep.subr.mxu0 0.0
    %3656 = vmatpush2.msra.mxu0 0.0
    %3657 = vmatprep.subr.mxu0 0.0
    %3658 = vmatpush2.msra.mxu0 0.0
    %3659 = vmatprep.subr.mxu0 0.0
    %3660 = vmatpush2.msra.mxu0 0.0
    %3661 = vmatprep.subr.mxu0 0.0
    %3662 = vmatpush2.msra.mxu0 0.0
    %3663 = vmatprep.subr.mxu0 0.0
    %3664 = vmatpush2.msra.mxu0 0.0
    %3665 = vmatprep.subr.mxu0 0.0
    %3666 = vmatpush2.msra.mxu0 0.0
    %3667 = vmatprep.mubr.f32.mxu0 0.0
    %3668 = vmatmul.mubr.f32.gmra.mxu0 %v3585
    %v3669 = vpop.f32.mrf.mxu0
    %v3670 = vadd.f32 %v3602, %v3669
    %v3671 = vpop.f32.mrf.mxu0
    %3672 = vdwg.mxu0
    %3674 = vset.pattern.permute.xlu0 0
    %3675 = vperm.xlu0 %3674, %v3670
    %v3676 = vpop.permute.xlu0 %3675
    %v3678 = vld [vmem:[#allocation2 + $0x640] sm:$0xff]
    %v3679 = vld [vmem:[#allocation2 + $0x648] sm:$0xff]
    %v3680 = vld [vmem:[#allocation2 + $0x650] sm:$0xff]
    %v3681 = vld [vmem:[#allocation2 + $0x658] sm:$0xff]
    %v3682 = vld [vmem:[#allocation2 + $0x660] sm:$0xff]
    %v3683 = vld [vmem:[#allocation2 + $0x668] sm:$0xff]
    %v3684 = vld [vmem:[#allocation2 + $0x670] sm:$0xff]
    %v3685 = vld [vmem:[#allocation2 + $0x678] sm:$0xff]
    %v3686 = vld [vmem:[#allocation2 + $0x680] sm:$0xff]
    %v3687 = vld [vmem:[#allocation2 + $0x688] sm:$0xff]
    %v3688 = vld [vmem:[#allocation2 + $0x690] sm:$0xff]
    %v3689 = vld [vmem:[#allocation2 + $0x698] sm:$0xff]
    %v3690 = vld [vmem:[#allocation2 + $0x6a0] sm:$0xff]
    %v3691 = vld [vmem:[#allocation2 + $0x6a8] sm:$0xff]
    %v3692 = vld [vmem:[#allocation2 + $0x6b0] sm:$0xff]
    %v3693 = vld [vmem:[#allocation2 + $0x6b8] sm:$0xff]
    %v3694 = vld [vmem:[#allocation2 + $0x6c0] sm:$0xff]
    %v3695 = vld [vmem:[#allocation2 + $0x6c8] sm:$0xff]
    %v3696 = vld [vmem:[#allocation2 + $0x6d0] sm:$0xff]
    %v3697 = vld [vmem:[#allocation2 + $0x6d8] sm:$0xff]
    %v3698 = vld [vmem:[#allocation2 + $0x6e0] sm:$0xff]
    %v3699 = vld [vmem:[#allocation2 + $0x6e8] sm:$0xff]
    %v3700 = vld [vmem:[#allocation2 + $0x6f0] sm:$0xff]
    %v3701 = vld [vmem:[#allocation2 + $0x6f8] sm:$0xff]
    %v3702 = vld [vmem:[#allocation2 + $0x700] sm:$0xff]
    %v3703 = vld [vmem:[#allocation2 + $0x708] sm:$0xff]
    %v3704 = vld [vmem:[#allocation2 + $0x710] sm:$0xff]
    %v3705 = vld [vmem:[#allocation2 + $0x718] sm:$0xff]
    %v3706 = vld [vmem:[#allocation2 + $0x720] sm:$0xff]
    %v3707 = vld [vmem:[#allocation2 + $0x728] sm:$0xff]
    %v3708 = vld [vmem:[#allocation2 + $0x730] sm:$0xff]
    %v3709 = vld [vmem:[#allocation2 + $0x738] sm:$0xff]
    %v3710 = vld [vmem:[#allocation2 + $0x740] sm:$0xff]
    %3711 = vmatprep.subr.mxu0 0.0
    %3712 = vmatpush1.msra.mxu0 %v3693
    %3713 = vmatprep.subr.mxu0 0.0
    %3714 = vmatpush1.msra.mxu0 %v3692
    %3715 = vmatprep.subr.mxu0 0.0
    %3716 = vmatpush1.msra.mxu0 %v3691
    %3717 = vmatprep.subr.mxu0 0.0
    %3718 = vmatpush1.msra.mxu0 %v3690
    %3719 = vmatprep.subr.mxu0 0.0
    %3720 = vmatpush1.msra.mxu0 %v3689
    %3721 = vmatprep.subr.mxu0 0.0
    %3722 = vmatpush1.msra.mxu0 %v3688
    %3723 = vmatprep.subr.mxu0 0.0
    %3724 = vmatpush1.msra.mxu0 %v3687
    %3725 = vmatprep.subr.mxu0 0.0
    %3726 = vmatpush1.msra.mxu0 %v3686
    %3727 = vmatprep.subr.mxu0 0.0
    %3728 = vmatpush1.msra.mxu0 %v3685
    %3729 = vmatprep.subr.mxu0 0.0
    %3730 = vmatpush1.msra.mxu0 %v3684
    %3731 = vmatprep.subr.mxu0 0.0
    %3732 = vmatpush1.msra.mxu0 %v3683
    %3733 = vmatprep.subr.mxu0 0.0
    %3734 = vmatpush1.msra.mxu0 %v3682
    %3735 = vmatprep.subr.mxu0 0.0
    %3736 = vmatpush1.msra.mxu0 %v3681
    %3737 = vmatprep.subr.mxu0 0.0
    %3738 = vmatpush1.msra.mxu0 %v3680
    %3739 = vmatprep.subr.mxu0 0.0
    %3740 = vmatpush1.msra.mxu0 %v3679
    %3741 = vmatprep.subr.mxu0 0.0
    %3742 = vmatpush1.msra.mxu0 %v3678
    %3743 = vmatprep.subr.mxu0 0.0
    %3744 = vmatpush2.msra.mxu0 %v3709
    %3745 = vmatprep.subr.mxu0 0.0
    %3746 = vmatpush2.msra.mxu0 %v3708
    %3747 = vmatprep.subr.mxu0 0.0
    %3748 = vmatpush2.msra.mxu0 %v3707
    %3749 = vmatprep.subr.mxu0 0.0
    %3750 = vmatpush2.msra.mxu0 %v3706
    %3751 = vmatprep.subr.mxu0 0.0
    %3752 = vmatpush2.msra.mxu0 %v3705
    %3753 = vmatprep.subr.mxu0 0.0
    %3754 = vmatpush2.msra.mxu0 %v3704
    %3755 = vmatprep.subr.mxu0 0.0
    %3756 = vmatpush2.msra.mxu0 %v3703
    %3757 = vmatprep.subr.mxu0 0.0
    %3758 = vmatpush2.msra.mxu0 %v3702
    %3759 = vmatprep.subr.mxu0 0.0
    %3760 = vmatpush2.msra.mxu0 %v3701
    %3761 = vmatprep.subr.mxu0 0.0
    %3762 = vmatpush2.msra.mxu0 %v3700
    %3763 = vmatprep.subr.mxu0 0.0
    %3764 = vmatpush2.msra.mxu0 %v3699
    %3765 = vmatprep.subr.mxu0 0.0
    %3766 = vmatpush2.msra.mxu0 %v3698
    %3767 = vmatprep.subr.mxu0 0.0
    %3768 = vmatpush2.msra.mxu0 %v3697
    %3769 = vmatprep.subr.mxu0 0.0
    %3770 = vmatpush2.msra.mxu0 %v3696
    %3771 = vmatprep.subr.mxu0 0.0
    %3772 = vmatpush2.msra.mxu0 %v3695
    %3773 = vmatprep.subr.mxu0 0.0
    %3774 = vmatpush2.msra.mxu0 %v3694
    %3775 = vmatprep.mubr.f32.mxu0 %v3676
    %3776 = vmatmul.mubr.f32.gmra.mxu0 %v3676
    %v3777 = vpop.f32.mrf.mxu0
    %v3778 = vadd.f32 %v3710, %v3777
    %v3779 = vpop.f32.mrf.mxu0
    %3780 = vdwg.mxu0
    %v3781 = vmax.f32 %v3778, 0.0
    %v3782 = vld [vmem:[#allocation2 + $0x748] sm:$0xff]
    %v3783 = vld [vmem:[#allocation2 + $0x750] sm:$0xff]
    %v3784 = vld [vmem:[#allocation2 + $0x758] sm:$0xff]
    %v3785 = vld [vmem:[#allocation2 + $0x760] sm:$0xff]
    %v3786 = vld [vmem:[#allocation2 + $0x768] sm:$0xff]
    %v3787 = vld [vmem:[#allocation2 + $0x770] sm:$0xff]
    %v3788 = vld [vmem:[#allocation2 + $0x778] sm:$0xff]
    %v3789 = vld [vmem:[#allocation2 + $0x780] sm:$0xff]
    %v3790 = vld [vmem:[#allocation2 + $0x788] sm:$0xff]
    %v3791 = vld [vmem:[#allocation2 + $0x790] sm:$0xff]
    %v3792 = vld [vmem:[#allocation2 + $0x798] sm:$0xff]
    %v3793 = vld [vmem:[#allocation2 + $0x7a0] sm:$0xff]
    %v3794 = vld [vmem:[#allocation2 + $0x7a8] sm:$0xff]
    %v3795 = vld [vmem:[#allocation2 + $0x7b0] sm:$0xff]
    %v3796 = vld [vmem:[#allocation2 + $0x7b8] sm:$0xff]
    %v3797 = vld [vmem:[#allocation2 + $0x7c0] sm:$0xff]
    %v3798 = vld [vmem:[#allocation2 + $0x7c8] sm:$0xff]
    %3799 = vmatprep.subr.mxu0 0.0
    %3800 = vmatpush1.msra.mxu0 %v3797
    %3801 = vmatprep.subr.mxu0 0.0
    %3802 = vmatpush1.msra.mxu0 %v3796
    %3803 = vmatprep.subr.mxu0 0.0
    %3804 = vmatpush1.msra.mxu0 %v3795
    %3805 = vmatprep.subr.mxu0 0.0
    %3806 = vmatpush1.msra.mxu0 %v3794
    %3807 = vmatprep.subr.mxu0 0.0
    %3808 = vmatpush1.msra.mxu0 %v3793
    %3809 = vmatprep.subr.mxu0 0.0
    %3810 = vmatpush1.msra.mxu0 %v3792
    %3811 = vmatprep.subr.mxu0 0.0
    %3812 = vmatpush1.msra.mxu0 %v3791
    %3813 = vmatprep.subr.mxu0 0.0
    %3814 = vmatpush1.msra.mxu0 %v3790
    %3815 = vmatprep.subr.mxu0 0.0
    %3816 = vmatpush1.msra.mxu0 %v3789
    %3817 = vmatprep.subr.mxu0 0.0
    %3818 = vmatpush1.msra.mxu0 %v3788
    %3819 = vmatprep.subr.mxu0 0.0
    %3820 = vmatpush1.msra.mxu0 %v3787
    %3821 = vmatprep.subr.mxu0 0.0
    %3822 = vmatpush1.msra.mxu0 %v3786
    %3823 = vmatprep.subr.mxu0 0.0
    %3824 = vmatpush1.msra.mxu0 %v3785
    %3825 = vmatprep.subr.mxu0 0.0
    %3826 = vmatpush1.msra.mxu0 %v3784
    %3827 = vmatprep.subr.mxu0 0.0
    %3828 = vmatpush1.msra.mxu0 %v3783
    %3829 = vmatprep.subr.mxu0 0.0
    %3830 = vmatpush1.msra.mxu0 %v3782
    %3831 = vmatprep.subr.mxu0 0.0
    %3832 = vmatpush2.msra.mxu0 0.0
    %3833 = vmatprep.subr.mxu0 0.0
    %3834 = vmatpush2.msra.mxu0 0.0
    %3835 = vmatprep.subr.mxu0 0.0
    %3836 = vmatpush2.msra.mxu0 0.0
    %3837 = vmatprep.subr.mxu0 0.0
    %3838 = vmatpush2.msra.mxu0 0.0
    %3839 = vmatprep.subr.mxu0 0.0
    %3840 = vmatpush2.msra.mxu0 0.0
    %3841 = vmatprep.subr.mxu0 0.0
    %3842 = vmatpush2.msra.mxu0 0.0
    %3843 = vmatprep.subr.mxu0 0.0
    %3844 = vmatpush2.msra.mxu0 0.0
    %3845 = vmatprep.subr.mxu0 0.0
    %3846 = vmatpush2.msra.mxu0 0.0
    %3847 = vmatprep.subr.mxu0 0.0
    %3848 = vmatpush2.msra.mxu0 0.0
    %3849 = vmatprep.subr.mxu0 0.0
    %3850 = vmatpush2.msra.mxu0 0.0
    %3851 = vmatprep.subr.mxu0 0.0
    %3852 = vmatpush2.msra.mxu0 0.0
    %3853 = vmatprep.subr.mxu0 0.0
    %3854 = vmatpush2.msra.mxu0 0.0
    %3855 = vmatprep.subr.mxu0 0.0
    %3856 = vmatpush2.msra.mxu0 0.0
    %3857 = vmatprep.subr.mxu0 0.0
    %3858 = vmatpush2.msra.mxu0 0.0
    %3859 = vmatprep.subr.mxu0 0.0
    %3860 = vmatpush2.msra.mxu0 0.0
    %3861 = vmatprep.subr.mxu0 0.0
    %3862 = vmatpush2.msra.mxu0 0.0
    %3863 = vmatprep.mubr.f32.mxu0 0.0
    %3864 = vmatmul.mubr.f32.gmra.mxu0 %v3781
    %v3865 = vpop.f32.mrf.mxu0
    %v3866 = vadd.f32 %v3798, %v3865
    %v3867 = vpop.f32.mrf.mxu0
    %3868 = vdwg.mxu0
    %v3869 = vmax.f32 %v3866, 0.0
    %v3870 = vld [vmem:[#allocation2 + $0x7d0] sm:$0xff]
    %v3871 = vld [vmem:[#allocation2 + $0x7d8] sm:$0xff]
    %v3872 = vld [vmem:[#allocation2 + $0x7e0] sm:$0xff]
    %v3873 = vld [vmem:[#allocation2 + $0x7e8] sm:$0xff]
    %v3874 = vld [vmem:[#allocation2 + $0x7f0] sm:$0xff]
    %v3875 = vld [vmem:[#allocation2 + $0x7f8] sm:$0xff]
    %v3876 = vld [vmem:[#allocation2 + $0x800] sm:$0xff]
    %v3877 = vld [vmem:[#allocation2 + $0x808] sm:$0xff]
    %v3878 = vld [vmem:[#allocation2 + $0x810] sm:$0xff]
    %v3879 = vld [vmem:[#allocation2 + $0x818] sm:$0xff]
    %v3880 = vld [vmem:[#allocation2 + $0x820] sm:$0xff]
    %v3881 = vld [vmem:[#allocation2 + $0x828] sm:$0xff]
    %v3882 = vld [vmem:[#allocation2 + $0x830] sm:$0xff]
    %v3883 = vld [vmem:[#allocation2 + $0x838] sm:$0xff]
    %v3884 = vld [vmem:[#allocation2 + $0x840] sm:$0xff]
    %v3885 = vld [vmem:[#allocation2 + $0x848] sm:$0xff]
    %v3886 = vld [vmem:[#allocation2 + $0x850] sm:$0xff]
    %3887 = vmatprep.subr.mxu0 0.0
    %3888 = vmatpush1.msra.mxu0 %v3885
    %3889 = vmatprep.subr.mxu0 0.0
    %3890 = vmatpush1.msra.mxu0 %v3884
    %3891 = vmatprep.subr.mxu0 0.0
    %3892 = vmatpush1.msra.mxu0 %v3883
    %3893 = vmatprep.subr.mxu0 0.0
    %3894 = vmatpush1.msra.mxu0 %v3882
    %3895 = vmatprep.subr.mxu0 0.0
    %3896 = vmatpush1.msra.mxu0 %v3881
    %3897 = vmatprep.subr.mxu0 0.0
    %3898 = vmatpush1.msra.mxu0 %v3880
    %3899 = vmatprep.subr.mxu0 0.0
    %3900 = vmatpush1.msra.mxu0 %v3879
    %3901 = vmatprep.subr.mxu0 0.0
    %3902 = vmatpush1.msra.mxu0 %v3878
    %3903 = vmatprep.subr.mxu0 0.0
    %3904 = vmatpush1.msra.mxu0 %v3877
    %3905 = vmatprep.subr.mxu0 0.0
    %3906 = vmatpush1.msra.mxu0 %v3876
    %3907 = vmatprep.subr.mxu0 0.0
    %3908 = vmatpush1.msra.mxu0 %v3875
    %3909 = vmatprep.subr.mxu0 0.0
    %3910 = vmatpush1.msra.mxu0 %v3874
    %3911 = vmatprep.subr.mxu0 0.0
    %3912 = vmatpush1.msra.mxu0 %v3873
    %3913 = vmatprep.subr.mxu0 0.0
    %3914 = vmatpush1.msra.mxu0 %v3872
    %3915 = vmatprep.subr.mxu0 0.0
    %3916 = vmatpush1.msra.mxu0 %v3871
    %3917 = vmatprep.subr.mxu0 0.0
    %3918 = vmatpush1.msra.mxu0 %v3870
    %3919 = vmatprep.subr.mxu0 0.0
    %3920 = vmatpush2.msra.mxu0 0.0
    %3921 = vmatprep.subr.mxu0 0.0
    %3922 = vmatpush2.msra.mxu0 0.0
    %3923 = vmatprep.subr.mxu0 0.0
    %3924 = vmatpush2.msra.mxu0 0.0
    %3925 = vmatprep.subr.mxu0 0.0
    %3926 = vmatpush2.msra.mxu0 0.0
    %3927 = vmatprep.subr.mxu0 0.0
    %3928 = vmatpush2.msra.mxu0 0.0
    %3929 = vmatprep.subr.mxu0 0.0
    %3930 = vmatpush2.msra.mxu0 0.0
    %3931 = vmatprep.subr.mxu0 0.0
    %3932 = vmatpush2.msra.mxu0 0.0
    %3933 = vmatprep.subr.mxu0 0.0
    %3934 = vmatpush2.msra.mxu0 0.0
    %3935 = vmatprep.subr.mxu0 0.0
    %3936 = vmatpush2.msra.mxu0 0.0
    %3937 = vmatprep.subr.mxu0 0.0
    %3938 = vmatpush2.msra.mxu0 0.0
    %3939 = vmatprep.subr.mxu0 0.0
    %3940 = vmatpush2.msra.mxu0 0.0
    %3941 = vmatprep.subr.mxu0 0.0
    %3942 = vmatpush2.msra.mxu0 0.0
    %3943 = vmatprep.subr.mxu0 0.0
    %3944 = vmatpush2.msra.mxu0 0.0
    %3945 = vmatprep.subr.mxu0 0.0
    %3946 = vmatpush2.msra.mxu0 0.0
    %3947 = vmatprep.subr.mxu0 0.0
    %3948 = vmatpush2.msra.mxu0 0.0
    %3949 = vmatprep.subr.mxu0 0.0
    %3950 = vmatpush2.msra.mxu0 0.0
    %3951 = vmatprep.mubr.f32.mxu0 0.0
    %3952 = vmatmul.mubr.f32.gmra.mxu0 %v3869
    %v3953 = vpop.f32.mrf.mxu0
    %v3954 = vadd.f32 %v3886, %v3953
    %v3955 = vpop.f32.mrf.mxu0
    %3956 = vdwg.mxu0
    %v3957 = vmax.f32 %v3954, 0.0
    %v3958 = vld [vmem:[#allocation2 + $0x858] sm:$0xff]
    %v3959 = vld [vmem:[#allocation2 + $0x860] sm:$0xff]
    %v3960 = vld [vmem:[#allocation2 + $0x868] sm:$0xff]
    %v3961 = vld [vmem:[#allocation2 + $0x870] sm:$0xff]
    %v3962 = vld [vmem:[#allocation2 + $0x878] sm:$0xff]
    %v3963 = vld [vmem:[#allocation2 + $0x880] sm:$0xff]
    %v3964 = vld [vmem:[#allocation2 + $0x888] sm:$0xff]
    %v3965 = vld [vmem:[#allocation2 + $0x890] sm:$0xff]
    %v3966 = vld [vmem:[#allocation2 + $0x898] sm:$0xff]
    %v3967 = vld [vmem:[#allocation2 + $0x8a0] sm:$0xff]
    %v3968 = vld [vmem:[#allocation2 + $0x8a8] sm:$0xff]
    %v3969 = vld [vmem:[#allocation2 + $0x8b0] sm:$0xff]
    %v3970 = vld [vmem:[#allocation2 + $0x8b8] sm:$0xff]
    %v3971 = vld [vmem:[#allocation2 + $0x8c0] sm:$0xff]
    %v3972 = vld [vmem:[#allocation2 + $0x8c8] sm:$0xff]
    %v3973 = vld [vmem:[#allocation2 + $0x8d0] sm:$0xff]
    %v3974 = vld [vmem:[#allocation2 + $0x8d8] sm:$0xff]
    %3975 = vmatprep.subr.mxu0 0.0
    %3976 = vmatpush1.msra.mxu0 %v3973
    %3977 = vmatprep.subr.mxu0 0.0
    %3978 = vmatpush1.msra.mxu0 %v3972
    %3979 = vmatprep.subr.mxu0 0.0
    %3980 = vmatpush1.msra.mxu0 %v3971
    %3981 = vmatprep.subr.mxu0 0.0
    %3982 = vmatpush1.msra.mxu0 %v3970
    %3983 = vmatprep.subr.mxu0 0.0
    %3984 = vmatpush1.msra.mxu0 %v3969
    %3985 = vmatprep.subr.mxu0 0.0
    %3986 = vmatpush1.msra.mxu0 %v3968
    %3987 = vmatprep.subr.mxu0 0.0
    %3988 = vmatpush1.msra.mxu0 %v3967
    %3989 = vmatprep.subr.mxu0 0.0
    %3990 = vmatpush1.msra.mxu0 %v3966
    %3991 = vmatprep.subr.mxu0 0.0
    %3992 = vmatpush1.msra.mxu0 %v3965
    %3993 = vmatprep.subr.mxu0 0.0
    %3994 = vmatpush1.msra.mxu0 %v3964
    %3995 = vmatprep.subr.mxu0 0.0
    %3996 = vmatpush1.msra.mxu0 %v3963
    %3997 = vmatprep.subr.mxu0 0.0
    %3998 = vmatpush1.msra.mxu0 %v3962
    %3999 = vmatprep.subr.mxu0 0.0
    %4000 = vmatpush1.msra.mxu0 %v3961
    %4001 = vmatprep.subr.mxu0 0.0
    %4002 = vmatpush1.msra.mxu0 %v3960
    %4003 = vmatprep.subr.mxu0 0.0
    %4004 = vmatpush1.msra.mxu0 %v3959
    %4005 = vmatprep.subr.mxu0 0.0
    %4006 = vmatpush1.msra.mxu0 %v3958
    %4007 = vmatprep.subr.mxu0 0.0
    %4008 = vmatpush2.msra.mxu0 0.0
    %4009 = vmatprep.subr.mxu0 0.0
    %4010 = vmatpush2.msra.mxu0 0.0
    %4011 = vmatprep.subr.mxu0 0.0
    %4012 = vmatpush2.msra.mxu0 0.0
    %4013 = vmatprep.subr.mxu0 0.0
    %4014 = vmatpush2.msra.mxu0 0.0
    %4015 = vmatprep.subr.mxu0 0.0
    %4016 = vmatpush2.msra.mxu0 0.0
    %4017 = vmatprep.subr.mxu0 0.0
    %4018 = vmatpush2.msra.mxu0 0.0
    %4019 = vmatprep.subr.mxu0 0.0
    %4020 = vmatpush2.msra.mxu0 0.0
    %4021 = vmatprep.subr.mxu0 0.0
    %4022 = vmatpush2.msra.mxu0 0.0
    %4023 = vmatprep.subr.mxu0 0.0
    %4024 = vmatpush2.msra.mxu0 0.0
    %4025 = vmatprep.subr.mxu0 0.0
    %4026 = vmatpush2.msra.mxu0 0.0
    %4027 = vmatprep.subr.mxu0 0.0
    %4028 = vmatpush2.msra.mxu0 0.0
    %4029 = vmatprep.subr.mxu0 0.0
    %4030 = vmatpush2.msra.mxu0 0.0
    %4031 = vmatprep.subr.mxu0 0.0
    %4032 = vmatpush2.msra.mxu0 0.0
    %4033 = vmatprep.subr.mxu0 0.0
    %4034 = vmatpush2.msra.mxu0 0.0
    %4035 = vmatprep.subr.mxu0 0.0
    %4036 = vmatpush2.msra.mxu0 0.0
    %4037 = vmatprep.subr.mxu0 0.0
    %4038 = vmatpush2.msra.mxu0 0.0
    %4039 = vmatprep.mubr.f32.mxu0 0.0
    %4040 = vmatmul.mubr.f32.gmra.mxu0 %v3957
    %v4041 = vpop.f32.mrf.mxu0
    %v4042 = vadd.f32 %v3974, %v4041
    %v4043 = vpop.f32.mrf.mxu0
    %4044 = vdwg.mxu0
    %v4045 = vmax.f32 %v4042, 0.0
    %v4046 = vld [vmem:[#allocation2 + $0xb00] sm:$0xff]
    %v4047 = vld [vmem:[#allocation2 + $0xb08] sm:$0xff]
    %v4048 = vld [vmem:[#allocation2 + $0xb10] sm:$0xff]
    %v4049 = vld [vmem:[#allocation2 + $0xb18] sm:$0xff]
    %v4050 = vld [vmem:[#allocation2 + $0xb20] sm:$0xff]
    %v4051 = vld [vmem:[#allocation2 + $0xb28] sm:$0xff]
    %v4052 = vld [vmem:[#allocation2 + $0xb30] sm:$0xff]
    %v4053 = vld [vmem:[#allocation2 + $0xb38] sm:$0xff]
    %v4054 = vld [vmem:[#allocation2 + $0xb40] sm:$0xff]
    %v4055 = vld [vmem:[#allocation2 + $0xb48] sm:$0xff]
    %v4056 = vld [vmem:[#allocation2 + $0xb50] sm:$0xff]
    %v4057 = vld [vmem:[#allocation2 + $0xb58] sm:$0xff]
    %v4058 = vld [vmem:[#allocation2 + $0xb60] sm:$0xff]
    %v4059 = vld [vmem:[#allocation2 + $0xb68] sm:$0xff]
    %v4060 = vld [vmem:[#allocation2 + $0xb70] sm:$0xff]
    %v4061 = vld [vmem:[#allocation2 + $0xb78] sm:$0xff]
    %v4062 = vld [vmem:[#allocation2 + $0xb80] sm:$0xff]
    %4063 = vmatprep.subr.mxu0 0.0
    %4064 = vmatpush1.msra.mxu0 %v4061
    %4065 = vmatprep.subr.mxu0 0.0
    %4066 = vmatpush1.msra.mxu0 %v4060
    %4067 = vmatprep.subr.mxu0 0.0
    %4068 = vmatpush1.msra.mxu0 %v4059
    %4069 = vmatprep.subr.mxu0 0.0
    %4070 = vmatpush1.msra.mxu0 %v4058
    %4071 = vmatprep.subr.mxu0 0.0
    %4072 = vmatpush1.msra.mxu0 %v4057
    %4073 = vmatprep.subr.mxu0 0.0
    %4074 = vmatpush1.msra.mxu0 %v4056
    %4075 = vmatprep.subr.mxu0 0.0
    %4076 = vmatpush1.msra.mxu0 %v4055
    %4077 = vmatprep.subr.mxu0 0.0
    %4078 = vmatpush1.msra.mxu0 %v4054
    %4079 = vmatprep.subr.mxu0 0.0
    %4080 = vmatpush1.msra.mxu0 %v4053
    %4081 = vmatprep.subr.mxu0 0.0
    %4082 = vmatpush1.msra.mxu0 %v4052
    %4083 = vmatprep.subr.mxu0 0.0
    %4084 = vmatpush1.msra.mxu0 %v4051
    %4085 = vmatprep.subr.mxu0 0.0
    %4086 = vmatpush1.msra.mxu0 %v4050
    %4087 = vmatprep.subr.mxu0 0.0
    %4088 = vmatpush1.msra.mxu0 %v4049
    %4089 = vmatprep.subr.mxu0 0.0
    %4090 = vmatpush1.msra.mxu0 %v4048
    %4091 = vmatprep.subr.mxu0 0.0
    %4092 = vmatpush1.msra.mxu0 %v4047
    %4093 = vmatprep.subr.mxu0 0.0
    %4094 = vmatpush1.msra.mxu0 %v4046
    %4095 = vmatprep.subr.mxu0 0.0
    %4096 = vmatpush2.msra.mxu0 0.0
    %4097 = vmatprep.subr.mxu0 0.0
    %4098 = vmatpush2.msra.mxu0 0.0
    %4099 = vmatprep.subr.mxu0 0.0
    %4100 = vmatpush2.msra.mxu0 0.0
    %4101 = vmatprep.subr.mxu0 0.0
    %4102 = vmatpush2.msra.mxu0 0.0
    %4103 = vmatprep.subr.mxu0 0.0
    %4104 = vmatpush2.msra.mxu0 0.0
    %4105 = vmatprep.subr.mxu0 0.0
    %4106 = vmatpush2.msra.mxu0 0.0
    %4107 = vmatprep.subr.mxu0 0.0
    %4108 = vmatpush2.msra.mxu0 0.0
    %4109 = vmatprep.subr.mxu0 0.0
    %4110 = vmatpush2.msra.mxu0 0.0
    %4111 = vmatprep.subr.mxu0 0.0
    %4112 = vmatpush2.msra.mxu0 0.0
    %4113 = vmatprep.subr.mxu0 0.0
    %4114 = vmatpush2.msra.mxu0 0.0
    %4115 = vmatprep.subr.mxu0 0.0
    %4116 = vmatpush2.msra.mxu0 0.0
    %4117 = vmatprep.subr.mxu0 0.0
    %4118 = vmatpush2.msra.mxu0 0.0
    %4119 = vmatprep.subr.mxu0 0.0
    %4120 = vmatpush2.msra.mxu0 0.0
    %4121 = vmatprep.subr.mxu0 0.0
    %4122 = vmatpush2.msra.mxu0 0.0
    %4123 = vmatprep.subr.mxu0 0.0
    %4124 = vmatpush2.msra.mxu0 0.0
    %4125 = vmatprep.subr.mxu0 0.0
    %4126 = vmatpush2.msra.mxu0 0.0
    %4127 = vmatprep.mubr.f32.mxu0 0.0
    %4128 = vmatmul.mubr.f32.gmra.mxu0 %v4045
    %v4129 = vpop.f32.mrf.mxu0
    %v4130 = vadd.f32 %v4062, %v4129
    %v4131 = vpop.f32.mrf.mxu0
    %4132 = vdwg.mxu0
    %v4133 = vxor.u32 %v4130, 2147483648
    %v4134 = vmul.f32 %v4133, 1.442695
    %v4135 = vpow.pop %v4134
    %v4136 = vadd.f32 %v4135, 1.0
    %v4137 = vrcp.pop %v4136
    %v4138 = vmul.f32 1.0, %v4137
    %v4139 = vld [vmem:[#allocation2 + $0xb88] sm:$0xff]
    %v4140 = vld [vmem:[#allocation2 + $0xb90] sm:$0xff]
    %v4141 = vld [vmem:[#allocation2 + $0xb98] sm:$0xff]
    %v4142 = vld [vmem:[#allocation2 + $0xba0] sm:$0xff]
    %v4143 = vld [vmem:[#allocation2 + $0xba8] sm:$0xff]
    %v4144 = vld [vmem:[#allocation2 + $0xbb0] sm:$0xff]
    %v4145 = vld [vmem:[#allocation2 + $0xbb8] sm:$0xff]
    %v4146 = vld [vmem:[#allocation2 + $0xbc0] sm:$0xff]
    %v4147 = vld [vmem:[#allocation2 + $0xbc8] sm:$0xff]
    %v4148 = vld [vmem:[#allocation2 + $0xbd0] sm:$0xff]
    %v4149 = vld [vmem:[#allocation2 + $0xbd8] sm:$0xff]
    %v4150 = vld [vmem:[#allocation2 + $0xbe0] sm:$0xff]
    %v4151 = vld [vmem:[#allocation2 + $0xbe8] sm:$0xff]
    %v4152 = vld [vmem:[#allocation2 + $0xbf0] sm:$0xff]
    %v4153 = vld [vmem:[#allocation2 + $0xbf8] sm:$0xff]
    %v4154 = vld [vmem:[#allocation2 + $0xc00] sm:$0xff]
    %v4155 = vld [vmem:[#allocation2 + $0xc08] sm:$0xff]
    %4156 = vmatprep.subr.mxu0 0.0
    %4157 = vmatpush1.msra.mxu0 %v4154
    %4158 = vmatprep.subr.mxu0 0.0
    %4159 = vmatpush1.msra.mxu0 %v4153
    %4160 = vmatprep.subr.mxu0 0.0
    %4161 = vmatpush1.msra.mxu0 %v4152
    %4162 = vmatprep.subr.mxu0 0.0
    %4163 = vmatpush1.msra.mxu0 %v4151
    %4164 = vmatprep.subr.mxu0 0.0
    %4165 = vmatpush1.msra.mxu0 %v4150
    %4166 = vmatprep.subr.mxu0 0.0
    %4167 = vmatpush1.msra.mxu0 %v4149
    %4168 = vmatprep.subr.mxu0 0.0
    %4169 = vmatpush1.msra.mxu0 %v4148
    %4170 = vmatprep.subr.mxu0 0.0
    %4171 = vmatpush1.msra.mxu0 %v4147
    %4172 = vmatprep.subr.mxu0 0.0
    %4173 = vmatpush1.msra.mxu0 %v4146
    %4174 = vmatprep.subr.mxu0 0.0
    %4175 = vmatpush1.msra.mxu0 %v4145
    %4176 = vmatprep.subr.mxu0 0.0
    %4177 = vmatpush1.msra.mxu0 %v4144
    %4178 = vmatprep.subr.mxu0 0.0
    %4179 = vmatpush1.msra.mxu0 %v4143
    %4180 = vmatprep.subr.mxu0 0.0
    %4181 = vmatpush1.msra.mxu0 %v4142
    %4182 = vmatprep.subr.mxu0 0.0
    %4183 = vmatpush1.msra.mxu0 %v4141
    %4184 = vmatprep.subr.mxu0 0.0
    %4185 = vmatpush1.msra.mxu0 %v4140
    %4186 = vmatprep.subr.mxu0 0.0
    %4187 = vmatpush1.msra.mxu0 %v4139
    %4188 = vmatprep.subr.mxu0 0.0
    %4189 = vmatpush2.msra.mxu0 0.0
    %4190 = vmatprep.subr.mxu0 0.0
    %4191 = vmatpush2.msra.mxu0 0.0
    %4192 = vmatprep.subr.mxu0 0.0
    %4193 = vmatpush2.msra.mxu0 0.0
    %4194 = vmatprep.subr.mxu0 0.0
    %4195 = vmatpush2.msra.mxu0 0.0
    %4196 = vmatprep.subr.mxu0 0.0
    %4197 = vmatpush2.msra.mxu0 0.0
    %4198 = vmatprep.subr.mxu0 0.0
    %4199 = vmatpush2.msra.mxu0 0.0
    %4200 = vmatprep.subr.mxu0 0.0
    %4201 = vmatpush2.msra.mxu0 0.0
    %4202 = vmatprep.subr.mxu0 0.0
    %4203 = vmatpush2.msra.mxu0 0.0
    %4204 = vmatprep.subr.mxu0 0.0
    %4205 = vmatpush2.msra.mxu0 0.0
    %4206 = vmatprep.subr.mxu0 0.0
    %4207 = vmatpush2.msra.mxu0 0.0
    %4208 = vmatprep.subr.mxu0 0.0
    %4209 = vmatpush2.msra.mxu0 0.0
    %4210 = vmatprep.subr.mxu0 0.0
    %4211 = vmatpush2.msra.mxu0 0.0
    %4212 = vmatprep.subr.mxu0 0.0
    %4213 = vmatpush2.msra.mxu0 0.0
    %4214 = vmatprep.subr.mxu0 0.0
    %4215 = vmatpush2.msra.mxu0 0.0
    %4216 = vmatprep.subr.mxu0 0.0
    %4217 = vmatpush2.msra.mxu0 0.0
    %4218 = vmatprep.subr.mxu0 0.0
    %4219 = vmatpush2.msra.mxu0 0.0
    %4220 = vmatprep.mubr.f32.mxu0 0.0
    %4221 = vmatmul.mubr.f32.gmra.mxu0 %v4138
    %v4222 = vpop.f32.mrf.mxu0
    %v4223 = vadd.f32 %v4155, %v4222
    %v4224 = vpop.f32.mrf.mxu0
    %4225 = vdwg.mxu0
    %4226 = vst [vmem:[%s2] sm:$0xff] %v4223
    // Predicated region
    $region14: #{forward.1} parent=1 // pred_check
      _
    $region15: #{forward.1} parent=1 // pred_check_branch
      %4228 = sbr.rel (0) target = $region17
    $region16: #{forward.1} parent=1 // pred_region
      _
    $region17: #{forward.1} parent=1 // pred_fallthru
      _
    // Predicated region
    $region18: #{forward.1} parent=1 // pred_check
      _
    $region19: #{forward.1} parent=1 // pred_check_branch
      %4230 = sbr.rel (0) target = $region21
    $region20: #{forward.1} parent=1 // pred_region
      _
    $region21: #{forward.1} parent=1 // pred_fallthru
      _
    %4231 = vsyncpa [#allocation3], 1

</llo_original>
